<compile_context>
chip_gen: v7x
topology: tpu7x:2x2x1
jax: 0.10.0
libtpu: 0.0.40
codegen_flags: <defaults>
</compile_context>

<pallas_src>
import math
import numpy as np
import jax
import jax.numpy as jnp
from jax.experimental import pallas as pl
from jax.experimental.pallas import tpu as pltpu


# ----------------------------- fused kernel -----------------------------

def _make_gpo_kernel(num_ctx, num_tar, nhead, d_model, emb_depth, num_layers,
                     dim_y, eps=1e-5):
    hd = d_model // nhead
    scale = 1.0 / math.sqrt(hd)
    half_log_2pi = 0.5 * math.log(2.0 * math.pi)
    S = num_ctx + num_tar

    def kernel(*refs):
        it = iter(refs)
        inp_ref = next(it)      # (1, S, dim_x+dim_y)
        kpm_ref = next(it)      # (1, 1, S)  1.0 where key is padded
        yt_ref = next(it)       # (1, T, dim_y)
        segr_ref = next(it)     # (1, T, 1)  segment id (row view)
        segc_ref = next(it)     # (1, 1, T)  segment id (col view)
        valid_ref = next(it)    # (1, T, 1)  1.0 iff target row < real length
        emb_ws = [(next(it), next(it)) for _ in range(emb_depth)]
        (wqkv_r, bqkv_r, wo_r, bo_r, ln1g_r, ln1b_r,
         w1_r, b1_r, w2_r, b2_r, ln2g_r, ln2b_r) = (next(it) for _ in range(12))
        p1w_r, p1b_r, p2w_r, p2b_r = (next(it) for _ in range(4))
        o_ref = next(it)        # (1, T, 1)

        # ---- additive attention column mask, built in-kernel ----
        kpm = kpm_ref[0]                                     # (1, S)
        col = jax.lax.broadcasted_iota(jnp.int32, (1, S), 1)
        allowed = (col < num_ctx) & (kpm < 0.5)
        colmask = jnp.where(allowed, 0.0, -jnp.inf)          # (1, S), broadcasts over rows

        # ---- embedder MLP ----
        x = inp_ref[0]                                       # (S, dim_x+dim_y)
        for li, (w_r, b_r) in enumerate(emb_ws):
            x = jnp.dot(x, w_r[...], preferred_element_type=jnp.float32) + b_r[...]
            if li < emb_depth - 1:
                x = jnp.maximum(x, 0.0)

        def layer_norm(y, g, b):
            mu = jnp.mean(y, axis=-1, keepdims=True)
            var = jnp.mean((y - mu) ** 2, axis=-1, keepdims=True)
            return (y - mu) * jax.lax.rsqrt(var + eps) * g + b

        # ---- transformer encoder (post-norm, ReLU FFN, dropout=0) ----
        for l in range(num_layers):
            qkv = jnp.dot(x, wqkv_r[l], preferred_element_type=jnp.float32) + bqkv_r[l]
            heads = []
            for hh in range(nhead):
                q = qkv[:, hh * hd:(hh + 1) * hd]
                k = qkv[:, d_model + hh * hd:d_model + (hh + 1) * hd]
                v = qkv[:, 2 * d_model + hh * hd:2 * d_model + (hh + 1) * hd]
                s = jax.lax.dot_general(q, k, (((1,), (1,)), ((), ())),
                                        preferred_element_type=jnp.float32)
                s = s * scale + colmask
                s = s - jnp.max(s, axis=-1, keepdims=True)
                p = jnp.exp(s)
                p = p * pl.reciprocal(jnp.sum(p, axis=-1, keepdims=True), approx=True)
                heads.append(jnp.dot(p, v, preferred_element_type=jnp.float32))
            ctx = jnp.concatenate(heads, axis=-1)            # (S, d_model)
            attn = jnp.dot(ctx, wo_r[l], preferred_element_type=jnp.float32) + bo_r[l]
            x = layer_norm(x + attn, ln1g_r[l], ln1b_r[l])
            ff = jnp.maximum(
                jnp.dot(x, w1_r[l], preferred_element_type=jnp.float32) + b1_r[l], 0.0)
            ff = jnp.dot(ff, w2_r[l], preferred_element_type=jnp.float32) + b2_r[l]
            x = layer_norm(x + ff, ln2g_r[l], ln2b_r[l])

        # ---- predictor on target rows (out[:, -num_tar:]) ----
        z = x[num_ctx:, :]                                   # (T, d_model), static slice
        h1 = jnp.maximum(
            jnp.dot(z, p1w_r[...], preferred_element_type=jnp.float32) + p1b_r[...], 0.0)
        pr = jnp.dot(h1, p2w_r[...], preferred_element_type=jnp.float32) + p2b_r[...]
        mean = pr[:, :dim_y]                                 # (T, dim_y)
        sraw = pr[:, dim_y:]                                 # (T, dim_y)

        # ---- segment softmax over options within each question segment ----
        seg_r = segr_ref[0]                                  # (T, 1)
        seg_c = segc_ref[0]                                  # (1, T)
        same = (seg_r == seg_c).astype(jnp.float32)          # (T, T) membership matrix
        # subtracting a per-dim constant cancels between numerator and denominator
        c = jnp.max(mean, axis=0, keepdims=True)             # (1, dim_y)
        e = jnp.exp(mean - c)                                # (T, dim_y)
        denom = jnp.dot(same, e, preferred_element_type=jnp.float32)
        sm = e / denom                                       # segment softmax

        # ---- Normal(mean, std) log-prob, std = exp(raw)  (bound_std=False) ----
        # TODO(synk): bound_std=True branch (std = 0.05 + 0.95*softplus) not exercised.
        std = jnp.exp(sraw)
        yt = yt_ref[0]                                       # (T, dim_y)
        lp = -((yt - sm) ** 2) / (2.0 * std * std) - sraw - half_log_2pi
        row_ll = jnp.sum(lp, axis=-1, keepdims=True)         # (T, 1) == log_probs.sum(-1)
        valid = valid_ref[0]                                 # (T, 1)
        o_ref[0] = jnp.where(valid > 0.5, row_ll, 0.0)

    return kernel


# ----------------------------- parameters -----------------------------

def init_params(key, dim_x, dim_y, d_model, emb_depth, dim_feedforward, num_layers):
    n_keys = 2 * emb_depth + 12 * num_layers + 4
    kiter = iter(jax.random.split(key, n_keys))

    def lin(din, dout):
        s = 1.0 / math.sqrt(din)
        w = jax.random.uniform(next(kiter), (din, dout), jnp.float32, -s, s)
        b = jax.random.uniform(next(kiter), (1, dout), jnp.float32, -s, s)
        return w, b

    # embedder MLP: `emb_depth` Linear layers, ReLU between (matches build_mlp)
    emb = [lin(dim_x + dim_y, d_model)]
    for _ in range(emb_depth - 2):
        emb.append(lin(d_model, d_model))
    emb.append(lin(d_model, d_model))

    # per-layer weights, stacked along a leading num_layers axis; QKV fused.
    wqkv, bqkv, wo, bo = [], [], [], []
    ln1g, ln1b, w1, b1, w2, b2, ln2g, ln2b = [], [], [], [], [], [], [], []
    for _ in range(num_layers):
        wq, bq_ = lin(d_model, d_model)
        wk, bk_ = lin(d_model, d_model)
        wv, bv_ = lin(d_model, d_model)
        wqkv.append(jnp.concatenate([wq, wk, wv], axis=1))          # (D, 3D)
        bqkv.append(jnp.concatenate([bq_, bk_, bv_], axis=1))       # (1, 3D)
        w, b = lin(d_model, d_model); wo.append(w); bo.append(b)
        ln1g.append(jnp.ones((1, d_model), jnp.float32))
        ln1b.append(jnp.zeros((1, d_model), jnp.float32))
        w, b = lin(d_model, dim_feedforward); w1.append(w); b1.append(b)
        w, b = lin(dim_feedforward, d_model); w2.append(w); b2.append(b)
        ln2g.append(jnp.ones((1, d_model), jnp.float32))
        ln2b.append(jnp.zeros((1, d_model), jnp.float32))

    p1_w, p1_b = lin(d_model, dim_feedforward)
    p2_w, p2_b = lin(dim_feedforward, 2 * dim_y)

    stk = jnp.stack
    return {
        'embedder': emb,
        'wqkv': stk(wqkv), 'bqkv': stk(bqkv), 'wo': stk(wo), 'bo': stk(bo),
        'ln1_g': stk(ln1g), 'ln1_b': stk(ln1b),
        'w1': stk(w1), 'b1': stk(b1), 'w2': stk(w2), 'b2': stk(b2),
        'ln2_g': stk(ln2g), 'ln2_b': stk(ln2b),
        'p1_w': p1_w, 'p1_b': p1_b, 'p2_w': p2_w, 'p2_b': p2_b,
    }


# ----------------------------- forward -----------------------------

def gpo_forward(params, batch, tarqlen, nhead, reduce_ll=True):
    xc, yc, xt, yt = batch['xc'], batch['yc'], batch['xt'], batch['yt']
    B, num_ctx, dim_x = xc.shape
    num_tar = xt.shape[1]
    dim_y = yc.shape[2]
    S = num_ctx + num_tar
    d_model = params['p1_w'].shape[0]
    num_layers = params['wqkv'].shape[0]
    emb_depth = len(params['embedder'])

    # target_real_lens check done host-side (no device sync inside traced code)
    lens_np = (np.asarray(xt).sum(-1) != 0).sum(1)
    assert int(lens_np.max()) == yt.shape[1], \
        'Max target real lens is not equal to the number of target points'

    # construct_input (autoreg=False)
    inp = jnp.concatenate(
        [jnp.concatenate([xc, yc], axis=-1),
         jnp.concatenate([xt, jnp.zeros_like(yt)], axis=-1)], axis=1)     # (B, S, dx+dy)

    # key-padding vector (the additive mask itself is built inside the kernel)
    kpm = jnp.concatenate([jnp.sum(xc, -1) == 0, jnp.sum(xt, -1) == 0], axis=1)
    kpm = kpm.astype(jnp.float32).reshape(B, 1, S)

    # segment ids per target row from tarqlen (host-built, static data).
    # Rows not covered by tarqlen get unique negative ids so they never join a
    # real segment's softmax denominator (they are masked out of the loss anyway).
    seg_np = np.tile(-(np.arange(num_tar, dtype=np.float32) + 1.0), (B, 1))
    for bidx, qlens in enumerate(tarqlen):
        start = 0
        for si, n in enumerate(qlens):
            seg_np[bidx, start:start + n] = float(si)
            start += n
    seg_r = jnp.asarray(seg_np).reshape(B, num_tar, 1)
    seg_c = jnp.asarray(seg_np).reshape(B, 1, num_tar)

    valid_np = (np.arange(num_tar)[None, :] < lens_np[:, None]).astype(np.float32)
    valid = jnp.asarray(valid_np).reshape(B, num_tar, 1)

    kernel = _make_gpo_kernel(num_ctx, num_tar, nhead, d_model,
                              emb_depth, num_layers, dim_y)

    data_inputs = [inp, kpm, yt, seg_r, seg_c, valid]
    weight_inputs = []
    for (w, b) in params['embedder']:
        weight_inputs += [w, b]
    weight_inputs += [params['wqkv'], params['bqkv'], params['wo'], params['bo'],
                      params['ln1_g'], params['ln1_b'],
                      params['w1'], params['b1'], params['w2'], params['b2'],
                      params['ln2_g'], params['ln2_b']]
    weight_inputs += [params['p1_w'], params['p1_b'], params['p2_w'], params['p2_b']]

    def batch_spec(shape):
        nd = len(shape)
        return pl.BlockSpec((1,) + tuple(shape[1:]),
                            lambda b, _nd=nd: (b,) + (0,) * (_nd - 1))

    def full_spec(shape):
        nd = len(shape)
        return pl.BlockSpec(tuple(shape), lambda b, _nd=nd: (0,) * _nd)

    in_specs = ([batch_spec(a.shape) for a in data_inputs] +
                [full_spec(a.shape) for a in weight_inputs])
    out_spec = pl.BlockSpec((1, num_tar, 1), lambda b: (b, 0, 0))

    per_bt = pl.pallas_call(
        kernel,
        out_shape=jax.ShapeDtypeStruct((B, num_tar, 1), jnp.float32),
        grid=(B,),
        in_specs=in_specs,
        out_specs=out_spec,
        compiler_params=pltpu.CompilerParams(dimension_semantics=("parallel",)),
    )(*data_inputs, *weight_inputs)

    per_bt = per_bt.reshape(B, num_tar)          # == masked_log_probs.sum(-1)
    tar_ll = jnp.mean(per_bt) if reduce_ll else per_bt
    return {'tar_ll': tar_ll, 'loss': -tar_ll}


# ----------------------------- main -----------------------------

if __name__ == "__main__":
    # GPO hyper-params (small): dim_x=2, dim_y=1, d_model=32, emb_depth=2,
    # dim_feedforward=64, nhead=4, dropout=0.0, num_layers=2, bound_std=False
    dim_x, dim_y = 2, 1
    d_model, emb_depth, dim_feedforward, nhead, num_layers = 32, 2, 64, 4, 2
    B, num_ctx, num_tar = 2, 8, 4
    tarqlen = [[2, 2], [3, 1]]   # per-batch question segment lengths (sum == num_tar)

    key = jax.random.PRNGKey(0)
    k_par, k_xc, k_yc, k_xt, k_yt = jax.random.split(key, 5)
    params = init_params(k_par, dim_x, dim_y, d_model, emb_depth,
                         dim_feedforward, num_layers)
    batch = {
        'xc': jax.random.normal(k_xc, (B, num_ctx, dim_x), jnp.float32),
        'yc': jax.random.normal(k_yc, (B, num_ctx, dim_y), jnp.float32),
        'xt': jax.random.normal(k_xt, (B, num_tar, dim_x), jnp.float32),
        'yt': jax.random.normal(k_yt, (B, num_tar, dim_y), jnp.float32),
    }

    outs = gpo_forward(params, batch, tarqlen, nhead=nhead, reduce_ll=True)
    jax.block_until_ready(outs['loss'])
    print("KERNEL_OK")
</pallas_src>

<mosaic_0001>
module attributes {stable_mosaic.version = 11 : i64} {
  func.func @kernel(%arg0: i32, %arg1: memref<1x12x3xf32, #tpu.memory_space<vmem>>, %arg2: memref<1x1x12xf32, #tpu.memory_space<vmem>>, %arg3: memref<1x4x1xf32, #tpu.memory_space<vmem>>, %arg4: memref<1x4x1xf32, #tpu.memory_space<vmem>>, %arg5: memref<1x1x4xf32, #tpu.memory_space<vmem>>, %arg6: memref<1x4x1xf32, #tpu.memory_space<vmem>>, %arg7: memref<3x32xf32, #tpu.memory_space<vmem>>, %arg8: memref<1x32xf32, #tpu.memory_space<vmem>>, %arg9: memref<32x32xf32, #tpu.memory_space<vmem>>, %arg10: memref<1x32xf32, #tpu.memory_space<vmem>>, %arg11: memref<2x32x96xf32, #tpu.memory_space<vmem>>, %arg12: memref<2x1x96xf32, #tpu.memory_space<vmem>>, %arg13: memref<2x32x32xf32, #tpu.memory_space<vmem>>, %arg14: memref<2x1x32xf32, #tpu.memory_space<vmem>>, %arg15: memref<2x1x32xf32, #tpu.memory_space<vmem>>, %arg16: memref<2x1x32xf32, #tpu.memory_space<vmem>>, %arg17: memref<2x32x64xf32, #tpu.memory_space<vmem>>, %arg18: memref<2x1x64xf32, #tpu.memory_space<vmem>>, %arg19: memref<2x64x32xf32, #tpu.memory_space<vmem>>, %arg20: memref<2x1x32xf32, #tpu.memory_space<vmem>>, %arg21: memref<2x1x32xf32, #tpu.memory_space<vmem>>, %arg22: memref<2x1x32xf32, #tpu.memory_space<vmem>>, %arg23: memref<32x64xf32, #tpu.memory_space<vmem>>, %arg24: memref<1x64xf32, #tpu.memory_space<vmem>>, %arg25: memref<64x2xf32, #tpu.memory_space<vmem>>, %arg26: memref<1x2xf32, #tpu.memory_space<vmem>>, %arg27: memref<1x4x1xf32, #tpu.memory_space<vmem>>) attributes {dimension_semantics = [#tpu.dimension_semantics<parallel>], iteration_bounds = array<i64: 2>, scalar_prefetch = 0 : i64, scratch_operands = 0 : i64, tpu.core_type = #tpu.core_type<tc>, window_params = [{transform_indices = @transform_0, window_bounds = array<i64: 1, 12, 3>}, {transform_indices = @transform_1, window_bounds = array<i64: 1, 1, 12>}, {transform_indices = @transform_2, window_bounds = array<i64: 1, 4, 1>}, {transform_indices = @transform_3, window_bounds = array<i64: 1, 4, 1>}, {transform_indices = @transform_4, window_bounds = array<i64: 1, 1, 4>}, {transform_indices = @transform_5, window_bounds = array<i64: 1, 4, 1>}, {pipeline_mode = #tpu.pipeline_mode<synchronous>, transform_indices = @transform_6, window_bounds = array<i64: 3, 32>}, {pipeline_mode = #tpu.pipeline_mode<synchronous>, transform_indices = @transform_7, window_bounds = array<i64: 1, 32>}, {pipeline_mode = #tpu.pipeline_mode<synchronous>, transform_indices = @transform_8, window_bounds = array<i64: 32, 32>}, {pipeline_mode = #tpu.pipeline_mode<synchronous>, transform_indices = @transform_9, window_bounds = array<i64: 1, 32>}, {pipeline_mode = #tpu.pipeline_mode<synchronous>, transform_indices = @transform_10, window_bounds = array<i64: 2, 32, 96>}, {pipeline_mode = #tpu.pipeline_mode<synchronous>, transform_indices = @transform_11, window_bounds = array<i64: 2, 1, 96>}, {pipeline_mode = #tpu.pipeline_mode<synchronous>, transform_indices = @transform_12, window_bounds = array<i64: 2, 32, 32>}, {pipeline_mode = #tpu.pipeline_mode<synchronous>, transform_indices = @transform_13, window_bounds = array<i64: 2, 1, 32>}, {pipeline_mode = #tpu.pipeline_mode<synchronous>, transform_indices = @transform_14, window_bounds = array<i64: 2, 1, 32>}, {pipeline_mode = #tpu.pipeline_mode<synchronous>, transform_indices = @transform_15, window_bounds = array<i64: 2, 1, 32>}, {pipeline_mode = #tpu.pipeline_mode<synchronous>, transform_indices = @transform_16, window_bounds = array<i64: 2, 32, 64>}, {pipeline_mode = #tpu.pipeline_mode<synchronous>, transform_indices = @transform_17, window_bounds = array<i64: 2, 1, 64>}, {pipeline_mode = #tpu.pipeline_mode<synchronous>, transform_indices = @transform_18, window_bounds = array<i64: 2, 64, 32>}, {pipeline_mode = #tpu.pipeline_mode<synchronous>, transform_indices = @transform_19, window_bounds = array<i64: 2, 1, 32>}, {pipeline_mode = #tpu.pipeline_mode<synchronous>, transform_indices = @transform_20, window_bounds = array<i64: 2, 1, 32>}, {pipeline_mode = #tpu.pipeline_mode<synchronous>, transform_indices = @transform_21, window_bounds = array<i64: 2, 1, 32>}, {pipeline_mode = #tpu.pipeline_mode<synchronous>, transform_indices = @transform_22, window_bounds = array<i64: 32, 64>}, {pipeline_mode = #tpu.pipeline_mode<synchronous>, transform_indices = @transform_23, window_bounds = array<i64: 1, 64>}, {pipeline_mode = #tpu.pipeline_mode<synchronous>, transform_indices = @transform_24, window_bounds = array<i64: 64, 2>}, {pipeline_mode = #tpu.pipeline_mode<synchronous>, transform_indices = @transform_25, window_bounds = array<i64: 1, 2>}, {transform_indices = @transform_26, window_bounds = array<i64: 1, 4, 1>}]} {
    %c0 = arith.constant 0 : index
    %c0_0 = arith.constant 0 : index
    %c0_1 = arith.constant 0 : index
    %0 = vector.load %arg2[%c0, %c0_0, %c0_1] : memref<1x1x12xf32, #tpu.memory_space<vmem>>, vector<1x1x12xf32>
    %1 = vector.shape_cast %0 : vector<1x1x12xf32> to vector<1x12xf32>
    %2 = tpu.iota {dimensions = array<i32: 1>} : vector<1x12xi32>
    %c8_i32 = arith.constant 8 : i32
    %3 = vector.broadcast %c8_i32 : i32 to vector<1x12xi32>
    %4 = arith.cmpi slt, %2, %3 : vector<1x12xi32>
    %cst = arith.constant 5.000000e-01 : f32
    %5 = vector.broadcast %cst : f32 to vector<1x12xf32>
    %6 = arith.cmpf olt, %1, %5 : vector<1x12xf32>
    %7 = arith.andi %4, %6 : vector<1x12xi1>
    %cst_2 = arith.constant 0.000000e+00 : f32
    %cst_3 = arith.constant 0xFF800000 : f32
    %8 = vector.broadcast %cst_2 : f32 to vector<1x12xf32>
    %9 = vector.broadcast %cst_3 : f32 to vector<1x12xf32>
    %10 = arith.select %7, %8, %9 : vector<1x12xi1>, vector<1x12xf32>
    %c0_4 = arith.constant 0 : index
    %c0_5 = arith.constant 0 : index
    %c0_6 = arith.constant 0 : index
    %11 = vector.load %arg1[%c0_4, %c0_5, %c0_6] : memref<1x12x3xf32, #tpu.memory_space<vmem>>, vector<1x12x3xf32>
    %12 = vector.shape_cast %11 : vector<1x12x3xf32> to vector<12x3xf32>
    %c0_7 = arith.constant 0 : index
    %c0_8 = arith.constant 0 : index
    %13 = vector.load %arg7[%c0_7, %c0_8] : memref<3x32xf32, #tpu.memory_space<vmem>>, vector<3x32xf32>
    %cst_9 = arith.constant dense<0.000000e+00> : vector<12x32xf32>
    %14 = tpu.matmul %12, %13, %cst_9 {dimension_numbers = #tpu.dot_dimension_numbers<[1], [0], [0], [1], [0, 0, 1, 1], [], []>} : vector<12x3xf32>, vector<3x32xf32>, vector<12x32xf32> -> vector<12x32xf32>
    %c0_10 = arith.constant 0 : index
    %c0_11 = arith.constant 0 : index
    %15 = vector.load %arg8[%c0_10, %c0_11] : memref<1x32xf32, #tpu.memory_space<vmem>>, vector<1x32xf32>
    %16 = vector.broadcast %15 : vector<1x32xf32> to vector<12x32xf32>
    %17 = arith.addf %14, %16 : vector<12x32xf32>
    %cst_12 = arith.constant 0.000000e+00 : f32
    %18 = vector.broadcast %cst_12 : f32 to vector<12x32xf32>
    %19 = arith.maximumf %17, %18 : vector<12x32xf32>
    %c0_13 = arith.constant 0 : index
    %c0_14 = arith.constant 0 : index
    %20 = vector.load %arg9[%c0_13, %c0_14] : memref<32x32xf32, #tpu.memory_space<vmem>>, vector<32x32xf32>
    %cst_15 = arith.constant dense<0.000000e+00> : vector<12x32xf32>
    %21 = tpu.matmul %19, %20, %cst_15 {dimension_numbers = #tpu.dot_dimension_numbers<[1], [0], [0], [1], [0, 0, 1, 1], [], []>} : vector<12x32xf32>, vector<32x32xf32>, vector<12x32xf32> -> vector<12x32xf32>
    %c0_16 = arith.constant 0 : index
    %c0_17 = arith.constant 0 : index
    %22 = vector.load %arg10[%c0_16, %c0_17] : memref<1x32xf32, #tpu.memory_space<vmem>>, vector<1x32xf32>
    %23 = vector.broadcast %22 : vector<1x32xf32> to vector<12x32xf32>
    %24 = arith.addf %21, %23 : vector<12x32xf32>
    %c0_18 = arith.constant 0 : index
    %c0_19 = arith.constant 0 : index
    %c0_20 = arith.constant 0 : index
    %25 = vector.load %arg11[%c0_18, %c0_19, %c0_20] : memref<2x32x96xf32, #tpu.memory_space<vmem>>, vector<1x32x96xf32>
    %26 = vector.shape_cast %25 : vector<1x32x96xf32> to vector<32x96xf32>
    %cst_21 = arith.constant dense<0.000000e+00> : vector<12x96xf32>
    %27 = tpu.matmul %24, %26, %cst_21 {dimension_numbers = #tpu.dot_dimension_numbers<[1], [0], [0], [1], [0, 0, 1, 1], [], []>} : vector<12x32xf32>, vector<32x96xf32>, vector<12x96xf32> -> vector<12x96xf32>
    %c0_22 = arith.constant 0 : index
    %c0_23 = arith.constant 0 : index
    %c0_24 = arith.constant 0 : index
    %28 = vector.load %arg12[%c0_22, %c0_23, %c0_24] : memref<2x1x96xf32, #tpu.memory_space<vmem>>, vector<1x1x96xf32>
    %29 = vector.shape_cast %28 : vector<1x1x96xf32> to vector<1x96xf32>
    %30 = vector.broadcast %29 : vector<1x96xf32> to vector<12x96xf32>
    %31 = arith.addf %27, %30 : vector<12x96xf32>
    %32 = vector.extract_strided_slice %31 {offsets = [0, 0], sizes = [12, 8], strides = [1, 1]} : vector<12x96xf32> to vector<12x8xf32>
    %33 = vector.extract_strided_slice %31 {offsets = [0, 32], sizes = [12, 8], strides = [1, 1]} : vector<12x96xf32> to vector<12x8xf32>
    %34 = vector.extract_strided_slice %31 {offsets = [0, 64], sizes = [12, 8], strides = [1, 1]} : vector<12x96xf32> to vector<12x8xf32>
    %cst_25 = arith.constant dense<0.000000e+00> : vector<12x12xf32>
    %35 = tpu.matmul %32, %33, %cst_25 {dimension_numbers = #tpu.dot_dimension_numbers<[1], [1], [0], [0], [0, 0, 1, 0], [], []>} : vector<12x8xf32>, vector<12x8xf32>, vector<12x12xf32> -> vector<12x12xf32>
    %cst_26 = arith.constant 0.353553385 : f32
    %36 = vector.broadcast %cst_26 : f32 to vector<12x12xf32>
    %37 = arith.mulf %35, %36 : vector<12x12xf32>
    %38 = vector.broadcast %10 : vector<1x12xf32> to vector<12x12xf32>
    %39 = arith.addf %37, %38 : vector<12x12xf32>
    %cst_27 = arith.constant dense<0xFF800000> : vector<12xf32>
    %40 = vector.multi_reduction <maximumf>, %39, %cst_27 [1] : vector<12x12xf32> to vector<12xf32>
    %41 = vector.shape_cast %40 : vector<12xf32> to vector<12x1xf32>
    %42 = vector.broadcast %41 : vector<12x1xf32> to vector<12x12xf32>
    %43 = arith.subf %39, %42 : vector<12x12xf32>
    %44 = math.exp %43 : vector<12x12xf32>
    %cst_28 = arith.constant dense<0.000000e+00> : vector<12xf32>
    %45 = vector.multi_reduction <add>, %44, %cst_28 [1] : vector<12x12xf32> to vector<12xf32>
    %46 = vector.shape_cast %45 : vector<12xf32> to vector<12x1xf32>
    %47 = tpu.reciprocal %46 {approx = true} : vector<12x1xf32> -> vector<12x1xf32>
    %48 = vector.broadcast %47 : vector<12x1xf32> to vector<12x12xf32>
    %49 = arith.mulf %44, %48 : vector<12x12xf32>
    %cst_29 = arith.constant dense<0.000000e+00> : vector<12x8xf32>
    %50 = tpu.matmul %49, %34, %cst_29 {dimension_numbers = #tpu.dot_dimension_numbers<[1], [0], [0], [1], [0, 0, 1, 1], [], []>} : vector<12x12xf32>, vector<12x8xf32>, vector<12x8xf32> -> vector<12x8xf32>
    %51 = vector.extract_strided_slice %31 {offsets = [0, 8], sizes = [12, 8], strides = [1, 1]} : vector<12x96xf32> to vector<12x8xf32>
    %52 = vector.extract_strided_slice %31 {offsets = [0, 40], sizes = [12, 8], strides = [1, 1]} : vector<12x96xf32> to vector<12x8xf32>
    %53 = vector.extract_strided_slice %31 {offsets = [0, 72], sizes = [12, 8], strides = [1, 1]} : vector<12x96xf32> to vector<12x8xf32>
    %cst_30 = arith.constant dense<0.000000e+00> : vector<12x12xf32>
    %54 = tpu.matmul %51, %52, %cst_30 {dimension_numbers = #tpu.dot_dimension_numbers<[1], [1], [0], [0], [0, 0, 1, 0], [], []>} : vector<12x8xf32>, vector<12x8xf32>, vector<12x12xf32> -> vector<12x12xf32>
    %cst_31 = arith.constant 0.353553385 : f32
    %55 = vector.broadcast %cst_31 : f32 to vector<12x12xf32>
    %56 = arith.mulf %54, %55 : vector<12x12xf32>
    %57 = vector.broadcast %10 : vector<1x12xf32> to vector<12x12xf32>
    %58 = arith.addf %56, %57 : vector<12x12xf32>
    %cst_32 = arith.constant dense<0xFF800000> : vector<12xf32>
    %59 = vector.multi_reduction <maximumf>, %58, %cst_32 [1] : vector<12x12xf32> to vector<12xf32>
    %60 = vector.shape_cast %59 : vector<12xf32> to vector<12x1xf32>
    %61 = vector.broadcast %60 : vector<12x1xf32> to vector<12x12xf32>
    %62 = arith.subf %58, %61 : vector<12x12xf32>
    %63 = math.exp %62 : vector<12x12xf32>
    %cst_33 = arith.constant dense<0.000000e+00> : vector<12xf32>
    %64 = vector.multi_reduction <add>, %63, %cst_33 [1] : vector<12x12xf32> to vector<12xf32>
    %65 = vector.shape_cast %64 : vector<12xf32> to vector<12x1xf32>
    %66 = tpu.reciprocal %65 {approx = true} : vector<12x1xf32> -> vector<12x1xf32>
    %67 = vector.broadcast %66 : vector<12x1xf32> to vector<12x12xf32>
    %68 = arith.mulf %63, %67 : vector<12x12xf32>
    %cst_34 = arith.constant dense<0.000000e+00> : vector<12x8xf32>
    %69 = tpu.matmul %68, %53, %cst_34 {dimension_numbers = #tpu.dot_dimension_numbers<[1], [0], [0], [1], [0, 0, 1, 1], [], []>} : vector<12x12xf32>, vector<12x8xf32>, vector<12x8xf32> -> vector<12x8xf32>
    %70 = vector.extract_strided_slice %31 {offsets = [0, 16], sizes = [12, 8], strides = [1, 1]} : vector<12x96xf32> to vector<12x8xf32>
    %71 = vector.extract_strided_slice %31 {offsets = [0, 48], sizes = [12, 8], strides = [1, 1]} : vector<12x96xf32> to vector<12x8xf32>
    %72 = vector.extract_strided_slice %31 {offsets = [0, 80], sizes = [12, 8], strides = [1, 1]} : vector<12x96xf32> to vector<12x8xf32>
    %cst_35 = arith.constant dense<0.000000e+00> : vector<12x12xf32>
    %73 = tpu.matmul %70, %71, %cst_35 {dimension_numbers = #tpu.dot_dimension_numbers<[1], [1], [0], [0], [0, 0, 1, 0], [], []>} : vector<12x8xf32>, vector<12x8xf32>, vector<12x12xf32> -> vector<12x12xf32>
    %cst_36 = arith.constant 0.353553385 : f32
    %74 = vector.broadcast %cst_36 : f32 to vector<12x12xf32>
    %75 = arith.mulf %73, %74 : vector<12x12xf32>
    %76 = vector.broadcast %10 : vector<1x12xf32> to vector<12x12xf32>
    %77 = arith.addf %75, %76 : vector<12x12xf32>
    %cst_37 = arith.constant dense<0xFF800000> : vector<12xf32>
    %78 = vector.multi_reduction <maximumf>, %77, %cst_37 [1] : vector<12x12xf32> to vector<12xf32>
    %79 = vector.shape_cast %78 : vector<12xf32> to vector<12x1xf32>
    %80 = vector.broadcast %79 : vector<12x1xf32> to vector<12x12xf32>
    %81 = arith.subf %77, %80 : vector<12x12xf32>
    %82 = math.exp %81 : vector<12x12xf32>
    %cst_38 = arith.constant dense<0.000000e+00> : vector<12xf32>
    %83 = vector.multi_reduction <add>, %82, %cst_38 [1] : vector<12x12xf32> to vector<12xf32>
    %84 = vector.shape_cast %83 : vector<12xf32> to vector<12x1xf32>
    %85 = tpu.reciprocal %84 {approx = true} : vector<12x1xf32> -> vector<12x1xf32>
    %86 = vector.broadcast %85 : vector<12x1xf32> to vector<12x12xf32>
    %87 = arith.mulf %82, %86 : vector<12x12xf32>
    %cst_39 = arith.constant dense<0.000000e+00> : vector<12x8xf32>
    %88 = tpu.matmul %87, %72, %cst_39 {dimension_numbers = #tpu.dot_dimension_numbers<[1], [0], [0], [1], [0, 0, 1, 1], [], []>} : vector<12x12xf32>, vector<12x8xf32>, vector<12x8xf32> -> vector<12x8xf32>
    %89 = vector.extract_strided_slice %31 {offsets = [0, 24], sizes = [12, 8], strides = [1, 1]} : vector<12x96xf32> to vector<12x8xf32>
    %90 = vector.extract_strided_slice %31 {offsets = [0, 56], sizes = [12, 8], strides = [1, 1]} : vector<12x96xf32> to vector<12x8xf32>
    %91 = vector.extract_strided_slice %31 {offsets = [0, 88], sizes = [12, 8], strides = [1, 1]} : vector<12x96xf32> to vector<12x8xf32>
    %cst_40 = arith.constant dense<0.000000e+00> : vector<12x12xf32>
    %92 = tpu.matmul %89, %90, %cst_40 {dimension_numbers = #tpu.dot_dimension_numbers<[1], [1], [0], [0], [0, 0, 1, 0], [], []>} : vector<12x8xf32>, vector<12x8xf32>, vector<12x12xf32> -> vector<12x12xf32>
    %cst_41 = arith.constant 0.353553385 : f32
    %93 = vector.broadcast %cst_41 : f32 to vector<12x12xf32>
    %94 = arith.mulf %92, %93 : vector<12x12xf32>
    %95 = vector.broadcast %10 : vector<1x12xf32> to vector<12x12xf32>
    %96 = arith.addf %94, %95 : vector<12x12xf32>
    %cst_42 = arith.constant dense<0xFF800000> : vector<12xf32>
    %97 = vector.multi_reduction <maximumf>, %96, %cst_42 [1] : vector<12x12xf32> to vector<12xf32>
    %98 = vector.shape_cast %97 : vector<12xf32> to vector<12x1xf32>
    %99 = vector.broadcast %98 : vector<12x1xf32> to vector<12x12xf32>
    %100 = arith.subf %96, %99 : vector<12x12xf32>
    %101 = math.exp %100 : vector<12x12xf32>
    %cst_43 = arith.constant dense<0.000000e+00> : vector<12xf32>
    %102 = vector.multi_reduction <add>, %101, %cst_43 [1] : vector<12x12xf32> to vector<12xf32>
    %103 = vector.shape_cast %102 : vector<12xf32> to vector<12x1xf32>
    %104 = tpu.reciprocal %103 {approx = true} : vector<12x1xf32> -> vector<12x1xf32>
    %105 = vector.broadcast %104 : vector<12x1xf32> to vector<12x12xf32>
    %106 = arith.mulf %101, %105 : vector<12x12xf32>
    %cst_44 = arith.constant dense<0.000000e+00> : vector<12x8xf32>
    %107 = tpu.matmul %106, %91, %cst_44 {dimension_numbers = #tpu.dot_dimension_numbers<[1], [0], [0], [1], [0, 0, 1, 1], [], []>} : vector<12x12xf32>, vector<12x8xf32>, vector<12x8xf32> -> vector<12x8xf32>
    %108 = tpu.concatenate %50, %69, %88, %107 in 1 : vector<12x8xf32>, vector<12x8xf32>, vector<12x8xf32>, vector<12x8xf32> -> vector<12x32xf32>
    %c0_45 = arith.constant 0 : index
    %c0_46 = arith.constant 0 : index
    %c0_47 = arith.constant 0 : index
    %109 = vector.load %arg13[%c0_45, %c0_46, %c0_47] : memref<2x32x32xf32, #tpu.memory_space<vmem>>, vector<1x32x32xf32>
    %110 = vector.shape_cast %109 : vector<1x32x32xf32> to vector<32x32xf32>
    %cst_48 = arith.constant dense<0.000000e+00> : vector<12x32xf32>
    %111 = tpu.matmul %108, %110, %cst_48 {dimension_numbers = #tpu.dot_dimension_numbers<[1], [0], [0], [1], [0, 0, 1, 1], [], []>} : vector<12x32xf32>, vector<32x32xf32>, vector<12x32xf32> -> vector<12x32xf32>
    %c0_49 = arith.constant 0 : index
    %c0_50 = arith.constant 0 : index
    %c0_51 = arith.constant 0 : index
    %112 = vector.load %arg14[%c0_49, %c0_50, %c0_51] : memref<2x1x32xf32, #tpu.memory_space<vmem>>, vector<1x1x32xf32>
    %113 = vector.shape_cast %112 : vector<1x1x32xf32> to vector<1x32xf32>
    %114 = vector.broadcast %113 : vector<1x32xf32> to vector<12x32xf32>
    %115 = arith.addf %111, %114 : vector<12x32xf32>
    %116 = arith.addf %24, %115 : vector<12x32xf32>
    %c0_52 = arith.constant 0 : index
    %c0_53 = arith.constant 0 : index
    %c0_54 = arith.constant 0 : index
    %117 = vector.load %arg15[%c0_52, %c0_53, %c0_54] : memref<2x1x32xf32, #tpu.memory_space<vmem>>, vector<1x1x32xf32>
    %118 = vector.shape_cast %117 : vector<1x1x32xf32> to vector<1x32xf32>
    %c0_55 = arith.constant 0 : index
    %c0_56 = arith.constant 0 : index
    %c0_57 = arith.constant 0 : index
    %119 = vector.load %arg16[%c0_55, %c0_56, %c0_57] : memref<2x1x32xf32, #tpu.memory_space<vmem>>, vector<1x1x32xf32>
    %120 = vector.shape_cast %119 : vector<1x1x32xf32> to vector<1x32xf32>
    %cst_58 = arith.constant dense<0.000000e+00> : vector<12xf32>
    %121 = vector.multi_reduction <add>, %116, %cst_58 [1] : vector<12x32xf32> to vector<12xf32>
    %122 = vector.shape_cast %121 : vector<12xf32> to vector<12x1xf32>
    %cst_59 = arith.constant 3.200000e+01 : f32
    %123 = vector.broadcast %cst_59 : f32 to vector<12x1xf32>
    %124 = arith.divf %122, %123 : vector<12x1xf32>
    %125 = vector.broadcast %124 : vector<12x1xf32> to vector<12x32xf32>
    %126 = arith.subf %116, %125 : vector<12x32xf32>
    %127 = arith.mulf %126, %126 : vector<12x32xf32>
    %cst_60 = arith.constant dense<0.000000e+00> : vector<12xf32>
    %128 = vector.multi_reduction <add>, %127, %cst_60 [1] : vector<12x32xf32> to vector<12xf32>
    %129 = vector.shape_cast %128 : vector<12xf32> to vector<12x1xf32>
    %cst_61 = arith.constant 3.200000e+01 : f32
    %130 = vector.broadcast %cst_61 : f32 to vector<12x1xf32>
    %131 = arith.divf %129, %130 : vector<12x1xf32>
    %132 = vector.broadcast %124 : vector<12x1xf32> to vector<12x32xf32>
    %133 = arith.subf %116, %132 : vector<12x32xf32>
    %cst_62 = arith.constant 9.99999974E-6 : f32
    %134 = vector.broadcast %cst_62 : f32 to vector<12x1xf32>
    %135 = arith.addf %131, %134 : vector<12x1xf32>
    %136 = math.rsqrt %135 : vector<12x1xf32>
    %137 = vector.broadcast %136 : vector<12x1xf32> to vector<12x32xf32>
    %138 = arith.mulf %133, %137 : vector<12x32xf32>
    %139 = vector.broadcast %118 : vector<1x32xf32> to vector<12x32xf32>
    %140 = arith.mulf %138, %139 : vector<12x32xf32>
    %141 = vector.broadcast %120 : vector<1x32xf32> to vector<12x32xf32>
    %142 = arith.addf %140, %141 : vector<12x32xf32>
    %c0_63 = arith.constant 0 : index
    %c0_64 = arith.constant 0 : index
    %c0_65 = arith.constant 0 : index
    %143 = vector.load %arg17[%c0_63, %c0_64, %c0_65] : memref<2x32x64xf32, #tpu.memory_space<vmem>>, vector<1x32x64xf32>
    %144 = vector.shape_cast %143 : vector<1x32x64xf32> to vector<32x64xf32>
    %cst_66 = arith.constant dense<0.000000e+00> : vector<12x64xf32>
    %145 = tpu.matmul %142, %144, %cst_66 {dimension_numbers = #tpu.dot_dimension_numbers<[1], [0], [0], [1], [0, 0, 1, 1], [], []>} : vector<12x32xf32>, vector<32x64xf32>, vector<12x64xf32> -> vector<12x64xf32>
    %c0_67 = arith.constant 0 : index
    %c0_68 = arith.constant 0 : index
    %c0_69 = arith.constant 0 : index
    %146 = vector.load %arg18[%c0_67, %c0_68, %c0_69] : memref<2x1x64xf32, #tpu.memory_space<vmem>>, vector<1x1x64xf32>
    %147 = vector.shape_cast %146 : vector<1x1x64xf32> to vector<1x64xf32>
    %148 = vector.broadcast %147 : vector<1x64xf32> to vector<12x64xf32>
    %149 = arith.addf %145, %148 : vector<12x64xf32>
    %cst_70 = arith.constant 0.000000e+00 : f32
    %150 = vector.broadcast %cst_70 : f32 to vector<12x64xf32>
    %151 = arith.maximumf %149, %150 : vector<12x64xf32>
    %c0_71 = arith.constant 0 : index
    %c0_72 = arith.constant 0 : index
    %c0_73 = arith.constant 0 : index
    %152 = vector.load %arg19[%c0_71, %c0_72, %c0_73] : memref<2x64x32xf32, #tpu.memory_space<vmem>>, vector<1x64x32xf32>
    %153 = vector.shape_cast %152 : vector<1x64x32xf32> to vector<64x32xf32>
    %cst_74 = arith.constant dense<0.000000e+00> : vector<12x32xf32>
    %154 = tpu.matmul %151, %153, %cst_74 {dimension_numbers = #tpu.dot_dimension_numbers<[1], [0], [0], [1], [0, 0, 1, 1], [], []>} : vector<12x64xf32>, vector<64x32xf32>, vector<12x32xf32> -> vector<12x32xf32>
    %c0_75 = arith.constant 0 : index
    %c0_76 = arith.constant 0 : index
    %c0_77 = arith.constant 0 : index
    %155 = vector.load %arg20[%c0_75, %c0_76, %c0_77] : memref<2x1x32xf32, #tpu.memory_space<vmem>>, vector<1x1x32xf32>
    %156 = vector.shape_cast %155 : vector<1x1x32xf32> to vector<1x32xf32>
    %157 = vector.broadcast %156 : vector<1x32xf32> to vector<12x32xf32>
    %158 = arith.addf %154, %157 : vector<12x32xf32>
    %159 = arith.addf %142, %158 : vector<12x32xf32>
    %c0_78 = arith.constant 0 : index
    %c0_79 = arith.constant 0 : index
    %c0_80 = arith.constant 0 : index
    %160 = vector.load %arg21[%c0_78, %c0_79, %c0_80] : memref<2x1x32xf32, #tpu.memory_space<vmem>>, vector<1x1x32xf32>
    %161 = vector.shape_cast %160 : vector<1x1x32xf32> to vector<1x32xf32>
    %c0_81 = arith.constant 0 : index
    %c0_82 = arith.constant 0 : index
    %c0_83 = arith.constant 0 : index
    %162 = vector.load %arg22[%c0_81, %c0_82, %c0_83] : memref<2x1x32xf32, #tpu.memory_space<vmem>>, vector<1x1x32xf32>
    %163 = vector.shape_cast %162 : vector<1x1x32xf32> to vector<1x32xf32>
    %cst_84 = arith.constant dense<0.000000e+00> : vector<12xf32>
    %164 = vector.multi_reduction <add>, %159, %cst_84 [1] : vector<12x32xf32> to vector<12xf32>
    %165 = vector.shape_cast %164 : vector<12xf32> to vector<12x1xf32>
    %cst_85 = arith.constant 3.200000e+01 : f32
    %166 = vector.broadcast %cst_85 : f32 to vector<12x1xf32>
    %167 = arith.divf %165, %166 : vector<12x1xf32>
    %168 = vector.broadcast %167 : vector<12x1xf32> to vector<12x32xf32>
    %169 = arith.subf %159, %168 : vector<12x32xf32>
    %170 = arith.mulf %169, %169 : vector<12x32xf32>
    %cst_86 = arith.constant dense<0.000000e+00> : vector<12xf32>
    %171 = vector.multi_reduction <add>, %170, %cst_86 [1] : vector<12x32xf32> to vector<12xf32>
    %172 = vector.shape_cast %171 : vector<12xf32> to vector<12x1xf32>
    %cst_87 = arith.constant 3.200000e+01 : f32
    %173 = vector.broadcast %cst_87 : f32 to vector<12x1xf32>
    %174 = arith.divf %172, %173 : vector<12x1xf32>
    %175 = vector.broadcast %167 : vector<12x1xf32> to vector<12x32xf32>
    %176 = arith.subf %159, %175 : vector<12x32xf32>
    %cst_88 = arith.constant 9.99999974E-6 : f32
    %177 = vector.broadcast %cst_88 : f32 to vector<12x1xf32>
    %178 = arith.addf %174, %177 : vector<12x1xf32>
    %179 = math.rsqrt %178 : vector<12x1xf32>
    %180 = vector.broadcast %179 : vector<12x1xf32> to vector<12x32xf32>
    %181 = arith.mulf %176, %180 : vector<12x32xf32>
    %182 = vector.broadcast %161 : vector<1x32xf32> to vector<12x32xf32>
    %183 = arith.mulf %181, %182 : vector<12x32xf32>
    %184 = vector.broadcast %163 : vector<1x32xf32> to vector<12x32xf32>
    %185 = arith.addf %183, %184 : vector<12x32xf32>
    %c1 = arith.constant 1 : index
    %c0_89 = arith.constant 0 : index
    %c0_90 = arith.constant 0 : index
    %186 = vector.load %arg11[%c1, %c0_89, %c0_90] : memref<2x32x96xf32, #tpu.memory_space<vmem>>, vector<1x32x96xf32>
    %187 = vector.shape_cast %186 : vector<1x32x96xf32> to vector<32x96xf32>
    %cst_91 = arith.constant dense<0.000000e+00> : vector<12x96xf32>
    %188 = tpu.matmul %185, %187, %cst_91 {dimension_numbers = #tpu.dot_dimension_numbers<[1], [0], [0], [1], [0, 0, 1, 1], [], []>} : vector<12x32xf32>, vector<32x96xf32>, vector<12x96xf32> -> vector<12x96xf32>
    %c1_92 = arith.constant 1 : index
    %c0_93 = arith.constant 0 : index
    %c0_94 = arith.constant 0 : index
    %189 = vector.load %arg12[%c1_92, %c0_93, %c0_94] : memref<2x1x96xf32, #tpu.memory_space<vmem>>, vector<1x1x96xf32>
    %190 = vector.shape_cast %189 : vector<1x1x96xf32> to vector<1x96xf32>
    %191 = vector.broadcast %190 : vector<1x96xf32> to vector<12x96xf32>
    %192 = arith.addf %188, %191 : vector<12x96xf32>
    %193 = vector.extract_strided_slice %192 {offsets = [0, 0], sizes = [12, 8], strides = [1, 1]} : vector<12x96xf32> to vector<12x8xf32>
    %194 = vector.extract_strided_slice %192 {offsets = [0, 32], sizes = [12, 8], strides = [1, 1]} : vector<12x96xf32> to vector<12x8xf32>
    %195 = vector.extract_strided_slice %192 {offsets = [0, 64], sizes = [12, 8], strides = [1, 1]} : vector<12x96xf32> to vector<12x8xf32>
    %cst_95 = arith.constant dense<0.000000e+00> : vector<12x12xf32>
    %196 = tpu.matmul %193, %194, %cst_95 {dimension_numbers = #tpu.dot_dimension_numbers<[1], [1], [0], [0], [0, 0, 1, 0], [], []>} : vector<12x8xf32>, vector<12x8xf32>, vector<12x12xf32> -> vector<12x12xf32>
    %cst_96 = arith.constant 0.353553385 : f32
    %197 = vector.broadcast %cst_96 : f32 to vector<12x12xf32>
    %198 = arith.mulf %196, %197 : vector<12x12xf32>
    %199 = vector.broadcast %10 : vector<1x12xf32> to vector<12x12xf32>
    %200 = arith.addf %198, %199 : vector<12x12xf32>
    %cst_97 = arith.constant dense<0xFF800000> : vector<12xf32>
    %201 = vector.multi_reduction <maximumf>, %200, %cst_97 [1] : vector<12x12xf32> to vector<12xf32>
    %202 = vector.shape_cast %201 : vector<12xf32> to vector<12x1xf32>
    %203 = vector.broadcast %202 : vector<12x1xf32> to vector<12x12xf32>
    %204 = arith.subf %200, %203 : vector<12x12xf32>
    %205 = math.exp %204 : vector<12x12xf32>
    %cst_98 = arith.constant dense<0.000000e+00> : vector<12xf32>
    %206 = vector.multi_reduction <add>, %205, %cst_98 [1] : vector<12x12xf32> to vector<12xf32>
    %207 = vector.shape_cast %206 : vector<12xf32> to vector<12x1xf32>
    %208 = tpu.reciprocal %207 {approx = true} : vector<12x1xf32> -> vector<12x1xf32>
    %209 = vector.broadcast %208 : vector<12x1xf32> to vector<12x12xf32>
    %210 = arith.mulf %205, %209 : vector<12x12xf32>
    %cst_99 = arith.constant dense<0.000000e+00> : vector<12x8xf32>
    %211 = tpu.matmul %210, %195, %cst_99 {dimension_numbers = #tpu.dot_dimension_numbers<[1], [0], [0], [1], [0, 0, 1, 1], [], []>} : vector<12x12xf32>, vector<12x8xf32>, vector<12x8xf32> -> vector<12x8xf32>
    %212 = vector.extract_strided_slice %192 {offsets = [0, 8], sizes = [12, 8], strides = [1, 1]} : vector<12x96xf32> to vector<12x8xf32>
    %213 = vector.extract_strided_slice %192 {offsets = [0, 40], sizes = [12, 8], strides = [1, 1]} : vector<12x96xf32> to vector<12x8xf32>
    %214 = vector.extract_strided_slice %192 {offsets = [0, 72], sizes = [12, 8], strides = [1, 1]} : vector<12x96xf32> to vector<12x8xf32>
    %cst_100 = arith.constant dense<0.000000e+00> : vector<12x12xf32>
    %215 = tpu.matmul %212, %213, %cst_100 {dimension_numbers = #tpu.dot_dimension_numbers<[1], [1], [0], [0], [0, 0, 1, 0], [], []>} : vector<12x8xf32>, vector<12x8xf32>, vector<12x12xf32> -> vector<12x12xf32>
    %cst_101 = arith.constant 0.353553385 : f32
    %216 = vector.broadcast %cst_101 : f32 to vector<12x12xf32>
    %217 = arith.mulf %215, %216 : vector<12x12xf32>
    %218 = vector.broadcast %10 : vector<1x12xf32> to vector<12x12xf32>
    %219 = arith.addf %217, %218 : vector<12x12xf32>
    %cst_102 = arith.constant dense<0xFF800000> : vector<12xf32>
    %220 = vector.multi_reduction <maximumf>, %219, %cst_102 [1] : vector<12x12xf32> to vector<12xf32>
    %221 = vector.shape_cast %220 : vector<12xf32> to vector<12x1xf32>
    %222 = vector.broadcast %221 : vector<12x1xf32> to vector<12x12xf32>
    %223 = arith.subf %219, %222 : vector<12x12xf32>
    %224 = math.exp %223 : vector<12x12xf32>
    %cst_103 = arith.constant dense<0.000000e+00> : vector<12xf32>
    %225 = vector.multi_reduction <add>, %224, %cst_103 [1] : vector<12x12xf32> to vector<12xf32>
    %226 = vector.shape_cast %225 : vector<12xf32> to vector<12x1xf32>
    %227 = tpu.reciprocal %226 {approx = true} : vector<12x1xf32> -> vector<12x1xf32>
    %228 = vector.broadcast %227 : vector<12x1xf32> to vector<12x12xf32>
    %229 = arith.mulf %224, %228 : vector<12x12xf32>
    %cst_104 = arith.constant dense<0.000000e+00> : vector<12x8xf32>
    %230 = tpu.matmul %229, %214, %cst_104 {dimension_numbers = #tpu.dot_dimension_numbers<[1], [0], [0], [1], [0, 0, 1, 1], [], []>} : vector<12x12xf32>, vector<12x8xf32>, vector<12x8xf32> -> vector<12x8xf32>
    %231 = vector.extract_strided_slice %192 {offsets = [0, 16], sizes = [12, 8], strides = [1, 1]} : vector<12x96xf32> to vector<12x8xf32>
    %232 = vector.extract_strided_slice %192 {offsets = [0, 48], sizes = [12, 8], strides = [1, 1]} : vector<12x96xf32> to vector<12x8xf32>
    %233 = vector.extract_strided_slice %192 {offsets = [0, 80], sizes = [12, 8], strides = [1, 1]} : vector<12x96xf32> to vector<12x8xf32>
    %cst_105 = arith.constant dense<0.000000e+00> : vector<12x12xf32>
    %234 = tpu.matmul %231, %232, %cst_105 {dimension_numbers = #tpu.dot_dimension_numbers<[1], [1], [0], [0], [0, 0, 1, 0], [], []>} : vector<12x8xf32>, vector<12x8xf32>, vector<12x12xf32> -> vector<12x12xf32>
    %cst_106 = arith.constant 0.353553385 : f32
    %235 = vector.broadcast %cst_106 : f32 to vector<12x12xf32>
    %236 = arith.mulf %234, %235 : vector<12x12xf32>
    %237 = vector.broadcast %10 : vector<1x12xf32> to vector<12x12xf32>
    %238 = arith.addf %236, %237 : vector<12x12xf32>
    %cst_107 = arith.constant dense<0xFF800000> : vector<12xf32>
    %239 = vector.multi_reduction <maximumf>, %238, %cst_107 [1] : vector<12x12xf32> to vector<12xf32>
    %240 = vector.shape_cast %239 : vector<12xf32> to vector<12x1xf32>
    %241 = vector.broadcast %240 : vector<12x1xf32> to vector<12x12xf32>
    %242 = arith.subf %238, %241 : vector<12x12xf32>
    %243 = math.exp %242 : vector<12x12xf32>
    %cst_108 = arith.constant dense<0.000000e+00> : vector<12xf32>
    %244 = vector.multi_reduction <add>, %243, %cst_108 [1] : vector<12x12xf32> to vector<12xf32>
    %245 = vector.shape_cast %244 : vector<12xf32> to vector<12x1xf32>
    %246 = tpu.reciprocal %245 {approx = true} : vector<12x1xf32> -> vector<12x1xf32>
    %247 = vector.broadcast %246 : vector<12x1xf32> to vector<12x12xf32>
    %248 = arith.mulf %243, %247 : vector<12x12xf32>
    %cst_109 = arith.constant dense<0.000000e+00> : vector<12x8xf32>
    %249 = tpu.matmul %248, %233, %cst_109 {dimension_numbers = #tpu.dot_dimension_numbers<[1], [0], [0], [1], [0, 0, 1, 1], [], []>} : vector<12x12xf32>, vector<12x8xf32>, vector<12x8xf32> -> vector<12x8xf32>
    %250 = vector.extract_strided_slice %192 {offsets = [0, 24], sizes = [12, 8], strides = [1, 1]} : vector<12x96xf32> to vector<12x8xf32>
    %251 = vector.extract_strided_slice %192 {offsets = [0, 56], sizes = [12, 8], strides = [1, 1]} : vector<12x96xf32> to vector<12x8xf32>
    %252 = vector.extract_strided_slice %192 {offsets = [0, 88], sizes = [12, 8], strides = [1, 1]} : vector<12x96xf32> to vector<12x8xf32>
    %cst_110 = arith.constant dense<0.000000e+00> : vector<12x12xf32>
    %253 = tpu.matmul %250, %251, %cst_110 {dimension_numbers = #tpu.dot_dimension_numbers<[1], [1], [0], [0], [0, 0, 1, 0], [], []>} : vector<12x8xf32>, vector<12x8xf32>, vector<12x12xf32> -> vector<12x12xf32>
    %cst_111 = arith.constant 0.353553385 : f32
    %254 = vector.broadcast %cst_111 : f32 to vector<12x12xf32>
    %255 = arith.mulf %253, %254 : vector<12x12xf32>
    %256 = vector.broadcast %10 : vector<1x12xf32> to vector<12x12xf32>
    %257 = arith.addf %255, %256 : vector<12x12xf32>
    %cst_112 = arith.constant dense<0xFF800000> : vector<12xf32>
    %258 = vector.multi_reduction <maximumf>, %257, %cst_112 [1] : vector<12x12xf32> to vector<12xf32>
    %259 = vector.shape_cast %258 : vector<12xf32> to vector<12x1xf32>
    %260 = vector.broadcast %259 : vector<12x1xf32> to vector<12x12xf32>
    %261 = arith.subf %257, %260 : vector<12x12xf32>
    %262 = math.exp %261 : vector<12x12xf32>
    %cst_113 = arith.constant dense<0.000000e+00> : vector<12xf32>
    %263 = vector.multi_reduction <add>, %262, %cst_113 [1] : vector<12x12xf32> to vector<12xf32>
    %264 = vector.shape_cast %263 : vector<12xf32> to vector<12x1xf32>
    %265 = tpu.reciprocal %264 {approx = true} : vector<12x1xf32> -> vector<12x1xf32>
    %266 = vector.broadcast %265 : vector<12x1xf32> to vector<12x12xf32>
    %267 = arith.mulf %262, %266 : vector<12x12xf32>
    %cst_114 = arith.constant dense<0.000000e+00> : vector<12x8xf32>
    %268 = tpu.matmul %267, %252, %cst_114 {dimension_numbers = #tpu.dot_dimension_numbers<[1], [0], [0], [1], [0, 0, 1, 1], [], []>} : vector<12x12xf32>, vector<12x8xf32>, vector<12x8xf32> -> vector<12x8xf32>
    %269 = tpu.concatenate %211, %230, %249, %268 in 1 : vector<12x8xf32>, vector<12x8xf32>, vector<12x8xf32>, vector<12x8xf32> -> vector<12x32xf32>
    %c1_115 = arith.constant 1 : index
    %c0_116 = arith.constant 0 : index
    %c0_117 = arith.constant 0 : index
    %270 = vector.load %arg13[%c1_115, %c0_116, %c0_117] : memref<2x32x32xf32, #tpu.memory_space<vmem>>, vector<1x32x32xf32>
    %271 = vector.shape_cast %270 : vector<1x32x32xf32> to vector<32x32xf32>
    %cst_118 = arith.constant dense<0.000000e+00> : vector<12x32xf32>
    %272 = tpu.matmul %269, %271, %cst_118 {dimension_numbers = #tpu.dot_dimension_numbers<[1], [0], [0], [1], [0, 0, 1, 1], [], []>} : vector<12x32xf32>, vector<32x32xf32>, vector<12x32xf32> -> vector<12x32xf32>
    %c1_119 = arith.constant 1 : index
    %c0_120 = arith.constant 0 : index
    %c0_121 = arith.constant 0 : index
    %273 = vector.load %arg14[%c1_119, %c0_120, %c0_121] : memref<2x1x32xf32, #tpu.memory_space<vmem>>, vector<1x1x32xf32>
    %274 = vector.shape_cast %273 : vector<1x1x32xf32> to vector<1x32xf32>
    %275 = vector.broadcast %274 : vector<1x32xf32> to vector<12x32xf32>
    %276 = arith.addf %272, %275 : vector<12x32xf32>
    %277 = arith.addf %185, %276 : vector<12x32xf32>
    %c1_122 = arith.constant 1 : index
    %c0_123 = arith.constant 0 : index
    %c0_124 = arith.constant 0 : index
    %278 = vector.load %arg15[%c1_122, %c0_123, %c0_124] : memref<2x1x32xf32, #tpu.memory_space<vmem>>, vector<1x1x32xf32>
    %279 = vector.shape_cast %278 : vector<1x1x32xf32> to vector<1x32xf32>
    %c1_125 = arith.constant 1 : index
    %c0_126 = arith.constant 0 : index
    %c0_127 = arith.constant 0 : index
    %280 = vector.load %arg16[%c1_125, %c0_126, %c0_127] : memref<2x1x32xf32, #tpu.memory_space<vmem>>, vector<1x1x32xf32>
    %281 = vector.shape_cast %280 : vector<1x1x32xf32> to vector<1x32xf32>
    %cst_128 = arith.constant dense<0.000000e+00> : vector<12xf32>
    %282 = vector.multi_reduction <add>, %277, %cst_128 [1] : vector<12x32xf32> to vector<12xf32>
    %283 = vector.shape_cast %282 : vector<12xf32> to vector<12x1xf32>
    %cst_129 = arith.constant 3.200000e+01 : f32
    %284 = vector.broadcast %cst_129 : f32 to vector<12x1xf32>
    %285 = arith.divf %283, %284 : vector<12x1xf32>
    %286 = vector.broadcast %285 : vector<12x1xf32> to vector<12x32xf32>
    %287 = arith.subf %277, %286 : vector<12x32xf32>
    %288 = arith.mulf %287, %287 : vector<12x32xf32>
    %cst_130 = arith.constant dense<0.000000e+00> : vector<12xf32>
    %289 = vector.multi_reduction <add>, %288, %cst_130 [1] : vector<12x32xf32> to vector<12xf32>
    %290 = vector.shape_cast %289 : vector<12xf32> to vector<12x1xf32>
    %cst_131 = arith.constant 3.200000e+01 : f32
    %291 = vector.broadcast %cst_131 : f32 to vector<12x1xf32>
    %292 = arith.divf %290, %291 : vector<12x1xf32>
    %293 = vector.broadcast %285 : vector<12x1xf32> to vector<12x32xf32>
    %294 = arith.subf %277, %293 : vector<12x32xf32>
    %cst_132 = arith.constant 9.99999974E-6 : f32
    %295 = vector.broadcast %cst_132 : f32 to vector<12x1xf32>
    %296 = arith.addf %292, %295 : vector<12x1xf32>
    %297 = math.rsqrt %296 : vector<12x1xf32>
    %298 = vector.broadcast %297 : vector<12x1xf32> to vector<12x32xf32>
    %299 = arith.mulf %294, %298 : vector<12x32xf32>
    %300 = vector.broadcast %279 : vector<1x32xf32> to vector<12x32xf32>
    %301 = arith.mulf %299, %300 : vector<12x32xf32>
    %302 = vector.broadcast %281 : vector<1x32xf32> to vector<12x32xf32>
    %303 = arith.addf %301, %302 : vector<12x32xf32>
    %c1_133 = arith.constant 1 : index
    %c0_134 = arith.constant 0 : index
    %c0_135 = arith.constant 0 : index
    %304 = vector.load %arg17[%c1_133, %c0_134, %c0_135] : memref<2x32x64xf32, #tpu.memory_space<vmem>>, vector<1x32x64xf32>
    %305 = vector.shape_cast %304 : vector<1x32x64xf32> to vector<32x64xf32>
    %cst_136 = arith.constant dense<0.000000e+00> : vector<12x64xf32>
    %306 = tpu.matmul %303, %305, %cst_136 {dimension_numbers = #tpu.dot_dimension_numbers<[1], [0], [0], [1], [0, 0, 1, 1], [], []>} : vector<12x32xf32>, vector<32x64xf32>, vector<12x64xf32> -> vector<12x64xf32>
    %c1_137 = arith.constant 1 : index
    %c0_138 = arith.constant 0 : index
    %c0_139 = arith.constant 0 : index
    %307 = vector.load %arg18[%c1_137, %c0_138, %c0_139] : memref<2x1x64xf32, #tpu.memory_space<vmem>>, vector<1x1x64xf32>
    %308 = vector.shape_cast %307 : vector<1x1x64xf32> to vector<1x64xf32>
    %309 = vector.broadcast %308 : vector<1x64xf32> to vector<12x64xf32>
    %310 = arith.addf %306, %309 : vector<12x64xf32>
    %cst_140 = arith.constant 0.000000e+00 : f32
    %311 = vector.broadcast %cst_140 : f32 to vector<12x64xf32>
    %312 = arith.maximumf %310, %311 : vector<12x64xf32>
    %c1_141 = arith.constant 1 : index
    %c0_142 = arith.constant 0 : index
    %c0_143 = arith.constant 0 : index
    %313 = vector.load %arg19[%c1_141, %c0_142, %c0_143] : memref<2x64x32xf32, #tpu.memory_space<vmem>>, vector<1x64x32xf32>
    %314 = vector.shape_cast %313 : vector<1x64x32xf32> to vector<64x32xf32>
    %cst_144 = arith.constant dense<0.000000e+00> : vector<12x32xf32>
    %315 = tpu.matmul %312, %314, %cst_144 {dimension_numbers = #tpu.dot_dimension_numbers<[1], [0], [0], [1], [0, 0, 1, 1], [], []>} : vector<12x64xf32>, vector<64x32xf32>, vector<12x32xf32> -> vector<12x32xf32>
    %c1_145 = arith.constant 1 : index
    %c0_146 = arith.constant 0 : index
    %c0_147 = arith.constant 0 : index
    %316 = vector.load %arg20[%c1_145, %c0_146, %c0_147] : memref<2x1x32xf32, #tpu.memory_space<vmem>>, vector<1x1x32xf32>
    %317 = vector.shape_cast %316 : vector<1x1x32xf32> to vector<1x32xf32>
    %318 = vector.broadcast %317 : vector<1x32xf32> to vector<12x32xf32>
    %319 = arith.addf %315, %318 : vector<12x32xf32>
    %320 = arith.addf %303, %319 : vector<12x32xf32>
    %c1_148 = arith.constant 1 : index
    %c0_149 = arith.constant 0 : index
    %c0_150 = arith.constant 0 : index
    %321 = vector.load %arg21[%c1_148, %c0_149, %c0_150] : memref<2x1x32xf32, #tpu.memory_space<vmem>>, vector<1x1x32xf32>
    %322 = vector.shape_cast %321 : vector<1x1x32xf32> to vector<1x32xf32>
    %c1_151 = arith.constant 1 : index
    %c0_152 = arith.constant 0 : index
    %c0_153 = arith.constant 0 : index
    %323 = vector.load %arg22[%c1_151, %c0_152, %c0_153] : memref<2x1x32xf32, #tpu.memory_space<vmem>>, vector<1x1x32xf32>
    %324 = vector.shape_cast %323 : vector<1x1x32xf32> to vector<1x32xf32>
    %cst_154 = arith.constant dense<0.000000e+00> : vector<12xf32>
    %325 = vector.multi_reduction <add>, %320, %cst_154 [1] : vector<12x32xf32> to vector<12xf32>
    %326 = vector.shape_cast %325 : vector<12xf32> to vector<12x1xf32>
    %cst_155 = arith.constant 3.200000e+01 : f32
    %327 = vector.broadcast %cst_155 : f32 to vector<12x1xf32>
    %328 = arith.divf %326, %327 : vector<12x1xf32>
    %329 = vector.broadcast %328 : vector<12x1xf32> to vector<12x32xf32>
    %330 = arith.subf %320, %329 : vector<12x32xf32>
    %331 = arith.mulf %330, %330 : vector<12x32xf32>
    %cst_156 = arith.constant dense<0.000000e+00> : vector<12xf32>
    %332 = vector.multi_reduction <add>, %331, %cst_156 [1] : vector<12x32xf32> to vector<12xf32>
    %333 = vector.shape_cast %332 : vector<12xf32> to vector<12x1xf32>
    %cst_157 = arith.constant 3.200000e+01 : f32
    %334 = vector.broadcast %cst_157 : f32 to vector<12x1xf32>
    %335 = arith.divf %333, %334 : vector<12x1xf32>
    %336 = vector.broadcast %328 : vector<12x1xf32> to vector<12x32xf32>
    %337 = arith.subf %320, %336 : vector<12x32xf32>
    %cst_158 = arith.constant 9.99999974E-6 : f32
    %338 = vector.broadcast %cst_158 : f32 to vector<12x1xf32>
    %339 = arith.addf %335, %338 : vector<12x1xf32>
    %340 = math.rsqrt %339 : vector<12x1xf32>
    %341 = vector.broadcast %340 : vector<12x1xf32> to vector<12x32xf32>
    %342 = arith.mulf %337, %341 : vector<12x32xf32>
    %343 = vector.broadcast %322 : vector<1x32xf32> to vector<12x32xf32>
    %344 = arith.mulf %342, %343 : vector<12x32xf32>
    %345 = vector.broadcast %324 : vector<1x32xf32> to vector<12x32xf32>
    %346 = arith.addf %344, %345 : vector<12x32xf32>
    %347 = vector.extract_strided_slice %346 {offsets = [8, 0], sizes = [4, 32], strides = [1, 1]} : vector<12x32xf32> to vector<4x32xf32>
    %c0_159 = arith.constant 0 : index
    %c0_160 = arith.constant 0 : index
    %348 = vector.load %arg23[%c0_159, %c0_160] : memref<32x64xf32, #tpu.memory_space<vmem>>, vector<32x64xf32>
    %cst_161 = arith.constant dense<0.000000e+00> : vector<4x64xf32>
    %349 = tpu.matmul %347, %348, %cst_161 {dimension_numbers = #tpu.dot_dimension_numbers<[1], [0], [0], [1], [0, 0, 1, 1], [], []>} : vector<4x32xf32>, vector<32x64xf32>, vector<4x64xf32> -> vector<4x64xf32>
    %c0_162 = arith.constant 0 : index
    %c0_163 = arith.constant 0 : index
    %350 = vector.load %arg24[%c0_162, %c0_163] : memref<1x64xf32, #tpu.memory_space<vmem>>, vector<1x64xf32>
    %351 = vector.broadcast %350 : vector<1x64xf32> to vector<4x64xf32>
    %352 = arith.addf %349, %351 : vector<4x64xf32>
    %cst_164 = arith.constant 0.000000e+00 : f32
    %353 = vector.broadcast %cst_164 : f32 to vector<4x64xf32>
    %354 = arith.maximumf %352, %353 : vector<4x64xf32>
    %c0_165 = arith.constant 0 : index
    %c0_166 = arith.constant 0 : index
    %355 = vector.load %arg25[%c0_165, %c0_166] : memref<64x2xf32, #tpu.memory_space<vmem>>, vector<64x2xf32>
    %cst_167 = arith.constant dense<0.000000e+00> : vector<4x2xf32>
    %356 = tpu.matmul %354, %355, %cst_167 {dimension_numbers = #tpu.dot_dimension_numbers<[1], [0], [0], [1], [0, 0, 1, 1], [], []>} : vector<4x64xf32>, vector<64x2xf32>, vector<4x2xf32> -> vector<4x2xf32>
    %c0_168 = arith.constant 0 : index
    %c0_169 = arith.constant 0 : index
    %357 = vector.load %arg26[%c0_168, %c0_169] : memref<1x2xf32, #tpu.memory_space<vmem>>, vector<1x2xf32>
    %358 = vector.broadcast %357 : vector<1x2xf32> to vector<4x2xf32>
    %359 = arith.addf %356, %358 : vector<4x2xf32>
    %360 = vector.extract_strided_slice %359 {offsets = [0, 0], sizes = [4, 1], strides = [1, 1]} : vector<4x2xf32> to vector<4x1xf32>
    %361 = vector.extract_strided_slice %359 {offsets = [0, 1], sizes = [4, 1], strides = [1, 1]} : vector<4x2xf32> to vector<4x1xf32>
    %c0_170 = arith.constant 0 : index
    %c0_171 = arith.constant 0 : index
    %c0_172 = arith.constant 0 : index
    %362 = vector.load %arg4[%c0_170, %c0_171, %c0_172] : memref<1x4x1xf32, #tpu.memory_space<vmem>>, vector<1x4x1xf32>
    %363 = vector.shape_cast %362 : vector<1x4x1xf32> to vector<4x1xf32>
    %c0_173 = arith.constant 0 : index
    %c0_174 = arith.constant 0 : index
    %c0_175 = arith.constant 0 : index
    %364 = vector.load %arg5[%c0_173, %c0_174, %c0_175] : memref<1x1x4xf32, #tpu.memory_space<vmem>>, vector<1x1x4xf32>
    %365 = vector.shape_cast %364 : vector<1x1x4xf32> to vector<1x4xf32>
    %366 = vector.broadcast %363 : vector<4x1xf32> to vector<4x4xf32>
    %367 = vector.broadcast %365 : vector<1x4xf32> to vector<4x4xf32>
    %368 = arith.cmpf oeq, %366, %367 : vector<4x4xf32>
    %369 = arith.extui %368 : vector<4x4xi1> to vector<4x4xi32>
    %370 = arith.sitofp %369 : vector<4x4xi32> to vector<4x4xf32>
    %cst_176 = arith.constant dense<0xFF800000> : vector<1xf32>
    %371 = vector.multi_reduction <maximumf>, %360, %cst_176 [0] : vector<4x1xf32> to vector<1xf32>
    %372 = vector.shape_cast %371 : vector<1xf32> to vector<1x1xf32>
    %373 = vector.broadcast %372 : vector<1x1xf32> to vector<4x1xf32>
    %374 = arith.subf %360, %373 : vector<4x1xf32>
    %375 = math.exp %374 : vector<4x1xf32>
    %cst_177 = arith.constant dense<0.000000e+00> : vector<4x1xf32>
    %376 = tpu.matmul %370, %375, %cst_177 {dimension_numbers = #tpu.dot_dimension_numbers<[1], [0], [0], [1], [0, 0, 1, 1], [], []>} : vector<4x4xf32>, vector<4x1xf32>, vector<4x1xf32> -> vector<4x1xf32>
    %377 = arith.divf %375, %376 : vector<4x1xf32>
    %378 = math.exp %361 : vector<4x1xf32>
    %c0_178 = arith.constant 0 : index
    %c0_179 = arith.constant 0 : index
    %c0_180 = arith.constant 0 : index
    %379 = vector.load %arg3[%c0_178, %c0_179, %c0_180] : memref<1x4x1xf32, #tpu.memory_space<vmem>>, vector<1x4x1xf32>
    %380 = vector.shape_cast %379 : vector<1x4x1xf32> to vector<4x1xf32>
    %381 = arith.subf %380, %377 : vector<4x1xf32>
    %382 = arith.mulf %381, %381 : vector<4x1xf32>
    %cst_181 = arith.constant 0.000000e+00 : f32
    %383 = vector.broadcast %cst_181 : f32 to vector<4x1xf32>
    %384 = arith.subf %383, %382 : vector<4x1xf32>
    %cst_182 = arith.constant 2.000000e+00 : f32
    %385 = vector.broadcast %cst_182 : f32 to vector<4x1xf32>
    %386 = arith.mulf %385, %378 : vector<4x1xf32>
    %387 = arith.mulf %386, %378 : vector<4x1xf32>
    %388 = arith.divf %384, %387 : vector<4x1xf32>
    %389 = arith.subf %388, %361 : vector<4x1xf32>
    %cst_183 = arith.constant 0.918938517 : f32
    %390 = vector.broadcast %cst_183 : f32 to vector<4x1xf32>
    %391 = arith.subf %389, %390 : vector<4x1xf32>
    %cst_184 = arith.constant dense<0.000000e+00> : vector<4xf32>
    %392 = vector.multi_reduction <add>, %391, %cst_184 [1] : vector<4x1xf32> to vector<4xf32>
    %393 = vector.shape_cast %392 : vector<4xf32> to vector<4x1xf32>
    %c0_185 = arith.constant 0 : index
    %c0_186 = arith.constant 0 : index
    %c0_187 = arith.constant 0 : index
    %394 = vector.load %arg6[%c0_185, %c0_186, %c0_187] : memref<1x4x1xf32, #tpu.memory_space<vmem>>, vector<1x4x1xf32>
    %395 = vector.shape_cast %394 : vector<1x4x1xf32> to vector<4x1xf32>
    %cst_188 = arith.constant 5.000000e-01 : f32
    %396 = vector.broadcast %cst_188 : f32 to vector<4x1xf32>
    %397 = arith.cmpf ogt, %395, %396 : vector<4x1xf32>
    %cst_189 = arith.constant 0.000000e+00 : f32
    %398 = vector.broadcast %cst_189 : f32 to vector<4x1xf32>
    %399 = arith.select %397, %393, %398 : vector<4x1xi1>, vector<4x1xf32>
    %c0_190 = arith.constant 0 : index
    %c0_191 = arith.constant 0 : index
    %c0_192 = arith.constant 0 : index
    %400 = vector.load %arg27[%c0_190, %c0_191, %c0_192] : memref<1x4x1xf32, #tpu.memory_space<vmem>>, vector<1x4x1xf32>
    %401 = vector.shape_cast %400 : vector<1x4x1xf32> to vector<4x1xf32>
    %402 = vector.shape_cast %399 : vector<4x1xf32> to vector<1x4x1xf32>
    tpu.vector_store %arg27[%c0_190, %c0_191, %c0_192], %402 {strides = array<i32>} : memref<1x4x1xf32, #tpu.memory_space<vmem>>, vector<1x4x1xf32>,
    return
  }
  func.func @transform_0(%arg0: i32) -> (i32, i32, i32) {
    %c0_i32 = arith.constant 0 : i32
    %c0_i32_0 = arith.constant 0 : i32
    %c0_i32_1 = arith.constant 0 : i32
    return %arg0, %c0_i32, %c0_i32_0 : i32, i32, i32
  }
  func.func @transform_1(%arg0: i32) -> (i32, i32, i32) {
    %c0_i32 = arith.constant 0 : i32
    %c0_i32_0 = arith.constant 0 : i32
    %c0_i32_1 = arith.constant 0 : i32
    return %arg0, %c0_i32, %c0_i32_0 : i32, i32, i32
  }
  func.func @transform_2(%arg0: i32) -> (i32, i32, i32) {
    %c0_i32 = arith.constant 0 : i32
    %c0_i32_0 = arith.constant 0 : i32
    %c0_i32_1 = arith.constant 0 : i32
    return %arg0, %c0_i32, %c0_i32_0 : i32, i32, i32
  }
  func.func @transform_3(%arg0: i32) -> (i32, i32, i32) {
    %c0_i32 = arith.constant 0 : i32
    %c0_i32_0 = arith.constant 0 : i32
    %c0_i32_1 = arith.constant 0 : i32
    return %arg0, %c0_i32, %c0_i32_0 : i32, i32, i32
  }
  func.func @transform_4(%arg0: i32) -> (i32, i32, i32) {
    %c0_i32 = arith.constant 0 : i32
    %c0_i32_0 = arith.constant 0 : i32
    %c0_i32_1 = arith.constant 0 : i32
    return %arg0, %c0_i32, %c0_i32_0 : i32, i32, i32
  }
  func.func @transform_5(%arg0: i32) -> (i32, i32, i32) {
    %c0_i32 = arith.constant 0 : i32
    %c0_i32_0 = arith.constant 0 : i32
    %c0_i32_1 = arith.constant 0 : i32
    return %arg0, %c0_i32, %c0_i32_0 : i32, i32, i32
  }
  func.func @transform_6(%arg0: i32) -> (i32, i32) {
    %c0_i32 = arith.constant 0 : i32
    %c0_i32_0 = arith.constant 0 : i32
    %c0_i32_1 = arith.constant 0 : i32
    return %c0_i32, %c0_i32_0 : i32, i32
  }
  func.func @transform_7(%arg0: i32) -> (i32, i32) {
    %c0_i32 = arith.constant 0 : i32
    %c0_i32_0 = arith.constant 0 : i32
    %c0_i32_1 = arith.constant 0 : i32
    return %c0_i32, %c0_i32_0 : i32, i32
  }
  func.func @transform_8(%arg0: i32) -> (i32, i32) {
    %c0_i32 = arith.constant 0 : i32
    %c0_i32_0 = arith.constant 0 : i32
    %c0_i32_1 = arith.constant 0 : i32
    return %c0_i32, %c0_i32_0 : i32, i32
  }
  func.func @transform_9(%arg0: i32) -> (i32, i32) {
    %c0_i32 = arith.constant 0 : i32
    %c0_i32_0 = arith.constant 0 : i32
    %c0_i32_1 = arith.constant 0 : i32
    return %c0_i32, %c0_i32_0 : i32, i32
  }
  func.func @transform_10(%arg0: i32) -> (i32, i32, i32) {
    %c0_i32 = arith.constant 0 : i32
    %c0_i32_0 = arith.constant 0 : i32
    %c0_i32_1 = arith.constant 0 : i32
    %c0_i32_2 = arith.constant 0 : i32
    return %c0_i32, %c0_i32_0, %c0_i32_1 : i32, i32, i32
  }
  func.func @transform_11(%arg0: i32) -> (i32, i32, i32) {
    %c0_i32 = arith.constant 0 : i32
    %c0_i32_0 = arith.constant 0 : i32
    %c0_i32_1 = arith.constant 0 : i32
    %c0_i32_2 = arith.constant 0 : i32
    return %c0_i32, %c0_i32_0, %c0_i32_1 : i32, i32, i32
  }
  func.func @transform_12(%arg0: i32) -> (i32, i32, i32) {
    %c0_i32 = arith.constant 0 : i32
    %c0_i32_0 = arith.constant 0 : i32
    %c0_i32_1 = arith.constant 0 : i32
    %c0_i32_2 = arith.constant 0 : i32
    return %c0_i32, %c0_i32_0, %c0_i32_1 : i32, i32, i32
  }
  func.func @transform_13(%arg0: i32) -> (i32, i32, i32) {
    %c0_i32 = arith.constant 0 : i32
    %c0_i32_0 = arith.constant 0 : i32
    %c0_i32_1 = arith.constant 0 : i32
    %c0_i32_2 = arith.constant 0 : i32
    return %c0_i32, %c0_i32_0, %c0_i32_1 : i32, i32, i32
  }
  func.func @transform_14(%arg0: i32) -> (i32, i32, i32) {
    %c0_i32 = arith.constant 0 : i32
    %c0_i32_0 = arith.constant 0 : i32
    %c0_i32_1 = arith.constant 0 : i32
    %c0_i32_2 = arith.constant 0 : i32
    return %c0_i32, %c0_i32_0, %c0_i32_1 : i32, i32, i32
  }
  func.func @transform_15(%arg0: i32) -> (i32, i32, i32) {
    %c0_i32 = arith.constant 0 : i32
    %c0_i32_0 = arith.constant 0 : i32
    %c0_i32_1 = arith.constant 0 : i32
    %c0_i32_2 = arith.constant 0 : i32
    return %c0_i32, %c0_i32_0, %c0_i32_1 : i32, i32, i32
  }
  func.func @transform_16(%arg0: i32) -> (i32, i32, i32) {
    %c0_i32 = arith.constant 0 : i32
    %c0_i32_0 = arith.constant 0 : i32
    %c0_i32_1 = arith.constant 0 : i32
    %c0_i32_2 = arith.constant 0 : i32
    return %c0_i32, %c0_i32_0, %c0_i32_1 : i32, i32, i32
  }
  func.func @transform_17(%arg0: i32) -> (i32, i32, i32) {
    %c0_i32 = arith.constant 0 : i32
    %c0_i32_0 = arith.constant 0 : i32
    %c0_i32_1 = arith.constant 0 : i32
    %c0_i32_2 = arith.constant 0 : i32
    return %c0_i32, %c0_i32_0, %c0_i32_1 : i32, i32, i32
  }
  func.func @transform_18(%arg0: i32) -> (i32, i32, i32) {
    %c0_i32 = arith.constant 0 : i32
    %c0_i32_0 = arith.constant 0 : i32
    %c0_i32_1 = arith.constant 0 : i32
    %c0_i32_2 = arith.constant 0 : i32
    return %c0_i32, %c0_i32_0, %c0_i32_1 : i32, i32, i32
  }
  func.func @transform_19(%arg0: i32) -> (i32, i32, i32) {
    %c0_i32 = arith.constant 0 : i32
    %c0_i32_0 = arith.constant 0 : i32
    %c0_i32_1 = arith.constant 0 : i32
    %c0_i32_2 = arith.constant 0 : i32
    return %c0_i32, %c0_i32_0, %c0_i32_1 : i32, i32, i32
  }
  func.func @transform_20(%arg0: i32) -> (i32, i32, i32) {
    %c0_i32 = arith.constant 0 : i32
    %c0_i32_0 = arith.constant 0 : i32
    %c0_i32_1 = arith.constant 0 : i32
    %c0_i32_2 = arith.constant 0 : i32
    return %c0_i32, %c0_i32_0, %c0_i32_1 : i32, i32, i32
  }
  func.func @transform_21(%arg0: i32) -> (i32, i32, i32) {
    %c0_i32 = arith.constant 0 : i32
    %c0_i32_0 = arith.constant 0 : i32
    %c0_i32_1 = arith.constant 0 : i32
    %c0_i32_2 = arith.constant 0 : i32
    return %c0_i32, %c0_i32_0, %c0_i32_1 : i32, i32, i32
  }
  func.func @transform_22(%arg0: i32) -> (i32, i32) {
    %c0_i32 = arith.constant 0 : i32
    %c0_i32_0 = arith.constant 0 : i32
    %c0_i32_1 = arith.constant 0 : i32
    return %c0_i32, %c0_i32_0 : i32, i32
  }
  func.func @transform_23(%arg0: i32) -> (i32, i32) {
    %c0_i32 = arith.constant 0 : i32
    %c0_i32_0 = arith.constant 0 : i32
    %c0_i32_1 = arith.constant 0 : i32
    return %c0_i32, %c0_i32_0 : i32, i32
  }
  func.func @transform_24(%arg0: i32) -> (i32, i32) {
    %c0_i32 = arith.constant 0 : i32
    %c0_i32_0 = arith.constant 0 : i32
    %c0_i32_1 = arith.constant 0 : i32
    return %c0_i32, %c0_i32_0 : i32, i32
  }
  func.func @transform_25(%arg0: i32) -> (i32, i32) {
    %c0_i32 = arith.constant 0 : i32
    %c0_i32_0 = arith.constant 0 : i32
    %c0_i32_1 = arith.constant 0 : i32
    return %c0_i32, %c0_i32_0 : i32, i32
  }
  func.func @transform_26(%arg0: i32) -> (i32, i32, i32) {
    %c0_i32 = arith.constant 0 : i32
    %c0_i32_0 = arith.constant 0 : i32
    %c0_i32_1 = arith.constant 0 : i32
    return %arg0, %c0_i32, %c0_i32_0 : i32, i32, i32
  }
}

</mosaic_0001>

<llo_original>
// kernel: tpu_custom_call.1
$region0: #{tpu_custom_call.1}
  #allocation0 [shape = 'u32[]', space=smem, size = 0x4, offset = 0x4, fixed_abs, tag = 'smem constant byte address 0x4 - core index']
  #allocation1 [shape = 'u32[144,128]{1,0:T(1,128)}', space=vmem, size = 0x12000, scoped, tag = 'internal scratch']
  %s0 = inlined_call_operand.vmem [shape: f32[2,12,3], index: 0, kind: input, shape index: {}]
  %s1 = inlined_call_operand.vmem [shape: f32[2,1,12], index: 1, kind: input, shape index: {}]
  %s2 = inlined_call_operand.vmem [shape: f32[2,4,1], index: 2, kind: input, shape index: {}]
  %s3 = inlined_call_operand.vmem [shape: f32[2,4,1], index: 3, kind: input, shape index: {}]
  %s4 = inlined_call_operand.vmem [shape: f32[2,1,4], index: 4, kind: input, shape index: {}]
  %s5 = inlined_call_operand.vmem [shape: f32[2,4,1], index: 5, kind: input, shape index: {}]
  %s6 = inlined_call_operand.vmem [shape: f32[3,32], index: 6, kind: input, shape index: {}]
  %s7 = inlined_call_operand.vmem [shape: f32[1,32], index: 7, kind: input, shape index: {}]
  %s8 = inlined_call_operand.vmem [shape: f32[32,32], index: 8, kind: input, shape index: {}]
  %s9 = inlined_call_operand.vmem [shape: f32[1,32], index: 9, kind: input, shape index: {}]
  %s10 = inlined_call_operand.vmem [shape: f32[2,32,96], index: 10, kind: input, shape index: {}]
  %s11 = inlined_call_operand.vmem [shape: f32[2,1,96], index: 11, kind: input, shape index: {}]
  %s12 = inlined_call_operand.vmem [shape: f32[2,32,32], index: 12, kind: input, shape index: {}]
  %s13 = inlined_call_operand.vmem [shape: f32[2,1,32], index: 13, kind: input, shape index: {}]
  %s14 = inlined_call_operand.vmem [shape: f32[2,1,32], index: 14, kind: input, shape index: {}]
  %s15 = inlined_call_operand.vmem [shape: f32[2,1,32], index: 15, kind: input, shape index: {}]
  %s16 = inlined_call_operand.vmem [shape: f32[2,32,64], index: 16, kind: input, shape index: {}]
  %s17 = inlined_call_operand.vmem [shape: f32[2,1,64], index: 17, kind: input, shape index: {}]
  %s18 = inlined_call_operand.vmem [shape: f32[2,64,32], index: 18, kind: input, shape index: {}]
  %s19 = inlined_call_operand.vmem [shape: f32[2,1,32], index: 19, kind: input, shape index: {}]
  %s20 = inlined_call_operand.vmem [shape: f32[2,1,32], index: 20, kind: input, shape index: {}]
  %s21 = inlined_call_operand.vmem [shape: f32[2,1,32], index: 21, kind: input, shape index: {}]
  %s22 = inlined_call_operand.vmem [shape: f32[32,64], index: 22, kind: input, shape index: {}]
  %s23 = inlined_call_operand.vmem [shape: f32[1,64], index: 23, kind: input, shape index: {}]
  %s24 = inlined_call_operand.vmem [shape: f32[64,2], index: 24, kind: input, shape index: {}]
  %s25 = inlined_call_operand.vmem [shape: f32[1,2], index: 25, kind: input, shape index: {}]
  %s26 = inlined_call_operand.vmem [shape: f32[2,4,1], index: 26, kind: output, shape index: {}]
  %s27 = sld [smem:[#allocation0]]
  $region137: #{tpu_custom_call.1} parent=0
    _
  %s29 = ssub.s32 1, %s27
  %s30 = scalar_select 0, %s29, %s27
  loop: start=0, step=1, limit=4
  $region2: #{tpu_custom_call.1} parent=0 // loop_pre_header
    _
  $region3: #{tpu_custom_call.1} parent=0 // loop_header
    %s32 = sphi 0, %s36
    %p33 = scmp.ge.s32.totalorder %s32, 4
    %s42 = sphi 0, %s44
    %s45 = sphi 0, %s42
    %s46 = sphi 0, %s45
    %s62 = sphi 0, %s46
    %s68 = sphi 0, %s70
    %s71 = sphi 0, %s68
    %s72 = sphi 0, %s71
    %s88 = sphi 0, %s72
    %s94 = sphi 0, %s96
    %s97 = sphi 0, %s94
    %s98 = sphi 0, %s97
    %s114 = sphi 0, %s98
    %s120 = sphi 0, %s122
    %s123 = sphi 0, %s120
    %s124 = sphi 0, %s123
    %s140 = sphi 0, %s124
    %s146 = sphi 0, %s148
    %s149 = sphi 0, %s146
    %s150 = sphi 0, %s149
    %s166 = sphi 0, %s150
    %s172 = sphi 0, %s174
    %s175 = sphi 0, %s172
    %s176 = sphi 0, %s175
    %s192 = sphi 0, %s176
    %s196 = sphi 0, %s196
    %s198 = sphi 0, %s196
    %s199 = sphi 0, %s198
    %s213 = sphi 0, %s199
    %s217 = sphi 0, %s217
    %s219 = sphi 0, %s217
    %s220 = sphi 0, %s219
    %s234 = sphi 0, %s220
    %s238 = sphi 0, %s238
    %s240 = sphi 0, %s238
    %s241 = sphi 0, %s240
    %s255 = sphi 0, %s241
    %s259 = sphi 0, %s259
    %s261 = sphi 0, %s259
    %s262 = sphi 0, %s261
    %s276 = sphi 0, %s262
    %s280 = sphi 0, %s280
    %s282 = sphi 0, %s280
    %s283 = sphi 0, %s282
    %s297 = sphi 0, %s283
    %s301 = sphi 0, %s301
    %s303 = sphi 0, %s301
    %s304 = sphi 0, %s303
    %s318 = sphi 0, %s304
    %s322 = sphi 0, %s322
    %s324 = sphi 0, %s322
    %s325 = sphi 0, %s324
    %s339 = sphi 0, %s325
    %s343 = sphi 0, %s343
    %s345 = sphi 0, %s343
    %s346 = sphi 0, %s345
    %s360 = sphi 0, %s346
    %s364 = sphi 0, %s364
    %s366 = sphi 0, %s364
    %s367 = sphi 0, %s366
    %s381 = sphi 0, %s367
    %s385 = sphi 0, %s385
    %s387 = sphi 0, %s385
    %s388 = sphi 0, %s387
    %s402 = sphi 0, %s388
    %s406 = sphi 0, %s406
    %s408 = sphi 0, %s406
    %s409 = sphi 0, %s408
    %s423 = sphi 0, %s409
    %s427 = sphi 0, %s427
    %s429 = sphi 0, %s427
    %s430 = sphi 0, %s429
    %s444 = sphi 0, %s430
    %s448 = sphi 0, %s448
    %s450 = sphi 0, %s448
    %s451 = sphi 0, %s450
    %s465 = sphi 0, %s451
    %s469 = sphi 0, %s469
    %s471 = sphi 0, %s469
    %s472 = sphi 0, %s471
    %s486 = sphi 0, %s472
    %s490 = sphi 0, %s490
    %s492 = sphi 0, %s490
    %s493 = sphi 0, %s492
    %s507 = sphi 0, %s493
    %s511 = sphi 0, %s511
    %s513 = sphi 0, %s511
    %s514 = sphi 0, %s513
    %s528 = sphi 0, %s514
    %s532 = sphi 0, %s532
    %s534 = sphi 0, %s532
    %s535 = sphi 0, %s534
    %s549 = sphi 0, %s535
    %s553 = sphi 0, %s553
    %s555 = sphi 0, %s553
    %s556 = sphi 0, %s555
    %s570 = sphi 0, %s556
    %s574 = sphi 0, %s574
    %s576 = sphi 0, %s574
    %s577 = sphi 0, %s576
    %s591 = sphi 0, %s577
    %s595 = sphi 0, %s595
    %s597 = sphi 0, %s595
    %s598 = sphi 0, %s597
    %s612 = sphi 0, %s598
    %s618 = sphi 0, %s620
    %s621 = sphi 0, %s618
    %s622 = sphi 0, %s621
    %s638 = sphi 0, %s622
  $region4: #{tpu_custom_call.1} parent=0 // loop_header_branch
    %35 = sbr.rel (%p33) target = $region8
  $region5: #{tpu_custom_call.1} parent=0 // loop_body
    %s37 = ssub.s32 %s32, 1
    %s38 = ssub.s32 %s32, 2
    %s39 = sadd.s32 %s32, 1
    %s40 = ssub.s32 %s32, %s39
    %p41 = scmp.eq.s32.totalorder %s40, 0
    %s43 = sadd.s32 %s42, 1
    %s44 = scalar_select %p41, %s42, %s43
    %p47 = pneg %p41
    %p48 = scmp.eq.s32.totalorder %s32, 1
    %p49 = por %p47, %p48
    %p50 = scmp.ne.s32.totalorder %s42, %s45
    %p51 = scmp.eq.s32.totalorder %s32, 0
    %p52 = por %p50, %p51
    %p53 = scmp.ne.s32.totalorder %s42, %s45
    %p54 = scmp.eq.s32.totalorder %s37, 1
    %p55 = por %p53, %p54
    %p56 = scmp.ne.s32.totalorder %s45, %s46
    %p57 = scmp.eq.s32.totalorder %s37, 0
    %p58 = por %p56, %p57
    %p59 = scmp.ne.s32.totalorder %s45, %s46
    %p60 = scmp.eq.s32.totalorder %s38, 1
    %p61 = por %p59, %p60
    %p63 = scmp.ne.s32.totalorder %s46, %s62
    %p64 = scmp.eq.s32.totalorder %s38, 0
    %p65 = por %p63, %p64
    %s66 = ssub.s32 %s32, %s39
    %p67 = scmp.eq.s32.totalorder %s66, 0
    %s69 = sadd.s32 %s68, 1
    %s70 = scalar_select %p67, %s68, %s69
    %p73 = pneg %p67
    %p74 = scmp.eq.s32.totalorder %s32, 1
    %p75 = por %p73, %p74
    %p76 = scmp.ne.s32.totalorder %s68, %s71
    %p77 = scmp.eq.s32.totalorder %s32, 0
    %p78 = por %p76, %p77
    %p79 = scmp.ne.s32.totalorder %s68, %s71
    %p80 = scmp.eq.s32.totalorder %s37, 1
    %p81 = por %p79, %p80
    %p82 = scmp.ne.s32.totalorder %s71, %s72
    %p83 = scmp.eq.s32.totalorder %s37, 0
    %p84 = por %p82, %p83
    %p85 = scmp.ne.s32.totalorder %s71, %s72
    %p86 = scmp.eq.s32.totalorder %s38, 1
    %p87 = por %p85, %p86
    %p89 = scmp.ne.s32.totalorder %s72, %s88
    %p90 = scmp.eq.s32.totalorder %s38, 0
    %p91 = por %p89, %p90
    %s92 = ssub.s32 %s32, %s39
    %p93 = scmp.eq.s32.totalorder %s92, 0
    %s95 = sadd.s32 %s94, 1
    %s96 = scalar_select %p93, %s94, %s95
    %p99 = pneg %p93
    %p100 = scmp.eq.s32.totalorder %s32, 1
    %p101 = por %p99, %p100
    %p102 = scmp.ne.s32.totalorder %s94, %s97
    %p103 = scmp.eq.s32.totalorder %s32, 0
    %p104 = por %p102, %p103
    %p105 = scmp.ne.s32.totalorder %s94, %s97
    %p106 = scmp.eq.s32.totalorder %s37, 1
    %p107 = por %p105, %p106
    %p108 = scmp.ne.s32.totalorder %s97, %s98
    %p109 = scmp.eq.s32.totalorder %s37, 0
    %p110 = por %p108, %p109
    %p111 = scmp.ne.s32.totalorder %s97, %s98
    %p112 = scmp.eq.s32.totalorder %s38, 1
    %p113 = por %p111, %p112
    %p115 = scmp.ne.s32.totalorder %s98, %s114
    %p116 = scmp.eq.s32.totalorder %s38, 0
    %p117 = por %p115, %p116
    %s118 = ssub.s32 %s32, %s39
    %p119 = scmp.eq.s32.totalorder %s118, 0
    %s121 = sadd.s32 %s120, 1
    %s122 = scalar_select %p119, %s120, %s121
    %p125 = pneg %p119
    %p126 = scmp.eq.s32.totalorder %s32, 1
    %p127 = por %p125, %p126
    %p128 = scmp.ne.s32.totalorder %s120, %s123
    %p129 = scmp.eq.s32.totalorder %s32, 0
    %p130 = por %p128, %p129
    %p131 = scmp.ne.s32.totalorder %s120, %s123
    %p132 = scmp.eq.s32.totalorder %s37, 1
    %p133 = por %p131, %p132
    %p134 = scmp.ne.s32.totalorder %s123, %s124
    %p135 = scmp.eq.s32.totalorder %s37, 0
    %p136 = por %p134, %p135
    %p137 = scmp.ne.s32.totalorder %s123, %s124
    %p138 = scmp.eq.s32.totalorder %s38, 1
    %p139 = por %p137, %p138
    %p141 = scmp.ne.s32.totalorder %s124, %s140
    %p142 = scmp.eq.s32.totalorder %s38, 0
    %p143 = por %p141, %p142
    %s144 = ssub.s32 %s32, %s39
    %p145 = scmp.eq.s32.totalorder %s144, 0
    %s147 = sadd.s32 %s146, 1
    %s148 = scalar_select %p145, %s146, %s147
    %p151 = pneg %p145
    %p152 = scmp.eq.s32.totalorder %s32, 1
    %p153 = por %p151, %p152
    %p154 = scmp.ne.s32.totalorder %s146, %s149
    %p155 = scmp.eq.s32.totalorder %s32, 0
    %p156 = por %p154, %p155
    %p157 = scmp.ne.s32.totalorder %s146, %s149
    %p158 = scmp.eq.s32.totalorder %s37, 1
    %p159 = por %p157, %p158
    %p160 = scmp.ne.s32.totalorder %s149, %s150
    %p161 = scmp.eq.s32.totalorder %s37, 0
    %p162 = por %p160, %p161
    %p163 = scmp.ne.s32.totalorder %s149, %s150
    %p164 = scmp.eq.s32.totalorder %s38, 1
    %p165 = por %p163, %p164
    %p167 = scmp.ne.s32.totalorder %s150, %s166
    %p168 = scmp.eq.s32.totalorder %s38, 0
    %p169 = por %p167, %p168
    %s170 = ssub.s32 %s32, %s39
    %p171 = scmp.eq.s32.totalorder %s170, 0
    %s173 = sadd.s32 %s172, 1
    %s174 = scalar_select %p171, %s172, %s173
    %p177 = pneg %p171
    %p178 = scmp.eq.s32.totalorder %s32, 1
    %p179 = por %p177, %p178
    %p180 = scmp.ne.s32.totalorder %s172, %s175
    %p181 = scmp.eq.s32.totalorder %s32, 0
    %p182 = por %p180, %p181
    %p183 = scmp.ne.s32.totalorder %s172, %s175
    %p184 = scmp.eq.s32.totalorder %s37, 1
    %p185 = por %p183, %p184
    %p186 = scmp.ne.s32.totalorder %s175, %s176
    %p187 = scmp.eq.s32.totalorder %s37, 0
    %p188 = por %p186, %p187
    %p189 = scmp.ne.s32.totalorder %s175, %s176
    %p190 = scmp.eq.s32.totalorder %s38, 1
    %p191 = por %p189, %p190
    %p193 = scmp.ne.s32.totalorder %s176, %s192
    %p194 = scmp.eq.s32.totalorder %s38, 0
    %p195 = por %p193, %p194
    %s197 = sadd.s32 %s196, 1
    %p200 = scmp.eq.s32.totalorder %s32, 1
    %p201 = scmp.ne.s32.totalorder %s196, %s198
    %p202 = scmp.eq.s32.totalorder %s32, 0
    %p203 = por %p201, %p202
    %p204 = scmp.ne.s32.totalorder %s196, %s198
    %p205 = scmp.eq.s32.totalorder %s37, 1
    %p206 = por %p204, %p205
    %p207 = scmp.ne.s32.totalorder %s198, %s199
    %p208 = scmp.eq.s32.totalorder %s37, 0
    %p209 = por %p207, %p208
    %p210 = scmp.ne.s32.totalorder %s198, %s199
    %p211 = scmp.eq.s32.totalorder %s38, 1
    %p212 = por %p210, %p211
    %p214 = scmp.ne.s32.totalorder %s199, %s213
    %p215 = scmp.eq.s32.totalorder %s38, 0
    %p216 = por %p214, %p215
    %s218 = sadd.s32 %s217, 1
    %p221 = scmp.eq.s32.totalorder %s32, 1
    %p222 = scmp.ne.s32.totalorder %s217, %s219
    %p223 = scmp.eq.s32.totalorder %s32, 0
    %p224 = por %p222, %p223
    %p225 = scmp.ne.s32.totalorder %s217, %s219
    %p226 = scmp.eq.s32.totalorder %s37, 1
    %p227 = por %p225, %p226
    %p228 = scmp.ne.s32.totalorder %s219, %s220
    %p229 = scmp.eq.s32.totalorder %s37, 0
    %p230 = por %p228, %p229
    %p231 = scmp.ne.s32.totalorder %s219, %s220
    %p232 = scmp.eq.s32.totalorder %s38, 1
    %p233 = por %p231, %p232
    %p235 = scmp.ne.s32.totalorder %s220, %s234
    %p236 = scmp.eq.s32.totalorder %s38, 0
    %p237 = por %p235, %p236
    %s239 = sadd.s32 %s238, 1
    %p242 = scmp.eq.s32.totalorder %s32, 1
    %p243 = scmp.ne.s32.totalorder %s238, %s240
    %p244 = scmp.eq.s32.totalorder %s32, 0
    %p245 = por %p243, %p244
    %p246 = scmp.ne.s32.totalorder %s238, %s240
    %p247 = scmp.eq.s32.totalorder %s37, 1
    %p248 = por %p246, %p247
    %p249 = scmp.ne.s32.totalorder %s240, %s241
    %p250 = scmp.eq.s32.totalorder %s37, 0
    %p251 = por %p249, %p250
    %p252 = scmp.ne.s32.totalorder %s240, %s241
    %p253 = scmp.eq.s32.totalorder %s38, 1
    %p254 = por %p252, %p253
    %p256 = scmp.ne.s32.totalorder %s241, %s255
    %p257 = scmp.eq.s32.totalorder %s38, 0
    %p258 = por %p256, %p257
    %s260 = sadd.s32 %s259, 1
    %p263 = scmp.eq.s32.totalorder %s32, 1
    %p264 = scmp.ne.s32.totalorder %s259, %s261
    %p265 = scmp.eq.s32.totalorder %s32, 0
    %p266 = por %p264, %p265
    %p267 = scmp.ne.s32.totalorder %s259, %s261
    %p268 = scmp.eq.s32.totalorder %s37, 1
    %p269 = por %p267, %p268
    %p270 = scmp.ne.s32.totalorder %s261, %s262
    %p271 = scmp.eq.s32.totalorder %s37, 0
    %p272 = por %p270, %p271
    %p273 = scmp.ne.s32.totalorder %s261, %s262
    %p274 = scmp.eq.s32.totalorder %s38, 1
    %p275 = por %p273, %p274
    %p277 = scmp.ne.s32.totalorder %s262, %s276
    %p278 = scmp.eq.s32.totalorder %s38, 0
    %p279 = por %p277, %p278
    %s281 = sadd.s32 %s280, 1
    %p284 = scmp.eq.s32.totalorder %s32, 1
    %p285 = scmp.ne.s32.totalorder %s280, %s282
    %p286 = scmp.eq.s32.totalorder %s32, 0
    %p287 = por %p285, %p286
    %p288 = scmp.ne.s32.totalorder %s280, %s282
    %p289 = scmp.eq.s32.totalorder %s37, 1
    %p290 = por %p288, %p289
    %p291 = scmp.ne.s32.totalorder %s282, %s283
    %p292 = scmp.eq.s32.totalorder %s37, 0
    %p293 = por %p291, %p292
    %p294 = scmp.ne.s32.totalorder %s282, %s283
    %p295 = scmp.eq.s32.totalorder %s38, 1
    %p296 = por %p294, %p295
    %p298 = scmp.ne.s32.totalorder %s283, %s297
    %p299 = scmp.eq.s32.totalorder %s38, 0
    %p300 = por %p298, %p299
    %s302 = sadd.s32 %s301, 1
    %p305 = scmp.eq.s32.totalorder %s32, 1
    %p306 = scmp.ne.s32.totalorder %s301, %s303
    %p307 = scmp.eq.s32.totalorder %s32, 0
    %p308 = por %p306, %p307
    %p309 = scmp.ne.s32.totalorder %s301, %s303
    %p310 = scmp.eq.s32.totalorder %s37, 1
    %p311 = por %p309, %p310
    %p312 = scmp.ne.s32.totalorder %s303, %s304
    %p313 = scmp.eq.s32.totalorder %s37, 0
    %p314 = por %p312, %p313
    %p315 = scmp.ne.s32.totalorder %s303, %s304
    %p316 = scmp.eq.s32.totalorder %s38, 1
    %p317 = por %p315, %p316
    %p319 = scmp.ne.s32.totalorder %s304, %s318
    %p320 = scmp.eq.s32.totalorder %s38, 0
    %p321 = por %p319, %p320
    %s323 = sadd.s32 %s322, 1
    %p326 = scmp.eq.s32.totalorder %s32, 1
    %p327 = scmp.ne.s32.totalorder %s322, %s324
    %p328 = scmp.eq.s32.totalorder %s32, 0
    %p329 = por %p327, %p328
    %p330 = scmp.ne.s32.totalorder %s322, %s324
    %p331 = scmp.eq.s32.totalorder %s37, 1
    %p332 = por %p330, %p331
    %p333 = scmp.ne.s32.totalorder %s324, %s325
    %p334 = scmp.eq.s32.totalorder %s37, 0
    %p335 = por %p333, %p334
    %p336 = scmp.ne.s32.totalorder %s324, %s325
    %p337 = scmp.eq.s32.totalorder %s38, 1
    %p338 = por %p336, %p337
    %p340 = scmp.ne.s32.totalorder %s325, %s339
    %p341 = scmp.eq.s32.totalorder %s38, 0
    %p342 = por %p340, %p341
    %s344 = sadd.s32 %s343, 1
    %p347 = scmp.eq.s32.totalorder %s32, 1
    %p348 = scmp.ne.s32.totalorder %s343, %s345
    %p349 = scmp.eq.s32.totalorder %s32, 0
    %p350 = por %p348, %p349
    %p351 = scmp.ne.s32.totalorder %s343, %s345
    %p352 = scmp.eq.s32.totalorder %s37, 1
    %p353 = por %p351, %p352
    %p354 = scmp.ne.s32.totalorder %s345, %s346
    %p355 = scmp.eq.s32.totalorder %s37, 0
    %p356 = por %p354, %p355
    %p357 = scmp.ne.s32.totalorder %s345, %s346
    %p358 = scmp.eq.s32.totalorder %s38, 1
    %p359 = por %p357, %p358
    %p361 = scmp.ne.s32.totalorder %s346, %s360
    %p362 = scmp.eq.s32.totalorder %s38, 0
    %p363 = por %p361, %p362
    %s365 = sadd.s32 %s364, 1
    %p368 = scmp.eq.s32.totalorder %s32, 1
    %p369 = scmp.ne.s32.totalorder %s364, %s366
    %p370 = scmp.eq.s32.totalorder %s32, 0
    %p371 = por %p369, %p370
    %p372 = scmp.ne.s32.totalorder %s364, %s366
    %p373 = scmp.eq.s32.totalorder %s37, 1
    %p374 = por %p372, %p373
    %p375 = scmp.ne.s32.totalorder %s366, %s367
    %p376 = scmp.eq.s32.totalorder %s37, 0
    %p377 = por %p375, %p376
    %p378 = scmp.ne.s32.totalorder %s366, %s367
    %p379 = scmp.eq.s32.totalorder %s38, 1
    %p380 = por %p378, %p379
    %p382 = scmp.ne.s32.totalorder %s367, %s381
    %p383 = scmp.eq.s32.totalorder %s38, 0
    %p384 = por %p382, %p383
    %s386 = sadd.s32 %s385, 1
    %p389 = scmp.eq.s32.totalorder %s32, 1
    %p390 = scmp.ne.s32.totalorder %s385, %s387
    %p391 = scmp.eq.s32.totalorder %s32, 0
    %p392 = por %p390, %p391
    %p393 = scmp.ne.s32.totalorder %s385, %s387
    %p394 = scmp.eq.s32.totalorder %s37, 1
    %p395 = por %p393, %p394
    %p396 = scmp.ne.s32.totalorder %s387, %s388
    %p397 = scmp.eq.s32.totalorder %s37, 0
    %p398 = por %p396, %p397
    %p399 = scmp.ne.s32.totalorder %s387, %s388
    %p400 = scmp.eq.s32.totalorder %s38, 1
    %p401 = por %p399, %p400
    %p403 = scmp.ne.s32.totalorder %s388, %s402
    %p404 = scmp.eq.s32.totalorder %s38, 0
    %p405 = por %p403, %p404
    %s407 = sadd.s32 %s406, 1
    %p410 = scmp.eq.s32.totalorder %s32, 1
    %p411 = scmp.ne.s32.totalorder %s406, %s408
    %p412 = scmp.eq.s32.totalorder %s32, 0
    %p413 = por %p411, %p412
    %p414 = scmp.ne.s32.totalorder %s406, %s408
    %p415 = scmp.eq.s32.totalorder %s37, 1
    %p416 = por %p414, %p415
    %p417 = scmp.ne.s32.totalorder %s408, %s409
    %p418 = scmp.eq.s32.totalorder %s37, 0
    %p419 = por %p417, %p418
    %p420 = scmp.ne.s32.totalorder %s408, %s409
    %p421 = scmp.eq.s32.totalorder %s38, 1
    %p422 = por %p420, %p421
    %p424 = scmp.ne.s32.totalorder %s409, %s423
    %p425 = scmp.eq.s32.totalorder %s38, 0
    %p426 = por %p424, %p425
    %s428 = sadd.s32 %s427, 1
    %p431 = scmp.eq.s32.totalorder %s32, 1
    %p432 = scmp.ne.s32.totalorder %s427, %s429
    %p433 = scmp.eq.s32.totalorder %s32, 0
    %p434 = por %p432, %p433
    %p435 = scmp.ne.s32.totalorder %s427, %s429
    %p436 = scmp.eq.s32.totalorder %s37, 1
    %p437 = por %p435, %p436
    %p438 = scmp.ne.s32.totalorder %s429, %s430
    %p439 = scmp.eq.s32.totalorder %s37, 0
    %p440 = por %p438, %p439
    %p441 = scmp.ne.s32.totalorder %s429, %s430
    %p442 = scmp.eq.s32.totalorder %s38, 1
    %p443 = por %p441, %p442
    %p445 = scmp.ne.s32.totalorder %s430, %s444
    %p446 = scmp.eq.s32.totalorder %s38, 0
    %p447 = por %p445, %p446
    %s449 = sadd.s32 %s448, 1
    %p452 = scmp.eq.s32.totalorder %s32, 1
    %p453 = scmp.ne.s32.totalorder %s448, %s450
    %p454 = scmp.eq.s32.totalorder %s32, 0
    %p455 = por %p453, %p454
    %p456 = scmp.ne.s32.totalorder %s448, %s450
    %p457 = scmp.eq.s32.totalorder %s37, 1
    %p458 = por %p456, %p457
    %p459 = scmp.ne.s32.totalorder %s450, %s451
    %p460 = scmp.eq.s32.totalorder %s37, 0
    %p461 = por %p459, %p460
    %p462 = scmp.ne.s32.totalorder %s450, %s451
    %p463 = scmp.eq.s32.totalorder %s38, 1
    %p464 = por %p462, %p463
    %p466 = scmp.ne.s32.totalorder %s451, %s465
    %p467 = scmp.eq.s32.totalorder %s38, 0
    %p468 = por %p466, %p467
    %s470 = sadd.s32 %s469, 1
    %p473 = scmp.eq.s32.totalorder %s32, 1
    %p474 = scmp.ne.s32.totalorder %s469, %s471
    %p475 = scmp.eq.s32.totalorder %s32, 0
    %p476 = por %p474, %p475
    %p477 = scmp.ne.s32.totalorder %s469, %s471
    %p478 = scmp.eq.s32.totalorder %s37, 1
    %p479 = por %p477, %p478
    %p480 = scmp.ne.s32.totalorder %s471, %s472
    %p481 = scmp.eq.s32.totalorder %s37, 0
    %p482 = por %p480, %p481
    %p483 = scmp.ne.s32.totalorder %s471, %s472
    %p484 = scmp.eq.s32.totalorder %s38, 1
    %p485 = por %p483, %p484
    %p487 = scmp.ne.s32.totalorder %s472, %s486
    %p488 = scmp.eq.s32.totalorder %s38, 0
    %p489 = por %p487, %p488
    %s491 = sadd.s32 %s490, 1
    %p494 = scmp.eq.s32.totalorder %s32, 1
    %p495 = scmp.ne.s32.totalorder %s490, %s492
    %p496 = scmp.eq.s32.totalorder %s32, 0
    %p497 = por %p495, %p496
    %p498 = scmp.ne.s32.totalorder %s490, %s492
    %p499 = scmp.eq.s32.totalorder %s37, 1
    %p500 = por %p498, %p499
    %p501 = scmp.ne.s32.totalorder %s492, %s493
    %p502 = scmp.eq.s32.totalorder %s37, 0
    %p503 = por %p501, %p502
    %p504 = scmp.ne.s32.totalorder %s492, %s493
    %p505 = scmp.eq.s32.totalorder %s38, 1
    %p506 = por %p504, %p505
    %p508 = scmp.ne.s32.totalorder %s493, %s507
    %p509 = scmp.eq.s32.totalorder %s38, 0
    %p510 = por %p508, %p509
    %s512 = sadd.s32 %s511, 1
    %p515 = scmp.eq.s32.totalorder %s32, 1
    %p516 = scmp.ne.s32.totalorder %s511, %s513
    %p517 = scmp.eq.s32.totalorder %s32, 0
    %p518 = por %p516, %p517
    %p519 = scmp.ne.s32.totalorder %s511, %s513
    %p520 = scmp.eq.s32.totalorder %s37, 1
    %p521 = por %p519, %p520
    %p522 = scmp.ne.s32.totalorder %s513, %s514
    %p523 = scmp.eq.s32.totalorder %s37, 0
    %p524 = por %p522, %p523
    %p525 = scmp.ne.s32.totalorder %s513, %s514
    %p526 = scmp.eq.s32.totalorder %s38, 1
    %p527 = por %p525, %p526
    %p529 = scmp.ne.s32.totalorder %s514, %s528
    %p530 = scmp.eq.s32.totalorder %s38, 0
    %p531 = por %p529, %p530
    %s533 = sadd.s32 %s532, 1
    %p536 = scmp.eq.s32.totalorder %s32, 1
    %p537 = scmp.ne.s32.totalorder %s532, %s534
    %p538 = scmp.eq.s32.totalorder %s32, 0
    %p539 = por %p537, %p538
    %p540 = scmp.ne.s32.totalorder %s532, %s534
    %p541 = scmp.eq.s32.totalorder %s37, 1
    %p542 = por %p540, %p541
    %p543 = scmp.ne.s32.totalorder %s534, %s535
    %p544 = scmp.eq.s32.totalorder %s37, 0
    %p545 = por %p543, %p544
    %p546 = scmp.ne.s32.totalorder %s534, %s535
    %p547 = scmp.eq.s32.totalorder %s38, 1
    %p548 = por %p546, %p547
    %p550 = scmp.ne.s32.totalorder %s535, %s549
    %p551 = scmp.eq.s32.totalorder %s38, 0
    %p552 = por %p550, %p551
    %s554 = sadd.s32 %s553, 1
    %p557 = scmp.eq.s32.totalorder %s32, 1
    %p558 = scmp.ne.s32.totalorder %s553, %s555
    %p559 = scmp.eq.s32.totalorder %s32, 0
    %p560 = por %p558, %p559
    %p561 = scmp.ne.s32.totalorder %s553, %s555
    %p562 = scmp.eq.s32.totalorder %s37, 1
    %p563 = por %p561, %p562
    %p564 = scmp.ne.s32.totalorder %s555, %s556
    %p565 = scmp.eq.s32.totalorder %s37, 0
    %p566 = por %p564, %p565
    %p567 = scmp.ne.s32.totalorder %s555, %s556
    %p568 = scmp.eq.s32.totalorder %s38, 1
    %p569 = por %p567, %p568
    %p571 = scmp.ne.s32.totalorder %s556, %s570
    %p572 = scmp.eq.s32.totalorder %s38, 0
    %p573 = por %p571, %p572
    %s575 = sadd.s32 %s574, 1
    %p578 = scmp.eq.s32.totalorder %s32, 1
    %p579 = scmp.ne.s32.totalorder %s574, %s576
    %p580 = scmp.eq.s32.totalorder %s32, 0
    %p581 = por %p579, %p580
    %p582 = scmp.ne.s32.totalorder %s574, %s576
    %p583 = scmp.eq.s32.totalorder %s37, 1
    %p584 = por %p582, %p583
    %p585 = scmp.ne.s32.totalorder %s576, %s577
    %p586 = scmp.eq.s32.totalorder %s37, 0
    %p587 = por %p585, %p586
    %p588 = scmp.ne.s32.totalorder %s576, %s577
    %p589 = scmp.eq.s32.totalorder %s38, 1
    %p590 = por %p588, %p589
    %p592 = scmp.ne.s32.totalorder %s577, %s591
    %p593 = scmp.eq.s32.totalorder %s38, 0
    %p594 = por %p592, %p593
    %s596 = sadd.s32 %s595, 1
    %p599 = scmp.eq.s32.totalorder %s32, 1
    %p600 = scmp.ne.s32.totalorder %s595, %s597
    %p601 = scmp.eq.s32.totalorder %s32, 0
    %p602 = por %p600, %p601
    %p603 = scmp.ne.s32.totalorder %s595, %s597
    %p604 = scmp.eq.s32.totalorder %s37, 1
    %p605 = por %p603, %p604
    %p606 = scmp.ne.s32.totalorder %s597, %s598
    %p607 = scmp.eq.s32.totalorder %s37, 0
    %p608 = por %p606, %p607
    %p609 = scmp.ne.s32.totalorder %s597, %s598
    %p610 = scmp.eq.s32.totalorder %s38, 1
    %p611 = por %p609, %p610
    %p613 = scmp.ne.s32.totalorder %s598, %s612
    %p614 = scmp.eq.s32.totalorder %s38, 0
    %p615 = por %p613, %p614
    %s616 = ssub.s32 %s32, %s39
    %p617 = scmp.eq.s32.totalorder %s616, 0
    %s619 = sadd.s32 %s618, 1
    %s620 = scalar_select %p617, %s618, %s619
    %p623 = pneg %p617
    %p624 = scmp.eq.s32.totalorder %s32, 1
    %p625 = por %p623, %p624
    %p626 = scmp.ne.s32.totalorder %s618, %s621
    %p627 = scmp.eq.s32.totalorder %s32, 0
    %p628 = por %p626, %p627
    %p629 = scmp.ne.s32.totalorder %s618, %s621
    %p630 = scmp.eq.s32.totalorder %s37, 1
    %p631 = por %p629, %p630
    %p632 = scmp.ne.s32.totalorder %s621, %s622
    %p633 = scmp.eq.s32.totalorder %s37, 0
    %p634 = por %p632, %p633
    %p635 = scmp.ne.s32.totalorder %s621, %s622
    %p636 = scmp.eq.s32.totalorder %s38, 1
    %p637 = por %p635, %p636
    %p639 = scmp.ne.s32.totalorder %s622, %s638
    %p640 = scmp.eq.s32.totalorder %s38, 0
    %p641 = por %p639, %p640
    %p642 = scmp.le.s32.totalorder 1, %s32
    %p643 = scmp.lt.s32.totalorder %s32, 3
    %p644 = pnand %p642, %p643
    %p645 = pneg %p644
    // Predicated region
    $region9: #{tpu_custom_call.1} parent=5 // pred_check
      _
    $region10: #{tpu_custom_call.1} parent=5 // pred_check_branch
      %647 = sbr.rel (%p644) target = $region12
    $region11: #{tpu_custom_call.1} parent=5 // pred_region
      %s648 = ssub.s32 %s32, 1
      // Predicated region
      $region13: #{tpu_custom_call.1} parent=11 // pred_check
        %p649 = pneg %p209
      $region14: #{tpu_custom_call.1} parent=11 // pred_check_branch
        %651 = sbr.rel (%p649) target = $region16
      $region15: #{tpu_custom_call.1} parent=11 // pred_region
        _
      $region16: #{tpu_custom_call.1} parent=11 // pred_fallthru
        _
      // Predicated region
      $region17: #{tpu_custom_call.1} parent=11 // pred_check
        %p652 = pneg %p230
      $region18: #{tpu_custom_call.1} parent=11 // pred_check_branch
        %654 = sbr.rel (%p652) target = $region20
      $region19: #{tpu_custom_call.1} parent=11 // pred_region
        _
      $region20: #{tpu_custom_call.1} parent=11 // pred_fallthru
        _
      // Predicated region
      $region21: #{tpu_custom_call.1} parent=11 // pred_check
        %p655 = pneg %p251
      $region22: #{tpu_custom_call.1} parent=11 // pred_check_branch
        %657 = sbr.rel (%p655) target = $region24
      $region23: #{tpu_custom_call.1} parent=11 // pred_region
        _
      $region24: #{tpu_custom_call.1} parent=11 // pred_fallthru
        _
      // Predicated region
      $region25: #{tpu_custom_call.1} parent=11 // pred_check
        %p658 = pneg %p272
      $region26: #{tpu_custom_call.1} parent=11 // pred_check_branch
        %660 = sbr.rel (%p658) target = $region28
      $region27: #{tpu_custom_call.1} parent=11 // pred_region
        _
      $region28: #{tpu_custom_call.1} parent=11 // pred_fallthru
        _
      // Predicated region
      $region29: #{tpu_custom_call.1} parent=11 // pred_check
        %p661 = pneg %p293
      $region30: #{tpu_custom_call.1} parent=11 // pred_check_branch
        %663 = sbr.rel (%p661) target = $region32
      $region31: #{tpu_custom_call.1} parent=11 // pred_region
        _
      $region32: #{tpu_custom_call.1} parent=11 // pred_fallthru
        _
      // Predicated region
      $region33: #{tpu_custom_call.1} parent=11 // pred_check
        %p664 = pneg %p314
      $region34: #{tpu_custom_call.1} parent=11 // pred_check_branch
        %666 = sbr.rel (%p664) target = $region36
      $region35: #{tpu_custom_call.1} parent=11 // pred_region
        _
      $region36: #{tpu_custom_call.1} parent=11 // pred_fallthru
        _
      // Predicated region
      $region37: #{tpu_custom_call.1} parent=11 // pred_check
        %p667 = pneg %p335
      $region38: #{tpu_custom_call.1} parent=11 // pred_check_branch
        %669 = sbr.rel (%p667) target = $region40
      $region39: #{tpu_custom_call.1} parent=11 // pred_region
        _
      $region40: #{tpu_custom_call.1} parent=11 // pred_fallthru
        _
      // Predicated region
      $region41: #{tpu_custom_call.1} parent=11 // pred_check
        %p670 = pneg %p356
      $region42: #{tpu_custom_call.1} parent=11 // pred_check_branch
        %672 = sbr.rel (%p670) target = $region44
      $region43: #{tpu_custom_call.1} parent=11 // pred_region
        _
      $region44: #{tpu_custom_call.1} parent=11 // pred_fallthru
        _
      // Predicated region
      $region45: #{tpu_custom_call.1} parent=11 // pred_check
        %p673 = pneg %p377
      $region46: #{tpu_custom_call.1} parent=11 // pred_check_branch
        %675 = sbr.rel (%p673) target = $region48
      $region47: #{tpu_custom_call.1} parent=11 // pred_region
        _
      $region48: #{tpu_custom_call.1} parent=11 // pred_fallthru
        _
      // Predicated region
      $region49: #{tpu_custom_call.1} parent=11 // pred_check
        %p676 = pneg %p398
      $region50: #{tpu_custom_call.1} parent=11 // pred_check_branch
        %678 = sbr.rel (%p676) target = $region52
      $region51: #{tpu_custom_call.1} parent=11 // pred_region
        _
      $region52: #{tpu_custom_call.1} parent=11 // pred_fallthru
        _
      // Predicated region
      $region53: #{tpu_custom_call.1} parent=11 // pred_check
        %p679 = pneg %p419
      $region54: #{tpu_custom_call.1} parent=11 // pred_check_branch
        %681 = sbr.rel (%p679) target = $region56
      $region55: #{tpu_custom_call.1} parent=11 // pred_region
        _
      $region56: #{tpu_custom_call.1} parent=11 // pred_fallthru
        _
      // Predicated region
      $region57: #{tpu_custom_call.1} parent=11 // pred_check
        %p682 = pneg %p440
      $region58: #{tpu_custom_call.1} parent=11 // pred_check_branch
        %684 = sbr.rel (%p682) target = $region60
      $region59: #{tpu_custom_call.1} parent=11 // pred_region
        _
      $region60: #{tpu_custom_call.1} parent=11 // pred_fallthru
        _
      // Predicated region
      $region61: #{tpu_custom_call.1} parent=11 // pred_check
        %p685 = pneg %p461
      $region62: #{tpu_custom_call.1} parent=11 // pred_check_branch
        %687 = sbr.rel (%p685) target = $region64
      $region63: #{tpu_custom_call.1} parent=11 // pred_region
        _
      $region64: #{tpu_custom_call.1} parent=11 // pred_fallthru
        _
      // Predicated region
      $region65: #{tpu_custom_call.1} parent=11 // pred_check
        %p688 = pneg %p482
      $region66: #{tpu_custom_call.1} parent=11 // pred_check_branch
        %690 = sbr.rel (%p688) target = $region68
      $region67: #{tpu_custom_call.1} parent=11 // pred_region
        _
      $region68: #{tpu_custom_call.1} parent=11 // pred_fallthru
        _
      // Predicated region
      $region69: #{tpu_custom_call.1} parent=11 // pred_check
        %p691 = pneg %p503
      $region70: #{tpu_custom_call.1} parent=11 // pred_check_branch
        %693 = sbr.rel (%p691) target = $region72
      $region71: #{tpu_custom_call.1} parent=11 // pred_region
        _
      $region72: #{tpu_custom_call.1} parent=11 // pred_fallthru
        _
      // Predicated region
      $region73: #{tpu_custom_call.1} parent=11 // pred_check
        %p694 = pneg %p524
      $region74: #{tpu_custom_call.1} parent=11 // pred_check_branch
        %696 = sbr.rel (%p694) target = $region76
      $region75: #{tpu_custom_call.1} parent=11 // pred_region
        _
      $region76: #{tpu_custom_call.1} parent=11 // pred_fallthru
        _
      // Predicated region
      $region77: #{tpu_custom_call.1} parent=11 // pred_check
        %p697 = pneg %p545
      $region78: #{tpu_custom_call.1} parent=11 // pred_check_branch
        %699 = sbr.rel (%p697) target = $region80
      $region79: #{tpu_custom_call.1} parent=11 // pred_region
        _
      $region80: #{tpu_custom_call.1} parent=11 // pred_fallthru
        _
      // Predicated region
      $region81: #{tpu_custom_call.1} parent=11 // pred_check
        %p700 = pneg %p566
      $region82: #{tpu_custom_call.1} parent=11 // pred_check_branch
        %702 = sbr.rel (%p700) target = $region84
      $region83: #{tpu_custom_call.1} parent=11 // pred_region
        _
      $region84: #{tpu_custom_call.1} parent=11 // pred_fallthru
        _
      // Predicated region
      $region85: #{tpu_custom_call.1} parent=11 // pred_check
        %p703 = pneg %p587
      $region86: #{tpu_custom_call.1} parent=11 // pred_check_branch
        %705 = sbr.rel (%p703) target = $region88
      $region87: #{tpu_custom_call.1} parent=11 // pred_region
        _
      $region88: #{tpu_custom_call.1} parent=11 // pred_fallthru
        _
      // Predicated region
      $region89: #{tpu_custom_call.1} parent=11 // pred_check
        %p706 = pneg %p608
      $region90: #{tpu_custom_call.1} parent=11 // pred_check_branch
        %708 = sbr.rel (%p706) target = $region92
      $region91: #{tpu_custom_call.1} parent=11 // pred_region
        _
      $region92: #{tpu_custom_call.1} parent=11 // pred_fallthru
        _
    $region12: #{tpu_custom_call.1} parent=5 // pred_fallthru
      _
    %p709 = scmp.lt.s32.totalorder %s32, 2
    // Predicated region
    $region93: #{tpu_custom_call.1} parent=5 // pred_check
      %p710 = pneg %p709
    $region94: #{tpu_custom_call.1} parent=5 // pred_check_branch
      %712 = sbr.rel (%p710) target = $region96
    $region95: #{tpu_custom_call.1} parent=5 // pred_region
      // Predicated region
      $region97: #{tpu_custom_call.1} parent=95 // pred_check
        %p713 = pneg %p52
      $region98: #{tpu_custom_call.1} parent=95 // pred_check_branch
        %715 = sbr.rel (%p713) target = $region100
      $region99: #{tpu_custom_call.1} parent=95 // pred_region
        %p716 = scmp.lt.s32.totalorder %s32, 1
        %s717 = scalar_select %p716, %s32, 1
        %s718 = smul.addr %s717, 2
        %s719 = smul.addr %s718, 8
        %s720 = scalar_lea.vmem %s0, %s719
      $region100: #{tpu_custom_call.1} parent=95 // pred_fallthru
        _
      // Predicated region
      $region101: #{tpu_custom_call.1} parent=95 // pred_check
        %p721 = pneg %p78
      $region102: #{tpu_custom_call.1} parent=95 // pred_check_branch
        %723 = sbr.rel (%p721) target = $region104
      $region103: #{tpu_custom_call.1} parent=95 // pred_region
        %p724 = scmp.lt.s32.totalorder %s32, 1
        %s725 = scalar_select %p724, %s32, 1
        %s726 = scalar_lea.vmem %s1, %s725
      $region104: #{tpu_custom_call.1} parent=95 // pred_fallthru
        _
      // Predicated region
      $region105: #{tpu_custom_call.1} parent=95 // pred_check
        %p727 = pneg %p104
      $region106: #{tpu_custom_call.1} parent=95 // pred_check_branch
        %729 = sbr.rel (%p727) target = $region108
      $region107: #{tpu_custom_call.1} parent=95 // pred_region
        %p730 = scmp.lt.s32.totalorder %s32, 1
        %s731 = scalar_select %p730, %s32, 1
        %s732 = smul.addr %s731, 4
        %s733 = scalar_lea.vmem %s2, %s732
      $region108: #{tpu_custom_call.1} parent=95 // pred_fallthru
        _
      // Predicated region
      $region109: #{tpu_custom_call.1} parent=95 // pred_check
        %p734 = pneg %p130
      $region110: #{tpu_custom_call.1} parent=95 // pred_check_branch
        %736 = sbr.rel (%p734) target = $region112
      $region111: #{tpu_custom_call.1} parent=95 // pred_region
        %p737 = scmp.lt.s32.totalorder %s32, 1
        %s738 = scalar_select %p737, %s32, 1
        %s739 = smul.addr %s738, 4
        %s740 = scalar_lea.vmem %s3, %s739
      $region112: #{tpu_custom_call.1} parent=95 // pred_fallthru
        _
      // Predicated region
      $region113: #{tpu_custom_call.1} parent=95 // pred_check
        %p741 = pneg %p156
      $region114: #{tpu_custom_call.1} parent=95 // pred_check_branch
        %743 = sbr.rel (%p741) target = $region116
      $region115: #{tpu_custom_call.1} parent=95 // pred_region
        %p744 = scmp.lt.s32.totalorder %s32, 1
        %s745 = scalar_select %p744, %s32, 1
        %s746 = scalar_lea.vmem %s4, %s745
      $region116: #{tpu_custom_call.1} parent=95 // pred_fallthru
        _
      // Predicated region
      $region117: #{tpu_custom_call.1} parent=95 // pred_check
        %p747 = pneg %p182
      $region118: #{tpu_custom_call.1} parent=95 // pred_check_branch
        %749 = sbr.rel (%p747) target = $region120
      $region119: #{tpu_custom_call.1} parent=95 // pred_region
        %p750 = scmp.lt.s32.totalorder %s32, 1
        %s751 = scalar_select %p750, %s32, 1
        %s752 = smul.addr %s751, 4
        %s753 = scalar_lea.vmem %s5, %s752
      $region120: #{tpu_custom_call.1} parent=95 // pred_fallthru
        _
    $region96: #{tpu_custom_call.1} parent=5 // pred_fallthru
      _
    %p754 = scmp.le.s32.totalorder 1, %s32
    %p755 = scmp.lt.s32.totalorder %s32, 3
    %p756 = pnand %p754, %p755
    %p757 = pneg %p756
    // Predicated region
    $region121: #{tpu_custom_call.1} parent=5 // pred_check
      _
    $region122: #{tpu_custom_call.1} parent=5 // pred_check_branch
      %759 = sbr.rel (%p756) target = $region124
    $region123: #{tpu_custom_call.1} parent=5 // pred_region
      %s760 = ssub.s32 %s32, 1
      %p761 = scmp.lt.s32.totalorder %s37, 1
      %s762 = scalar_select %p761, %s37, 1
      %s763 = smul.addr %s762, 2
      %s764 = smul.addr %s763, 8
      %s765 = scalar_lea.vmem %s0, %s764
      %p766 = pneg %p58
      %p767 = pneg %p55
      %p768 = scmp.lt.s32.totalorder %s37, 1
      %s769 = scalar_select %p768, %s37, 1
      %s770 = scalar_lea.vmem %s1, %s769
      %p771 = pneg %p84
      %p772 = pneg %p81
      %p773 = scmp.lt.s32.totalorder %s37, 1
      %s774 = scalar_select %p773, %s37, 1
      %s775 = smul.addr %s774, 4
      %s776 = scalar_lea.vmem %s2, %s775
      %p777 = pneg %p110
      %p778 = pneg %p107
      %p779 = scmp.lt.s32.totalorder %s37, 1
      %s780 = scalar_select %p779, %s37, 1
      %s781 = smul.addr %s780, 4
      %s782 = scalar_lea.vmem %s3, %s781
      %p783 = pneg %p136
      %p784 = pneg %p133
      %p785 = scmp.lt.s32.totalorder %s37, 1
      %s786 = scalar_select %p785, %s37, 1
      %s787 = scalar_lea.vmem %s4, %s786
      %p788 = pneg %p162
      %p789 = pneg %p159
      %p790 = scmp.lt.s32.totalorder %s37, 1
      %s791 = scalar_select %p790, %s37, 1
      %s792 = smul.addr %s791, 4
      %s793 = scalar_lea.vmem %s5, %s792
      %p794 = pneg %p188
      %p795 = pneg %p185
      %p796 = pneg %p209
      %p797 = pneg %p206
      %p798 = pneg %p230
      %p799 = pneg %p227
      %p800 = pneg %p251
      %p801 = pneg %p248
      %p802 = pneg %p272
      %p803 = pneg %p269
      %p804 = pneg %p293
      %p805 = pneg %p290
      %p806 = pneg %p314
      %p807 = pneg %p311
      %p808 = pneg %p335
      %p809 = pneg %p332
      %p810 = pneg %p356
      %p811 = pneg %p353
      %p812 = pneg %p377
      %p813 = pneg %p374
      %p814 = pneg %p398
      %p815 = pneg %p395
      %p816 = pneg %p419
      %p817 = pneg %p416
      %p818 = pneg %p440
      %p819 = pneg %p437
      %p820 = pneg %p461
      %p821 = pneg %p458
      %p822 = pneg %p482
      %p823 = pneg %p479
      %p824 = pneg %p503
      %p825 = pneg %p500
      %p826 = pneg %p524
      %p827 = pneg %p521
      %p828 = pneg %p545
      %p829 = pneg %p542
      %p830 = pneg %p566
      %p831 = pneg %p563
      %p832 = pneg %p587
      %p833 = pneg %p584
      %p834 = pneg %p608
      %p835 = pneg %p605
      %p836 = pneg %p634
      %p837 = pneg %p631
      %p838 = scmp.lt.s32.totalorder %s37, 1
      %s839 = scalar_select %p838, %s37, 1
      %s840 = smul.addr %s839, 4
      %s841 = scalar_lea.vmem %s26, %s840
      %p842 = scmp.lt.s32.totalorder %s37, 1
      %s843 = scalar_select %p842, %s37, 1
      %s844 = smul.addr %s843, 2
      %s845 = smul.addr %s844, 8
      %s846 = scalar_lea.vmem %s0, %s845
      %p847 = scmp.lt.s32.totalorder %s37, 1
      %s848 = scalar_select %p847, %s37, 1
      %s849 = scalar_lea.vmem %s1, %s848
      %p850 = scmp.lt.s32.totalorder %s37, 1
      %s851 = scalar_select %p850, %s37, 1
      %s852 = smul.addr %s851, 4
      %s853 = scalar_lea.vmem %s2, %s852
      %p854 = scmp.lt.s32.totalorder %s37, 1
      %s855 = scalar_select %p854, %s37, 1
      %s856 = smul.addr %s855, 4
      %s857 = scalar_lea.vmem %s3, %s856
      %p858 = scmp.lt.s32.totalorder %s37, 1
      %s859 = scalar_select %p858, %s37, 1
      %s860 = scalar_lea.vmem %s4, %s859
      %p861 = scmp.lt.s32.totalorder %s37, 1
      %s862 = scalar_select %p861, %s37, 1
      %s863 = smul.addr %s862, 4
      %s864 = scalar_lea.vmem %s5, %s863
      %p865 = scmp.lt.s32.totalorder %s37, 1
      %s866 = scalar_select %p865, %s37, 1
      %s867 = smul.addr %s866, 4
      %s868 = scalar_lea.vmem %s26, %s867
      %v869 = vld [vmem:[%s849] sm:$0x1]
      %v870 = vlaneseq
      %v871 = vand.u32 %v870, 127
      %vm872 = vcmp.lt.s32.totalorder %v871, 8
      %vm873 = vcmp.lt.f32.partialorder %v869, 0.5
      %vm874 = vmand %vm872, %vm873
      %v875 = vsel %vm874, 0.0, -inf
      %v876 = vld [vmem:[%s846] sm:$0xff]
      %v877 = vld [vmem:[%s846 + $0x8] sm:$0xf]
      %v878 = vld [vmem:[%s6] sm:$0x7]
      %v879 = vld [vmem:[%s7] sm:$0x1]
      %v881 = vlaneseq
      %v882 = vshrl.u32 %v881, 7
      %v883 = vsub.s32 0, %v882
      %v884 = vrot.slane %v879, %v883
      %vm886 = vcmask 23552
      %v888 = vsel %vm886, %v876, 0
      %v891 = vsel %vm886, %v877, 0
      %vm893 = vcmask 1042432
      %v895 = vsel %vm893, %v878, 0
      %897 = vmatprep.subr.mxu0 0.0
      %898 = vmatpush1.msra.mxu0 %v895
      %899 = vmatprep.subr.mxu0 0.0
      %900 = vmatpush1.msra.mxu0 0.0
      %901 = vmatprep.subr.mxu0 0.0
      %902 = vmatpush1.msra.mxu0 0.0
      %903 = vmatprep.subr.mxu0 0.0
      %904 = vmatpush1.msra.mxu0 0.0
      %905 = vmatprep.subr.mxu0 0.0
      %906 = vmatpush1.msra.mxu0 0.0
      %907 = vmatprep.subr.mxu0 0.0
      %908 = vmatpush1.msra.mxu0 0.0
      %909 = vmatprep.subr.mxu0 0.0
      %910 = vmatpush1.msra.mxu0 0.0
      %911 = vmatprep.subr.mxu0 0.0
      %912 = vmatpush1.msra.mxu0 0.0
      %913 = vmatprep.subr.mxu0 0.0
      %914 = vmatpush1.msra.mxu0 0.0
      %915 = vmatprep.subr.mxu0 0.0
      %916 = vmatpush1.msra.mxu0 0.0
      %917 = vmatprep.subr.mxu0 0.0
      %918 = vmatpush1.msra.mxu0 0.0
      %919 = vmatprep.subr.mxu0 0.0
      %920 = vmatpush1.msra.mxu0 0.0
      %921 = vmatprep.subr.mxu0 0.0
      %922 = vmatpush1.msra.mxu0 0.0
      %923 = vmatprep.subr.mxu0 0.0
      %924 = vmatpush1.msra.mxu0 0.0
      %925 = vmatprep.subr.mxu0 0.0
      %926 = vmatpush1.msra.mxu0 0.0
      %927 = vmatprep.subr.mxu0 0.0
      %928 = vmatpush1.msra.mxu0 0.0
      %929 = vmatprep.subr.mxu0 0.0
      %930 = vmatpush1.msra.mxu0 0.0
      %931 = vmatprep.subr.mxu0 0.0
      %932 = vmatpush1.msra.mxu0 0.0
      %933 = vmatprep.subr.mxu0 0.0
      %934 = vmatpush1.msra.mxu0 0.0
      %935 = vmatprep.subr.mxu0 0.0
      %936 = vmatpush1.msra.mxu0 0.0
      %937 = vmatprep.subr.mxu0 0.0
      %938 = vmatpush1.msra.mxu0 0.0
      %939 = vmatprep.subr.mxu0 0.0
      %940 = vmatpush1.msra.mxu0 0.0
      %941 = vmatprep.subr.mxu0 0.0
      %942 = vmatpush1.msra.mxu0 0.0
      %943 = vmatprep.subr.mxu0 0.0
      %944 = vmatpush1.msra.mxu0 0.0
      %945 = vmatprep.subr.mxu0 0.0
      %946 = vmatpush1.msra.mxu0 0.0
      %947 = vmatprep.subr.mxu0 0.0
      %948 = vmatpush1.msra.mxu0 0.0
      %949 = vmatprep.subr.mxu0 0.0
      %950 = vmatpush1.msra.mxu0 0.0
      %951 = vmatprep.subr.mxu0 0.0
      %952 = vmatpush1.msra.mxu0 0.0
      %953 = vmatprep.subr.mxu0 0.0
      %954 = vmatpush1.msra.mxu0 0.0
      %955 = vmatprep.subr.mxu0 0.0
      %956 = vmatpush1.msra.mxu0 0.0
      %957 = vmatprep.subr.mxu0 0.0
      %958 = vmatpush1.msra.mxu0 0.0
      %959 = vmatprep.subr.mxu0 0.0
      %960 = vmatpush1.msra.mxu0 0.0
      %961 = vmatprep.mubr.f32.mxu0 0.0
      %962 = vmatmul.mubr.f32.gmra.mrb[0].mxu0 %v888
      %v963 = vpop.f32.mrb[0].mxu0
      %v964 = vadd.f32 %v884, %v963
      %v965 = vpop.f32.mrb[0].mxu0
      %966 = vmatprep.mubr.f32.mxu0 0.0
      %967 = vmatmul.mubr.f32.gmra.mrb[0].mxu0 %v891
      %v968 = vpop.f32.mrb[0].mxu0
      %v969 = vadd.f32 %v884, %v968
      %v970 = vpop.f32.mrb[0].mxu0
      %971 = vdwg.mxu0
      %v972 = vmax.f32 %v964, 0.0
      %v973 = vmax.f32 %v969, 0.0
      %v974 = vld [vmem:[%s8] sm:$0xff]
      %v975 = vld [vmem:[%s8 + $0x8] sm:$0xff]
      %v976 = vld [vmem:[%s8 + $0x10] sm:$0xff]
      %v977 = vld [vmem:[%s8 + $0x18] sm:$0xff]
      %v978 = vld [vmem:[%s9] sm:$0x1]
      %v980 = vlaneseq
      %v981 = vshrl.u32 %v980, 7
      %v982 = vsub.s32 0, %v981
      %v983 = vrot.slane %v978, %v982
      %vm985 = vcmask 261120
      %v987 = vsel %vm985, %v972, 0
      %v990 = vsel %vm985, %v973, 0
      %992 = vmatprep.subr.mxu0 0.0
      %993 = vmatpush1.msra.mxu0 %v974
      %994 = vmatprep.subr.mxu0 0.0
      %995 = vmatpush1.msra.mxu0 %v975
      %996 = vmatprep.subr.mxu0 0.0
      %997 = vmatpush1.msra.mxu0 %v976
      %998 = vmatprep.subr.mxu0 0.0
      %999 = vmatpush1.msra.mxu0 %v977
      %1000 = vmatprep.subr.mxu0 0.0
      %1001 = vmatpush1.msra.mxu0 0.0
      %1002 = vmatprep.subr.mxu0 0.0
      %1003 = vmatpush1.msra.mxu0 0.0
      %1004 = vmatprep.subr.mxu0 0.0
      %1005 = vmatpush1.msra.mxu0 0.0
      %1006 = vmatprep.subr.mxu0 0.0
      %1007 = vmatpush1.msra.mxu0 0.0
      %1008 = vmatprep.subr.mxu0 0.0
      %1009 = vmatpush1.msra.mxu0 0.0
      %1010 = vmatprep.subr.mxu0 0.0
      %1011 = vmatpush1.msra.mxu0 0.0
      %1012 = vmatprep.subr.mxu0 0.0
      %1013 = vmatpush1.msra.mxu0 0.0
      %1014 = vmatprep.subr.mxu0 0.0
      %1015 = vmatpush1.msra.mxu0 0.0
      %1016 = vmatprep.subr.mxu0 0.0
      %1017 = vmatpush1.msra.mxu0 0.0
      %1018 = vmatprep.subr.mxu0 0.0
      %1019 = vmatpush1.msra.mxu0 0.0
      %1020 = vmatprep.subr.mxu0 0.0
      %1021 = vmatpush1.msra.mxu0 0.0
      %1022 = vmatprep.subr.mxu0 0.0
      %1023 = vmatpush1.msra.mxu0 0.0
      %1024 = vmatprep.subr.mxu0 0.0
      %1025 = vmatpush1.msra.mxu0 0.0
      %1026 = vmatprep.subr.mxu0 0.0
      %1027 = vmatpush1.msra.mxu0 0.0
      %1028 = vmatprep.subr.mxu0 0.0
      %1029 = vmatpush1.msra.mxu0 0.0
      %1030 = vmatprep.subr.mxu0 0.0
      %1031 = vmatpush1.msra.mxu0 0.0
      %1032 = vmatprep.subr.mxu0 0.0
      %1033 = vmatpush1.msra.mxu0 0.0
      %1034 = vmatprep.subr.mxu0 0.0
      %1035 = vmatpush1.msra.mxu0 0.0
      %1036 = vmatprep.subr.mxu0 0.0
      %1037 = vmatpush1.msra.mxu0 0.0
      %1038 = vmatprep.subr.mxu0 0.0
      %1039 = vmatpush1.msra.mxu0 0.0
      %1040 = vmatprep.subr.mxu0 0.0
      %1041 = vmatpush1.msra.mxu0 0.0
      %1042 = vmatprep.subr.mxu0 0.0
      %1043 = vmatpush1.msra.mxu0 0.0
      %1044 = vmatprep.subr.mxu0 0.0
      %1045 = vmatpush1.msra.mxu0 0.0
      %1046 = vmatprep.subr.mxu0 0.0
      %1047 = vmatpush1.msra.mxu0 0.0
      %1048 = vmatprep.subr.mxu0 0.0
      %1049 = vmatpush1.msra.mxu0 0.0
      %1050 = vmatprep.subr.mxu0 0.0
      %1051 = vmatpush1.msra.mxu0 0.0
      %1052 = vmatprep.subr.mxu0 0.0
      %1053 = vmatpush1.msra.mxu0 0.0
      %1054 = vmatprep.subr.mxu0 0.0
      %1055 = vmatpush1.msra.mxu0 0.0
      %1056 = vmatprep.mubr.f32.mxu0 0.0
      %1057 = vmatmul.mubr.f32.gmra.mrb[0].mxu0 %v987
      %v1058 = vpop.f32.mrb[0].mxu0
      %v1059 = vadd.f32 %v983, %v1058
      %v1060 = vpop.f32.mrb[0].mxu0
      %1061 = vmatprep.mubr.f32.mxu0 0.0
      %1062 = vmatmul.mubr.f32.gmra.mrb[0].mxu0 %v990
      %v1063 = vpop.f32.mrb[0].mxu0
      %v1064 = vadd.f32 %v983, %v1063
      %v1065 = vpop.f32.mrb[0].mxu0
      %1066 = vdwg.mxu0
      %v1067 = vld [vmem:[%s10] sm:$0xff]
      %v1068 = vld [vmem:[%s10 + $0x8] sm:$0xff]
      %v1069 = vld [vmem:[%s10 + $0x10] sm:$0xff]
      %v1070 = vld [vmem:[%s10 + $0x18] sm:$0xff]
      %v1071 = vld [vmem:[%s11] sm:$0x1]
      %v1073 = vlaneseq
      %v1074 = vshrl.u32 %v1073, 7
      %v1075 = vsub.s32 0, %v1074
      %v1076 = vrot.slane %v1071, %v1075
      %v1079 = vsel %vm985, %v1059, 0
      %v1082 = vsel %vm985, %v1064, 0
      %1084 = vmatprep.subr.mxu0 0.0
      %1085 = vmatpush1.msra.mxu0 %v1067
      %1086 = vmatprep.subr.mxu0 0.0
      %1087 = vmatpush1.msra.mxu0 %v1068
      %1088 = vmatprep.subr.mxu0 0.0
      %1089 = vmatpush1.msra.mxu0 %v1069
      %1090 = vmatprep.subr.mxu0 0.0
      %1091 = vmatpush1.msra.mxu0 %v1070
      %1092 = vmatprep.subr.mxu0 0.0
      %1093 = vmatpush1.msra.mxu0 0.0
      %1094 = vmatprep.subr.mxu0 0.0
      %1095 = vmatpush1.msra.mxu0 0.0
      %1096 = vmatprep.subr.mxu0 0.0
      %1097 = vmatpush1.msra.mxu0 0.0
      %1098 = vmatprep.subr.mxu0 0.0
      %1099 = vmatpush1.msra.mxu0 0.0
      %1100 = vmatprep.subr.mxu0 0.0
      %1101 = vmatpush1.msra.mxu0 0.0
      %1102 = vmatprep.subr.mxu0 0.0
      %1103 = vmatpush1.msra.mxu0 0.0
      %1104 = vmatprep.subr.mxu0 0.0
      %1105 = vmatpush1.msra.mxu0 0.0
      %1106 = vmatprep.subr.mxu0 0.0
      %1107 = vmatpush1.msra.mxu0 0.0
      %1108 = vmatprep.subr.mxu0 0.0
      %1109 = vmatpush1.msra.mxu0 0.0
      %1110 = vmatprep.subr.mxu0 0.0
      %1111 = vmatpush1.msra.mxu0 0.0
      %1112 = vmatprep.subr.mxu0 0.0
      %1113 = vmatpush1.msra.mxu0 0.0
      %1114 = vmatprep.subr.mxu0 0.0
      %1115 = vmatpush1.msra.mxu0 0.0
      %1116 = vmatprep.subr.mxu0 0.0
      %1117 = vmatpush1.msra.mxu0 0.0
      %1118 = vmatprep.subr.mxu0 0.0
      %1119 = vmatpush1.msra.mxu0 0.0
      %1120 = vmatprep.subr.mxu0 0.0
      %1121 = vmatpush1.msra.mxu0 0.0
      %1122 = vmatprep.subr.mxu0 0.0
      %1123 = vmatpush1.msra.mxu0 0.0
      %1124 = vmatprep.subr.mxu0 0.0
      %1125 = vmatpush1.msra.mxu0 0.0
      %1126 = vmatprep.subr.mxu0 0.0
      %1127 = vmatpush1.msra.mxu0 0.0
      %1128 = vmatprep.subr.mxu0 0.0
      %1129 = vmatpush1.msra.mxu0 0.0
      %1130 = vmatprep.subr.mxu0 0.0
      %1131 = vmatpush1.msra.mxu0 0.0
      %1132 = vmatprep.subr.mxu0 0.0
      %1133 = vmatpush1.msra.mxu0 0.0
      %1134 = vmatprep.subr.mxu0 0.0
      %1135 = vmatpush1.msra.mxu0 0.0
      %1136 = vmatprep.subr.mxu0 0.0
      %1137 = vmatpush1.msra.mxu0 0.0
      %1138 = vmatprep.subr.mxu0 0.0
      %1139 = vmatpush1.msra.mxu0 0.0
      %1140 = vmatprep.subr.mxu0 0.0
      %1141 = vmatpush1.msra.mxu0 0.0
      %1142 = vmatprep.subr.mxu0 0.0
      %1143 = vmatpush1.msra.mxu0 0.0
      %1144 = vmatprep.subr.mxu0 0.0
      %1145 = vmatpush1.msra.mxu0 0.0
      %1146 = vmatprep.subr.mxu0 0.0
      %1147 = vmatpush1.msra.mxu0 0.0
      %1148 = vmatprep.mubr.f32.mxu0 0.0
      %1149 = vmatmul.mubr.f32.gmra.mrb[0].mxu0 %v1079
      %v1150 = vpop.f32.mrb[0].mxu0
      %v1151 = vadd.f32 %v1076, %v1150
      %v1152 = vpop.f32.mrb[0].mxu0
      %1153 = vmatprep.mubr.f32.mxu0 0.0
      %1154 = vmatmul.mubr.f32.gmra.mrb[0].mxu0 %v1082
      %v1155 = vpop.f32.mrb[0].mxu0
      %v1156 = vadd.f32 %v1076, %v1155
      %v1157 = vpop.f32.mrb[0].mxu0
      %1158 = vdwg.mxu0
      %1161 = vrot.lane.b32.xlu0 %v1151, 96
      %v1162 = vpop.permute.xlu0 %1161
      %1163 = vrot.lane.b32.xlu0 %v1156, 96
      %v1164 = vpop.permute.xlu0 %1163
      %vm1165 = vcmask 64512
      %v1166 = vsel %vm1165, %v1151, 0
      %v1168 = vsel %vm1165, %v1156, 0
      %v1170 = vsel %vm1165, %v1162, 0
      %v1172 = vsel %vm1165, %v1164, 0
      %1174 = vmatprep.subr.mxu0 0.0
      %1175 = vmatpush1.xpose.msra.mxu0 %v1170
      %1176 = vmatprep.subr.mxu0 0.0
      %1177 = vmatpush1.xpose.msra.mxu0 %v1172
      %1178 = vmatprep.subr.mxu0 0.0
      %1179 = vmatpush1.xpose.msra.mxu0 0.0
      %1180 = vmatprep.subr.mxu0 0.0
      %1181 = vmatpush1.xpose.msra.mxu0 0.0
      %1182 = vmatprep.subr.mxu0 0.0
      %1183 = vmatpush1.xpose.msra.mxu0 0.0
      %1184 = vmatprep.subr.mxu0 0.0
      %1185 = vmatpush1.xpose.msra.mxu0 0.0
      %1186 = vmatprep.subr.mxu0 0.0
      %1187 = vmatpush1.xpose.msra.mxu0 0.0
      %1188 = vmatprep.subr.mxu0 0.0
      %1189 = vmatpush1.xpose.msra.mxu0 0.0
      %1190 = vmatprep.subr.mxu0 0.0
      %1191 = vmatpush1.xpose.msra.mxu0 0.0
      %1192 = vmatprep.subr.mxu0 0.0
      %1193 = vmatpush1.xpose.msra.mxu0 0.0
      %1194 = vmatprep.subr.mxu0 0.0
      %1195 = vmatpush1.xpose.msra.mxu0 0.0
      %1196 = vmatprep.subr.mxu0 0.0
      %1197 = vmatpush1.xpose.msra.mxu0 0.0
      %1198 = vmatprep.subr.mxu0 0.0
      %1199 = vmatpush1.xpose.msra.mxu0 0.0
      %1200 = vmatprep.subr.mxu0 0.0
      %1201 = vmatpush1.xpose.msra.mxu0 0.0
      %1202 = vmatprep.subr.mxu0 0.0
      %1203 = vmatpush1.xpose.msra.mxu0 0.0
      %1204 = vmatprep.subr.mxu0 0.0
      %1205 = vmatpush1.xpose.msra.mxu0 0.0
      %1206 = vmatprep.subr.mxu0 0.0
      %1207 = vmatpush1.xpose.msra.mxu0 0.0
      %1208 = vmatprep.subr.mxu0 0.0
      %1209 = vmatpush1.xpose.msra.mxu0 0.0
      %1210 = vmatprep.subr.mxu0 0.0
      %1211 = vmatpush1.xpose.msra.mxu0 0.0
      %1212 = vmatprep.subr.mxu0 0.0
      %1213 = vmatpush1.xpose.msra.mxu0 0.0
      %1214 = vmatprep.subr.mxu0 0.0
      %1215 = vmatpush1.xpose.msra.mxu0 0.0
      %1216 = vmatprep.subr.mxu0 0.0
      %1217 = vmatpush1.xpose.msra.mxu0 0.0
      %1218 = vmatprep.subr.mxu0 0.0
      %1219 = vmatpush1.xpose.msra.mxu0 0.0
      %1220 = vmatprep.subr.mxu0 0.0
      %1221 = vmatpush1.xpose.msra.mxu0 0.0
      %1222 = vmatprep.subr.mxu0 0.0
      %1223 = vmatpush1.xpose.msra.mxu0 0.0
      %1224 = vmatprep.subr.mxu0 0.0
      %1225 = vmatpush1.xpose.msra.mxu0 0.0
      %1226 = vmatprep.subr.mxu0 0.0
      %1227 = vmatpush1.xpose.msra.mxu0 0.0
      %1228 = vmatprep.subr.mxu0 0.0
      %1229 = vmatpush1.xpose.msra.mxu0 0.0
      %1230 = vmatprep.subr.mxu0 0.0
      %1231 = vmatpush1.xpose.msra.mxu0 0.0
      %1232 = vmatprep.subr.mxu0 0.0
      %1233 = vmatpush1.xpose.msra.mxu0 0.0
      %1234 = vmatprep.subr.mxu0 0.0
      %1235 = vmatpush1.xpose.msra.mxu0 0.0
      %1236 = vmatprep.subr.mxu0 0.0
      %1237 = vmatpush1.xpose.msra.mxu0 0.0
      %1238 = vmatprep.mubr.f32.mxu0 0.0
      %1239 = vmatmul.mubr.f32.gmra.mrb[0].mxu0 %v1166
      %v1240 = vpop.f32.mrb[0].mxu0
      %v1241 = vadd.f32 0.0, %v1240
      %v1242 = vpop.f32.mrb[0].mxu0
      %1243 = vmatprep.mubr.f32.mxu0 0.0
      %1244 = vmatmul.mubr.f32.gmra.mrb[0].mxu0 %v1168
      %v1245 = vpop.f32.mrb[0].mxu0
      %v1246 = vadd.f32 0.0, %v1245
      %v1247 = vpop.f32.mrb[0].mxu0
      %1248 = vdwg.mxu0
      %v1249 = vmul.f32 %v1241, 0.35355338
      %v1250 = vmul.f32 %v1246, 0.35355338
      %v1251 = vlaneseq
      %v1252 = vshrl.u32 %v1251, 7
      %v1253 = vsub.s32 0, %v1252
      %v1254 = vrot.slane %v875, %v1253
      %v1255 = vadd.f32 %v1249, %v1254
      %v1256 = vadd.f32 %v1250, %v1254
      %vm1257 = vcmask 97280
      %v1258 = vsel %vm1257, %v1255, -inf
      %1259 = vmax.xlane.f32.xlu0 %v1258
      %v1260 = vpop.xlane.xlu0 %1259
      %vm1261 = vcmask 93184
      %v1262 = vsel %vm1261, %v1256, -inf
      %1263 = vmax.xlane.f32.xlu0 %v1262
      %v1264 = vpop.xlane.xlu0 %1263
      %v1265 = vsub.f32 %v1255, %v1260
      %v1266 = vsub.f32 %v1256, %v1264
      %v1267 = vmul.f32 %v1265, 1.442695
      %v1268 = vpow.pop %v1267
      %v1269 = vmul.f32 %v1266, 1.442695
      %v1270 = vpow.pop %v1269
      %v1271 = vsel %vm1257, %v1268, 0.0
      %1272 = vadd.xlane.f32.xlu0 %v1271
      %v1273 = vpop.xlane.xlu0 %1272
      %v1274 = vsel %vm1261, %v1270, 0.0
      %1275 = vadd.xlane.f32.xlu0 %v1274
      %v1276 = vpop.xlane.xlu0 %1275
      %v1277 = vrcp.pop %v1273
      %v1278 = vrcp.pop %v1276
      %v1279 = vmul.f32 %v1268, %v1277
      %v1280 = vmul.f32 %v1270, %v1278
      %1281 = vrot.lane.b32.xlu0 %v1151, 64
      %v1282 = vpop.permute.xlu0 %1281
      %1283 = vrot.lane.b32.xlu0 %v1156, 64
      %v1284 = vpop.permute.xlu0 %1283
      %v1287 = vsel %vm1257, %v1279, 0
      %v1290 = vsel %vm1257, %v1280, 0
      %vm1292 = vcmask 1043456
      %v1293 = vsel %vm1292, %v1284, 0
      %1295 = vmatprep.subr.mxu0 0.0
      %1296 = vmatpush1.msra.mxu0 %v1282
      %1297 = vmatprep.subr.mxu0 0.0
      %1298 = vmatpush1.msra.mxu0 %v1293
      %1299 = vmatprep.subr.mxu0 0.0
      %1300 = vmatpush1.msra.mxu0 0.0
      %1301 = vmatprep.subr.mxu0 0.0
      %1302 = vmatpush1.msra.mxu0 0.0
      %1303 = vmatprep.subr.mxu0 0.0
      %1304 = vmatpush1.msra.mxu0 0.0
      %1305 = vmatprep.subr.mxu0 0.0
      %1306 = vmatpush1.msra.mxu0 0.0
      %1307 = vmatprep.subr.mxu0 0.0
      %1308 = vmatpush1.msra.mxu0 0.0
      %1309 = vmatprep.subr.mxu0 0.0
      %1310 = vmatpush1.msra.mxu0 0.0
      %1311 = vmatprep.subr.mxu0 0.0
      %1312 = vmatpush1.msra.mxu0 0.0
      %1313 = vmatprep.subr.mxu0 0.0
      %1314 = vmatpush1.msra.mxu0 0.0
      %1315 = vmatprep.subr.mxu0 0.0
      %1316 = vmatpush1.msra.mxu0 0.0
      %1317 = vmatprep.subr.mxu0 0.0
      %1318 = vmatpush1.msra.mxu0 0.0
      %1319 = vmatprep.subr.mxu0 0.0
      %1320 = vmatpush1.msra.mxu0 0.0
      %1321 = vmatprep.subr.mxu0 0.0
      %1322 = vmatpush1.msra.mxu0 0.0
      %1323 = vmatprep.subr.mxu0 0.0
      %1324 = vmatpush1.msra.mxu0 0.0
      %1325 = vmatprep.subr.mxu0 0.0
      %1326 = vmatpush1.msra.mxu0 0.0
      %1327 = vmatprep.subr.mxu0 0.0
      %1328 = vmatpush1.msra.mxu0 0.0
      %1329 = vmatprep.subr.mxu0 0.0
      %1330 = vmatpush1.msra.mxu0 0.0
      %1331 = vmatprep.subr.mxu0 0.0
      %1332 = vmatpush1.msra.mxu0 0.0
      %1333 = vmatprep.subr.mxu0 0.0
      %1334 = vmatpush1.msra.mxu0 0.0
      %1335 = vmatprep.subr.mxu0 0.0
      %1336 = vmatpush1.msra.mxu0 0.0
      %1337 = vmatprep.subr.mxu0 0.0
      %1338 = vmatpush1.msra.mxu0 0.0
      %1339 = vmatprep.subr.mxu0 0.0
      %1340 = vmatpush1.msra.mxu0 0.0
      %1341 = vmatprep.subr.mxu0 0.0
      %1342 = vmatpush1.msra.mxu0 0.0
      %1343 = vmatprep.subr.mxu0 0.0
      %1344 = vmatpush1.msra.mxu0 0.0
      %1345 = vmatprep.subr.mxu0 0.0
      %1346 = vmatpush1.msra.mxu0 0.0
      %1347 = vmatprep.subr.mxu0 0.0
      %1348 = vmatpush1.msra.mxu0 0.0
      %1349 = vmatprep.subr.mxu0 0.0
      %1350 = vmatpush1.msra.mxu0 0.0
      %1351 = vmatprep.subr.mxu0 0.0
      %1352 = vmatpush1.msra.mxu0 0.0
      %1353 = vmatprep.subr.mxu0 0.0
      %1354 = vmatpush1.msra.mxu0 0.0
      %1355 = vmatprep.subr.mxu0 0.0
      %1356 = vmatpush1.msra.mxu0 0.0
      %1357 = vmatprep.subr.mxu0 0.0
      %1358 = vmatpush1.msra.mxu0 0.0
      %1359 = vmatprep.mubr.f32.mxu0 0.0
      %1360 = vmatmul.mubr.f32.gmra.mrb[0].mxu0 %v1287
      %v1361 = vpop.f32.mrb[0].mxu0
      %v1362 = vadd.f32 0.0, %v1361
      %v1363 = vpop.f32.mrb[0].mxu0
      %1364 = vmatprep.mubr.f32.mxu0 0.0
      %1365 = vmatmul.mubr.f32.gmra.mrb[0].mxu0 %v1290
      %v1366 = vpop.f32.mrb[0].mxu0
      %v1367 = vadd.f32 0.0, %v1366
      %v1368 = vpop.f32.mrb[0].mxu0
      %1369 = vdwg.mxu0
      %1370 = vrot.lane.b32.xlu0 %v1151, 120
      %v1371 = vpop.permute.xlu0 %1370
      %1372 = vrot.lane.b32.xlu0 %v1156, 120
      %v1373 = vpop.permute.xlu0 %1372
      %1374 = vrot.lane.b32.xlu0 %v1151, 88
      %v1375 = vpop.permute.xlu0 %1374
      %1376 = vrot.lane.b32.xlu0 %v1156, 88
      %v1377 = vpop.permute.xlu0 %1376
      %v1378 = vsel %vm1165, %v1371, 0
      %v1380 = vsel %vm1165, %v1373, 0
      %v1382 = vsel %vm1165, %v1375, 0
      %v1384 = vsel %vm1165, %v1377, 0
      %1386 = vmatprep.subr.mxu0 0.0
      %1387 = vmatpush1.xpose.msra.mxu0 %v1382
      %1388 = vmatprep.subr.mxu0 0.0
      %1389 = vmatpush1.xpose.msra.mxu0 %v1384
      %1390 = vmatprep.subr.mxu0 0.0
      %1391 = vmatpush1.xpose.msra.mxu0 0.0
      %1392 = vmatprep.subr.mxu0 0.0
      %1393 = vmatpush1.xpose.msra.mxu0 0.0
      %1394 = vmatprep.subr.mxu0 0.0
      %1395 = vmatpush1.xpose.msra.mxu0 0.0
      %1396 = vmatprep.subr.mxu0 0.0
      %1397 = vmatpush1.xpose.msra.mxu0 0.0
      %1398 = vmatprep.subr.mxu0 0.0
      %1399 = vmatpush1.xpose.msra.mxu0 0.0
      %1400 = vmatprep.subr.mxu0 0.0
      %1401 = vmatpush1.xpose.msra.mxu0 0.0
      %1402 = vmatprep.subr.mxu0 0.0
      %1403 = vmatpush1.xpose.msra.mxu0 0.0
      %1404 = vmatprep.subr.mxu0 0.0
      %1405 = vmatpush1.xpose.msra.mxu0 0.0
      %1406 = vmatprep.subr.mxu0 0.0
      %1407 = vmatpush1.xpose.msra.mxu0 0.0
      %1408 = vmatprep.subr.mxu0 0.0
      %1409 = vmatpush1.xpose.msra.mxu0 0.0
      %1410 = vmatprep.subr.mxu0 0.0
      %1411 = vmatpush1.xpose.msra.mxu0 0.0
      %1412 = vmatprep.subr.mxu0 0.0
      %1413 = vmatpush1.xpose.msra.mxu0 0.0
      %1414 = vmatprep.subr.mxu0 0.0
      %1415 = vmatpush1.xpose.msra.mxu0 0.0
      %1416 = vmatprep.subr.mxu0 0.0
      %1417 = vmatpush1.xpose.msra.mxu0 0.0
      %1418 = vmatprep.subr.mxu0 0.0
      %1419 = vmatpush1.xpose.msra.mxu0 0.0
      %1420 = vmatprep.subr.mxu0 0.0
      %1421 = vmatpush1.xpose.msra.mxu0 0.0
      %1422 = vmatprep.subr.mxu0 0.0
      %1423 = vmatpush1.xpose.msra.mxu0 0.0
      %1424 = vmatprep.subr.mxu0 0.0
      %1425 = vmatpush1.xpose.msra.mxu0 0.0
      %1426 = vmatprep.subr.mxu0 0.0
      %1427 = vmatpush1.xpose.msra.mxu0 0.0
      %1428 = vmatprep.subr.mxu0 0.0
      %1429 = vmatpush1.xpose.msra.mxu0 0.0
      %1430 = vmatprep.subr.mxu0 0.0
      %1431 = vmatpush1.xpose.msra.mxu0 0.0
      %1432 = vmatprep.subr.mxu0 0.0
      %1433 = vmatpush1.xpose.msra.mxu0 0.0
      %1434 = vmatprep.subr.mxu0 0.0
      %1435 = vmatpush1.xpose.msra.mxu0 0.0
      %1436 = vmatprep.subr.mxu0 0.0
      %1437 = vmatpush1.xpose.msra.mxu0 0.0
      %1438 = vmatprep.subr.mxu0 0.0
      %1439 = vmatpush1.xpose.msra.mxu0 0.0
      %1440 = vmatprep.subr.mxu0 0.0
      %1441 = vmatpush1.xpose.msra.mxu0 0.0
      %1442 = vmatprep.subr.mxu0 0.0
      %1443 = vmatpush1.xpose.msra.mxu0 0.0
      %1444 = vmatprep.subr.mxu0 0.0
      %1445 = vmatpush1.xpose.msra.mxu0 0.0
      %1446 = vmatprep.subr.mxu0 0.0
      %1447 = vmatpush1.xpose.msra.mxu0 0.0
      %1448 = vmatprep.subr.mxu0 0.0
      %1449 = vmatpush1.xpose.msra.mxu0 0.0
      %1450 = vmatprep.mubr.f32.mxu0 0.0
      %1451 = vmatmul.mubr.f32.gmra.mrb[0].mxu0 %v1378
      %v1452 = vpop.f32.mrb[0].mxu0
      %v1453 = vadd.f32 0.0, %v1452
      %v1454 = vpop.f32.mrb[0].mxu0
      %1455 = vmatprep.mubr.f32.mxu0 0.0
      %1456 = vmatmul.mubr.f32.gmra.mrb[0].mxu0 %v1380
      %v1457 = vpop.f32.mrb[0].mxu0
      %v1458 = vadd.f32 0.0, %v1457
      %v1459 = vpop.f32.mrb[0].mxu0
      %1460 = vdwg.mxu0
      %v1461 = vmul.f32 %v1453, 0.35355338
      %v1462 = vmul.f32 %v1458, 0.35355338
      %v1463 = vadd.f32 %v1461, %v1254
      %v1464 = vadd.f32 %v1462, %v1254
      %v1465 = vsel %vm1257, %v1463, -inf
      %1466 = vmax.xlane.f32.xlu0 %v1465
      %v1467 = vpop.xlane.xlu0 %1466
      %v1468 = vsel %vm1261, %v1464, -inf
      %1469 = vmax.xlane.f32.xlu0 %v1468
      %v1470 = vpop.xlane.xlu0 %1469
      %v1471 = vsub.f32 %v1463, %v1467
      %v1472 = vsub.f32 %v1464, %v1470
      %v1473 = vmul.f32 %v1471, 1.442695
      %v1474 = vpow.pop %v1473
      %v1475 = vmul.f32 %v1472, 1.442695
      %v1476 = vpow.pop %v1475
      %v1477 = vsel %vm1257, %v1474, 0.0
      %1478 = vadd.xlane.f32.xlu0 %v1477
      %v1479 = vpop.xlane.xlu0 %1478
      %v1480 = vsel %vm1261, %v1476, 0.0
      %1481 = vadd.xlane.f32.xlu0 %v1480
      %v1482 = vpop.xlane.xlu0 %1481
      %v1483 = vrcp.pop %v1479
      %v1484 = vrcp.pop %v1482
      %v1485 = vmul.f32 %v1474, %v1483
      %v1486 = vmul.f32 %v1476, %v1484
      %1487 = vrot.lane.b32.xlu0 %v1151, 56
      %v1488 = vpop.permute.xlu0 %1487
      %1489 = vrot.lane.b32.xlu0 %v1156, 56
      %v1490 = vpop.permute.xlu0 %1489
      %v1493 = vsel %vm1257, %v1485, 0
      %v1496 = vsel %vm1257, %v1486, 0
      %v1498 = vsel %vm1292, %v1490, 0
      %1500 = vmatprep.subr.mxu0 0.0
      %1501 = vmatpush1.msra.mxu0 %v1488
      %1502 = vmatprep.subr.mxu0 0.0
      %1503 = vmatpush1.msra.mxu0 %v1498
      %1504 = vmatprep.subr.mxu0 0.0
      %1505 = vmatpush1.msra.mxu0 0.0
      %1506 = vmatprep.subr.mxu0 0.0
      %1507 = vmatpush1.msra.mxu0 0.0
      %1508 = vmatprep.subr.mxu0 0.0
      %1509 = vmatpush1.msra.mxu0 0.0
      %1510 = vmatprep.subr.mxu0 0.0
      %1511 = vmatpush1.msra.mxu0 0.0
      %1512 = vmatprep.subr.mxu0 0.0
      %1513 = vmatpush1.msra.mxu0 0.0
      %1514 = vmatprep.subr.mxu0 0.0
      %1515 = vmatpush1.msra.mxu0 0.0
      %1516 = vmatprep.subr.mxu0 0.0
      %1517 = vmatpush1.msra.mxu0 0.0
      %1518 = vmatprep.subr.mxu0 0.0
      %1519 = vmatpush1.msra.mxu0 0.0
      %1520 = vmatprep.subr.mxu0 0.0
      %1521 = vmatpush1.msra.mxu0 0.0
      %1522 = vmatprep.subr.mxu0 0.0
      %1523 = vmatpush1.msra.mxu0 0.0
      %1524 = vmatprep.subr.mxu0 0.0
      %1525 = vmatpush1.msra.mxu0 0.0
      %1526 = vmatprep.subr.mxu0 0.0
      %1527 = vmatpush1.msra.mxu0 0.0
      %1528 = vmatprep.subr.mxu0 0.0
      %1529 = vmatpush1.msra.mxu0 0.0
      %1530 = vmatprep.subr.mxu0 0.0
      %1531 = vmatpush1.msra.mxu0 0.0
      %1532 = vmatprep.subr.mxu0 0.0
      %1533 = vmatpush1.msra.mxu0 0.0
      %1534 = vmatprep.subr.mxu0 0.0
      %1535 = vmatpush1.msra.mxu0 0.0
      %1536 = vmatprep.subr.mxu0 0.0
      %1537 = vmatpush1.msra.mxu0 0.0
      %1538 = vmatprep.subr.mxu0 0.0
      %1539 = vmatpush1.msra.mxu0 0.0
      %1540 = vmatprep.subr.mxu0 0.0
      %1541 = vmatpush1.msra.mxu0 0.0
      %1542 = vmatprep.subr.mxu0 0.0
      %1543 = vmatpush1.msra.mxu0 0.0
      %1544 = vmatprep.subr.mxu0 0.0
      %1545 = vmatpush1.msra.mxu0 0.0
      %1546 = vmatprep.subr.mxu0 0.0
      %1547 = vmatpush1.msra.mxu0 0.0
      %1548 = vmatprep.subr.mxu0 0.0
      %1549 = vmatpush1.msra.mxu0 0.0
      %1550 = vmatprep.subr.mxu0 0.0
      %1551 = vmatpush1.msra.mxu0 0.0
      %1552 = vmatprep.subr.mxu0 0.0
      %1553 = vmatpush1.msra.mxu0 0.0
      %1554 = vmatprep.subr.mxu0 0.0
      %1555 = vmatpush1.msra.mxu0 0.0
      %1556 = vmatprep.subr.mxu0 0.0
      %1557 = vmatpush1.msra.mxu0 0.0
      %1558 = vmatprep.subr.mxu0 0.0
      %1559 = vmatpush1.msra.mxu0 0.0
      %1560 = vmatprep.subr.mxu0 0.0
      %1561 = vmatpush1.msra.mxu0 0.0
      %1562 = vmatprep.subr.mxu0 0.0
      %1563 = vmatpush1.msra.mxu0 0.0
      %1564 = vmatprep.mubr.f32.mxu0 0.0
      %1565 = vmatmul.mubr.f32.gmra.mrb[0].mxu0 %v1493
      %v1566 = vpop.f32.mrb[0].mxu0
      %v1567 = vadd.f32 0.0, %v1566
      %v1568 = vpop.f32.mrb[0].mxu0
      %1569 = vmatprep.mubr.f32.mxu0 0.0
      %1570 = vmatmul.mubr.f32.gmra.mrb[0].mxu0 %v1496
      %v1571 = vpop.f32.mrb[0].mxu0
      %v1572 = vadd.f32 0.0, %v1571
      %v1573 = vpop.f32.mrb[0].mxu0
      %1574 = vdwg.mxu0
      %1575 = vrot.lane.b32.xlu0 %v1151, 112
      %v1576 = vpop.permute.xlu0 %1575
      %1577 = vrot.lane.b32.xlu0 %v1156, 112
      %v1578 = vpop.permute.xlu0 %1577
      %1579 = vrot.lane.b32.xlu0 %v1151, 80
      %v1580 = vpop.permute.xlu0 %1579
      %1581 = vrot.lane.b32.xlu0 %v1156, 80
      %v1582 = vpop.permute.xlu0 %1581
      %v1583 = vsel %vm1165, %v1576, 0
      %v1585 = vsel %vm1165, %v1578, 0
      %v1587 = vsel %vm1165, %v1580, 0
      %v1589 = vsel %vm1165, %v1582, 0
      %1591 = vmatprep.subr.mxu0 0.0
      %1592 = vmatpush1.xpose.msra.mxu0 %v1587
      %1593 = vmatprep.subr.mxu0 0.0
      %1594 = vmatpush1.xpose.msra.mxu0 %v1589
      %1595 = vmatprep.subr.mxu0 0.0
      %1596 = vmatpush1.xpose.msra.mxu0 0.0
      %1597 = vmatprep.subr.mxu0 0.0
      %1598 = vmatpush1.xpose.msra.mxu0 0.0
      %1599 = vmatprep.subr.mxu0 0.0
      %1600 = vmatpush1.xpose.msra.mxu0 0.0
      %1601 = vmatprep.subr.mxu0 0.0
      %1602 = vmatpush1.xpose.msra.mxu0 0.0
      %1603 = vmatprep.subr.mxu0 0.0
      %1604 = vmatpush1.xpose.msra.mxu0 0.0
      %1605 = vmatprep.subr.mxu0 0.0
      %1606 = vmatpush1.xpose.msra.mxu0 0.0
      %1607 = vmatprep.subr.mxu0 0.0
      %1608 = vmatpush1.xpose.msra.mxu0 0.0
      %1609 = vmatprep.subr.mxu0 0.0
      %1610 = vmatpush1.xpose.msra.mxu0 0.0
      %1611 = vmatprep.subr.mxu0 0.0
      %1612 = vmatpush1.xpose.msra.mxu0 0.0
      %1613 = vmatprep.subr.mxu0 0.0
      %1614 = vmatpush1.xpose.msra.mxu0 0.0
      %1615 = vmatprep.subr.mxu0 0.0
      %1616 = vmatpush1.xpose.msra.mxu0 0.0
      %1617 = vmatprep.subr.mxu0 0.0
      %1618 = vmatpush1.xpose.msra.mxu0 0.0
      %1619 = vmatprep.subr.mxu0 0.0
      %1620 = vmatpush1.xpose.msra.mxu0 0.0
      %1621 = vmatprep.subr.mxu0 0.0
      %1622 = vmatpush1.xpose.msra.mxu0 0.0
      %1623 = vmatprep.subr.mxu0 0.0
      %1624 = vmatpush1.xpose.msra.mxu0 0.0
      %1625 = vmatprep.subr.mxu0 0.0
      %1626 = vmatpush1.xpose.msra.mxu0 0.0
      %1627 = vmatprep.subr.mxu0 0.0
      %1628 = vmatpush1.xpose.msra.mxu0 0.0
      %1629 = vmatprep.subr.mxu0 0.0
      %1630 = vmatpush1.xpose.msra.mxu0 0.0
      %1631 = vmatprep.subr.mxu0 0.0
      %1632 = vmatpush1.xpose.msra.mxu0 0.0
      %1633 = vmatprep.subr.mxu0 0.0
      %1634 = vmatpush1.xpose.msra.mxu0 0.0
      %1635 = vmatprep.subr.mxu0 0.0
      %1636 = vmatpush1.xpose.msra.mxu0 0.0
      %1637 = vmatprep.subr.mxu0 0.0
      %1638 = vmatpush1.xpose.msra.mxu0 0.0
      %1639 = vmatprep.subr.mxu0 0.0
      %1640 = vmatpush1.xpose.msra.mxu0 0.0
      %1641 = vmatprep.subr.mxu0 0.0
      %1642 = vmatpush1.xpose.msra.mxu0 0.0
      %1643 = vmatprep.subr.mxu0 0.0
      %1644 = vmatpush1.xpose.msra.mxu0 0.0
      %1645 = vmatprep.subr.mxu0 0.0
      %1646 = vmatpush1.xpose.msra.mxu0 0.0
      %1647 = vmatprep.subr.mxu0 0.0
      %1648 = vmatpush1.xpose.msra.mxu0 0.0
      %1649 = vmatprep.subr.mxu0 0.0
      %1650 = vmatpush1.xpose.msra.mxu0 0.0
      %1651 = vmatprep.subr.mxu0 0.0
      %1652 = vmatpush1.xpose.msra.mxu0 0.0
      %1653 = vmatprep.subr.mxu0 0.0
      %1654 = vmatpush1.xpose.msra.mxu0 0.0
      %1655 = vmatprep.mubr.f32.mxu0 0.0
      %1656 = vmatmul.mubr.f32.gmra.mrb[0].mxu0 %v1583
      %v1657 = vpop.f32.mrb[0].mxu0
      %v1658 = vadd.f32 0.0, %v1657
      %v1659 = vpop.f32.mrb[0].mxu0
      %1660 = vmatprep.mubr.f32.mxu0 0.0
      %1661 = vmatmul.mubr.f32.gmra.mrb[0].mxu0 %v1585
      %v1662 = vpop.f32.mrb[0].mxu0
      %v1663 = vadd.f32 0.0, %v1662
      %v1664 = vpop.f32.mrb[0].mxu0
      %1665 = vdwg.mxu0
      %v1666 = vmul.f32 %v1658, 0.35355338
      %v1667 = vmul.f32 %v1663, 0.35355338
      %v1668 = vadd.f32 %v1666, %v1254
      %v1669 = vadd.f32 %v1667, %v1254
      %v1670 = vsel %vm1257, %v1668, -inf
      %1671 = vmax.xlane.f32.xlu0 %v1670
      %v1672 = vpop.xlane.xlu0 %1671
      %v1673 = vsel %vm1261, %v1669, -inf
      %1674 = vmax.xlane.f32.xlu0 %v1673
      %v1675 = vpop.xlane.xlu0 %1674
      %v1676 = vsub.f32 %v1668, %v1672
      %v1677 = vsub.f32 %v1669, %v1675
      %v1678 = vmul.f32 %v1676, 1.442695
      %v1679 = vpow.pop %v1678
      %v1680 = vmul.f32 %v1677, 1.442695
      %v1681 = vpow.pop %v1680
      %v1682 = vsel %vm1257, %v1679, 0.0
      %1683 = vadd.xlane.f32.xlu0 %v1682
      %v1684 = vpop.xlane.xlu0 %1683
      %v1685 = vsel %vm1261, %v1681, 0.0
      %1686 = vadd.xlane.f32.xlu0 %v1685
      %v1687 = vpop.xlane.xlu0 %1686
      %v1688 = vrcp.pop %v1684
      %v1689 = vrcp.pop %v1687
      %v1690 = vmul.f32 %v1679, %v1688
      %v1691 = vmul.f32 %v1681, %v1689
      %1692 = vrot.lane.b32.xlu0 %v1151, 48
      %v1693 = vpop.permute.xlu0 %1692
      %1694 = vrot.lane.b32.xlu0 %v1156, 48
      %v1695 = vpop.permute.xlu0 %1694
      %v1698 = vsel %vm1257, %v1690, 0
      %v1701 = vsel %vm1257, %v1691, 0
      %v1703 = vsel %vm1292, %v1695, 0
      %1705 = vmatprep.subr.mxu0 0.0
      %1706 = vmatpush1.msra.mxu0 %v1693
      %1707 = vmatprep.subr.mxu0 0.0
      %1708 = vmatpush1.msra.mxu0 %v1703
      %1709 = vmatprep.subr.mxu0 0.0
      %1710 = vmatpush1.msra.mxu0 0.0
      %1711 = vmatprep.subr.mxu0 0.0
      %1712 = vmatpush1.msra.mxu0 0.0
      %1713 = vmatprep.subr.mxu0 0.0
      %1714 = vmatpush1.msra.mxu0 0.0
      %1715 = vmatprep.subr.mxu0 0.0
      %1716 = vmatpush1.msra.mxu0 0.0
      %1717 = vmatprep.subr.mxu0 0.0
      %1718 = vmatpush1.msra.mxu0 0.0
      %1719 = vmatprep.subr.mxu0 0.0
      %1720 = vmatpush1.msra.mxu0 0.0
      %1721 = vmatprep.subr.mxu0 0.0
      %1722 = vmatpush1.msra.mxu0 0.0
      %1723 = vmatprep.subr.mxu0 0.0
      %1724 = vmatpush1.msra.mxu0 0.0
      %1725 = vmatprep.subr.mxu0 0.0
      %1726 = vmatpush1.msra.mxu0 0.0
      %1727 = vmatprep.subr.mxu0 0.0
      %1728 = vmatpush1.msra.mxu0 0.0
      %1729 = vmatprep.subr.mxu0 0.0
      %1730 = vmatpush1.msra.mxu0 0.0
      %1731 = vmatprep.subr.mxu0 0.0
      %1732 = vmatpush1.msra.mxu0 0.0
      %1733 = vmatprep.subr.mxu0 0.0
      %1734 = vmatpush1.msra.mxu0 0.0
      %1735 = vmatprep.subr.mxu0 0.0
      %1736 = vmatpush1.msra.mxu0 0.0
      %1737 = vmatprep.subr.mxu0 0.0
      %1738 = vmatpush1.msra.mxu0 0.0
      %1739 = vmatprep.subr.mxu0 0.0
      %1740 = vmatpush1.msra.mxu0 0.0
      %1741 = vmatprep.subr.mxu0 0.0
      %1742 = vmatpush1.msra.mxu0 0.0
      %1743 = vmatprep.subr.mxu0 0.0
      %1744 = vmatpush1.msra.mxu0 0.0
      %1745 = vmatprep.subr.mxu0 0.0
      %1746 = vmatpush1.msra.mxu0 0.0
      %1747 = vmatprep.subr.mxu0 0.0
      %1748 = vmatpush1.msra.mxu0 0.0
      %1749 = vmatprep.subr.mxu0 0.0
      %1750 = vmatpush1.msra.mxu0 0.0
      %1751 = vmatprep.subr.mxu0 0.0
      %1752 = vmatpush1.msra.mxu0 0.0
      %1753 = vmatprep.subr.mxu0 0.0
      %1754 = vmatpush1.msra.mxu0 0.0
      %1755 = vmatprep.subr.mxu0 0.0
      %1756 = vmatpush1.msra.mxu0 0.0
      %1757 = vmatprep.subr.mxu0 0.0
      %1758 = vmatpush1.msra.mxu0 0.0
      %1759 = vmatprep.subr.mxu0 0.0
      %1760 = vmatpush1.msra.mxu0 0.0
      %1761 = vmatprep.subr.mxu0 0.0
      %1762 = vmatpush1.msra.mxu0 0.0
      %1763 = vmatprep.subr.mxu0 0.0
      %1764 = vmatpush1.msra.mxu0 0.0
      %1765 = vmatprep.subr.mxu0 0.0
      %1766 = vmatpush1.msra.mxu0 0.0
      %1767 = vmatprep.subr.mxu0 0.0
      %1768 = vmatpush1.msra.mxu0 0.0
      %1769 = vmatprep.mubr.f32.mxu0 0.0
      %1770 = vmatmul.mubr.f32.gmra.mrb[0].mxu0 %v1698
      %v1771 = vpop.f32.mrb[0].mxu0
      %v1772 = vadd.f32 0.0, %v1771
      %v1773 = vpop.f32.mrb[0].mxu0
      %1774 = vmatprep.mubr.f32.mxu0 0.0
      %1775 = vmatmul.mubr.f32.gmra.mrb[0].mxu0 %v1701
      %v1776 = vpop.f32.mrb[0].mxu0
      %v1777 = vadd.f32 0.0, %v1776
      %v1778 = vpop.f32.mrb[0].mxu0
      %1779 = vdwg.mxu0
      %1780 = vrot.lane.b32.xlu0 %v1151, 104
      %v1781 = vpop.permute.xlu0 %1780
      %1782 = vrot.lane.b32.xlu0 %v1156, 104
      %v1783 = vpop.permute.xlu0 %1782
      %1784 = vrot.lane.b32.xlu0 %v1151, 72
      %v1785 = vpop.permute.xlu0 %1784
      %1786 = vrot.lane.b32.xlu0 %v1156, 72
      %v1787 = vpop.permute.xlu0 %1786
      %v1788 = vsel %vm1165, %v1781, 0
      %v1790 = vsel %vm1165, %v1783, 0
      %v1792 = vsel %vm1165, %v1785, 0
      %v1794 = vsel %vm1165, %v1787, 0
      %1796 = vmatprep.subr.mxu0 0.0
      %1797 = vmatpush1.xpose.msra.mxu0 %v1792
      %1798 = vmatprep.subr.mxu0 0.0
      %1799 = vmatpush1.xpose.msra.mxu0 %v1794
      %1800 = vmatprep.subr.mxu0 0.0
      %1801 = vmatpush1.xpose.msra.mxu0 0.0
      %1802 = vmatprep.subr.mxu0 0.0
      %1803 = vmatpush1.xpose.msra.mxu0 0.0
      %1804 = vmatprep.subr.mxu0 0.0
      %1805 = vmatpush1.xpose.msra.mxu0 0.0
      %1806 = vmatprep.subr.mxu0 0.0
      %1807 = vmatpush1.xpose.msra.mxu0 0.0
      %1808 = vmatprep.subr.mxu0 0.0
      %1809 = vmatpush1.xpose.msra.mxu0 0.0
      %1810 = vmatprep.subr.mxu0 0.0
      %1811 = vmatpush1.xpose.msra.mxu0 0.0
      %1812 = vmatprep.subr.mxu0 0.0
      %1813 = vmatpush1.xpose.msra.mxu0 0.0
      %1814 = vmatprep.subr.mxu0 0.0
      %1815 = vmatpush1.xpose.msra.mxu0 0.0
      %1816 = vmatprep.subr.mxu0 0.0
      %1817 = vmatpush1.xpose.msra.mxu0 0.0
      %1818 = vmatprep.subr.mxu0 0.0
      %1819 = vmatpush1.xpose.msra.mxu0 0.0
      %1820 = vmatprep.subr.mxu0 0.0
      %1821 = vmatpush1.xpose.msra.mxu0 0.0
      %1822 = vmatprep.subr.mxu0 0.0
      %1823 = vmatpush1.xpose.msra.mxu0 0.0
      %1824 = vmatprep.subr.mxu0 0.0
      %1825 = vmatpush1.xpose.msra.mxu0 0.0
      %1826 = vmatprep.subr.mxu0 0.0
      %1827 = vmatpush1.xpose.msra.mxu0 0.0
      %1828 = vmatprep.subr.mxu0 0.0
      %1829 = vmatpush1.xpose.msra.mxu0 0.0
      %1830 = vmatprep.subr.mxu0 0.0
      %1831 = vmatpush1.xpose.msra.mxu0 0.0
      %1832 = vmatprep.subr.mxu0 0.0
      %1833 = vmatpush1.xpose.msra.mxu0 0.0
      %1834 = vmatprep.subr.mxu0 0.0
      %1835 = vmatpush1.xpose.msra.mxu0 0.0
      %1836 = vmatprep.subr.mxu0 0.0
      %1837 = vmatpush1.xpose.msra.mxu0 0.0
      %1838 = vmatprep.subr.mxu0 0.0
      %1839 = vmatpush1.xpose.msra.mxu0 0.0
      %1840 = vmatprep.subr.mxu0 0.0
      %1841 = vmatpush1.xpose.msra.mxu0 0.0
      %1842 = vmatprep.subr.mxu0 0.0
      %1843 = vmatpush1.xpose.msra.mxu0 0.0
      %1844 = vmatprep.subr.mxu0 0.0
      %1845 = vmatpush1.xpose.msra.mxu0 0.0
      %1846 = vmatprep.subr.mxu0 0.0
      %1847 = vmatpush1.xpose.msra.mxu0 0.0
      %1848 = vmatprep.subr.mxu0 0.0
      %1849 = vmatpush1.xpose.msra.mxu0 0.0
      %1850 = vmatprep.subr.mxu0 0.0
      %1851 = vmatpush1.xpose.msra.mxu0 0.0
      %1852 = vmatprep.subr.mxu0 0.0
      %1853 = vmatpush1.xpose.msra.mxu0 0.0
      %1854 = vmatprep.subr.mxu0 0.0
      %1855 = vmatpush1.xpose.msra.mxu0 0.0
      %1856 = vmatprep.subr.mxu0 0.0
      %1857 = vmatpush1.xpose.msra.mxu0 0.0
      %1858 = vmatprep.subr.mxu0 0.0
      %1859 = vmatpush1.xpose.msra.mxu0 0.0
      %1860 = vmatprep.mubr.f32.mxu0 0.0
      %1861 = vmatmul.mubr.f32.gmra.mrb[0].mxu0 %v1788
      %v1862 = vpop.f32.mrb[0].mxu0
      %v1863 = vadd.f32 0.0, %v1862
      %v1864 = vpop.f32.mrb[0].mxu0
      %1865 = vmatprep.mubr.f32.mxu0 0.0
      %1866 = vmatmul.mubr.f32.gmra.mrb[0].mxu0 %v1790
      %v1867 = vpop.f32.mrb[0].mxu0
      %v1868 = vadd.f32 0.0, %v1867
      %v1869 = vpop.f32.mrb[0].mxu0
      %1870 = vdwg.mxu0
      %v1871 = vmul.f32 %v1863, 0.35355338
      %v1872 = vmul.f32 %v1868, 0.35355338
      %v1873 = vadd.f32 %v1871, %v1254
      %v1874 = vadd.f32 %v1872, %v1254
      %v1875 = vsel %vm1257, %v1873, -inf
      %1876 = vmax.xlane.f32.xlu0 %v1875
      %v1877 = vpop.xlane.xlu0 %1876
      %v1878 = vsel %vm1261, %v1874, -inf
      %1879 = vmax.xlane.f32.xlu0 %v1878
      %v1880 = vpop.xlane.xlu0 %1879
      %v1881 = vsub.f32 %v1873, %v1877
      %v1882 = vsub.f32 %v1874, %v1880
      %v1883 = vmul.f32 %v1881, 1.442695
      %v1884 = vpow.pop %v1883
      %v1885 = vmul.f32 %v1882, 1.442695
      %v1886 = vpow.pop %v1885
      %v1887 = vsel %vm1257, %v1884, 0.0
      %1888 = vadd.xlane.f32.xlu0 %v1887
      %v1889 = vpop.xlane.xlu0 %1888
      %v1890 = vsel %vm1261, %v1886, 0.0
      %1891 = vadd.xlane.f32.xlu0 %v1890
      %v1892 = vpop.xlane.xlu0 %1891
      %v1893 = vrcp.pop %v1889
      %v1894 = vrcp.pop %v1892
      %v1895 = vmul.f32 %v1884, %v1893
      %v1896 = vmul.f32 %v1886, %v1894
      %1897 = vrot.lane.b32.xlu0 %v1151, 40
      %v1898 = vpop.permute.xlu0 %1897
      %1899 = vrot.lane.b32.xlu0 %v1156, 40
      %v1900 = vpop.permute.xlu0 %1899
      %v1903 = vsel %vm1257, %v1895, 0
      %v1906 = vsel %vm1257, %v1896, 0
      %v1908 = vsel %vm1292, %v1900, 0
      %1910 = vmatprep.subr.mxu0 0.0
      %1911 = vmatpush1.msra.mxu0 %v1898
      %1912 = vmatprep.subr.mxu0 0.0
      %1913 = vmatpush1.msra.mxu0 %v1908
      %1914 = vmatprep.subr.mxu0 0.0
      %1915 = vmatpush1.msra.mxu0 0.0
      %1916 = vmatprep.subr.mxu0 0.0
      %1917 = vmatpush1.msra.mxu0 0.0
      %1918 = vmatprep.subr.mxu0 0.0
      %1919 = vmatpush1.msra.mxu0 0.0
      %1920 = vmatprep.subr.mxu0 0.0
      %1921 = vmatpush1.msra.mxu0 0.0
      %1922 = vmatprep.subr.mxu0 0.0
      %1923 = vmatpush1.msra.mxu0 0.0
      %1924 = vmatprep.subr.mxu0 0.0
      %1925 = vmatpush1.msra.mxu0 0.0
      %1926 = vmatprep.subr.mxu0 0.0
      %1927 = vmatpush1.msra.mxu0 0.0
      %1928 = vmatprep.subr.mxu0 0.0
      %1929 = vmatpush1.msra.mxu0 0.0
      %1930 = vmatprep.subr.mxu0 0.0
      %1931 = vmatpush1.msra.mxu0 0.0
      %1932 = vmatprep.subr.mxu0 0.0
      %1933 = vmatpush1.msra.mxu0 0.0
      %1934 = vmatprep.subr.mxu0 0.0
      %1935 = vmatpush1.msra.mxu0 0.0
      %1936 = vmatprep.subr.mxu0 0.0
      %1937 = vmatpush1.msra.mxu0 0.0
      %1938 = vmatprep.subr.mxu0 0.0
      %1939 = vmatpush1.msra.mxu0 0.0
      %1940 = vmatprep.subr.mxu0 0.0
      %1941 = vmatpush1.msra.mxu0 0.0
      %1942 = vmatprep.subr.mxu0 0.0
      %1943 = vmatpush1.msra.mxu0 0.0
      %1944 = vmatprep.subr.mxu0 0.0
      %1945 = vmatpush1.msra.mxu0 0.0
      %1946 = vmatprep.subr.mxu0 0.0
      %1947 = vmatpush1.msra.mxu0 0.0
      %1948 = vmatprep.subr.mxu0 0.0
      %1949 = vmatpush1.msra.mxu0 0.0
      %1950 = vmatprep.subr.mxu0 0.0
      %1951 = vmatpush1.msra.mxu0 0.0
      %1952 = vmatprep.subr.mxu0 0.0
      %1953 = vmatpush1.msra.mxu0 0.0
      %1954 = vmatprep.subr.mxu0 0.0
      %1955 = vmatpush1.msra.mxu0 0.0
      %1956 = vmatprep.subr.mxu0 0.0
      %1957 = vmatpush1.msra.mxu0 0.0
      %1958 = vmatprep.subr.mxu0 0.0
      %1959 = vmatpush1.msra.mxu0 0.0
      %1960 = vmatprep.subr.mxu0 0.0
      %1961 = vmatpush1.msra.mxu0 0.0
      %1962 = vmatprep.subr.mxu0 0.0
      %1963 = vmatpush1.msra.mxu0 0.0
      %1964 = vmatprep.subr.mxu0 0.0
      %1965 = vmatpush1.msra.mxu0 0.0
      %1966 = vmatprep.subr.mxu0 0.0
      %1967 = vmatpush1.msra.mxu0 0.0
      %1968 = vmatprep.subr.mxu0 0.0
      %1969 = vmatpush1.msra.mxu0 0.0
      %1970 = vmatprep.subr.mxu0 0.0
      %1971 = vmatpush1.msra.mxu0 0.0
      %1972 = vmatprep.subr.mxu0 0.0
      %1973 = vmatpush1.msra.mxu0 0.0
      %1974 = vmatprep.mubr.f32.mxu0 0.0
      %1975 = vmatmul.mubr.f32.gmra.mrb[0].mxu0 %v1903
      %v1976 = vpop.f32.mrb[0].mxu0
      %v1977 = vadd.f32 0.0, %v1976
      %v1978 = vpop.f32.mrb[0].mxu0
      %1979 = vmatprep.mubr.f32.mxu0 0.0
      %1980 = vmatmul.mubr.f32.gmra.mrb[0].mxu0 %v1906
      %v1981 = vpop.f32.mrb[0].mxu0
      %v1982 = vadd.f32 0.0, %v1981
      %v1983 = vpop.f32.mrb[0].mxu0
      %1984 = vdwg.mxu0
      %1987 = vrot.lane.b32.xlu0 %v1567, 8
      %v1988 = vpop.permute.xlu0 %1987
      %1989 = vrot.lane.b32.xlu0 %v1572, 8
      %v1990 = vpop.permute.xlu0 %1989
      %1995 = vrot.lane.b32.xlu0 %v1772, 16
      %v1996 = vpop.permute.xlu0 %1995
      %1997 = vrot.lane.b32.xlu0 %v1777, 16
      %v1998 = vpop.permute.xlu0 %1997
      %2003 = vrot.lane.b32.xlu0 %v1977, 24
      %v2004 = vpop.permute.xlu0 %2003
      %2005 = vrot.lane.b32.xlu0 %v1982, 24
      %v2006 = vpop.permute.xlu0 %2005
      %v2009 = vsel %vm1165, %v1362, %v1988
      %v2010 = vsel %vm1165, %v1367, %v1990
      %vm2011 = vcmask 130048
      %v2012 = vsel %vm2011, %v2009, %v1996
      %v2013 = vsel %vm2011, %v2010, %v1998
      %vm2014 = vcmask 195584
      %v2015 = vsel %vm2014, %v2012, %v2004
      %v2016 = vsel %vm2014, %v2013, %v2006
      %v2017 = vld [vmem:[%s12] sm:$0xff]
      %v2018 = vld [vmem:[%s12 + $0x8] sm:$0xff]
      %v2019 = vld [vmem:[%s12 + $0x10] sm:$0xff]
      %v2020 = vld [vmem:[%s12 + $0x18] sm:$0xff]
      %v2021 = vld [vmem:[%s13] sm:$0x1]
      %v2023 = vlaneseq
      %v2024 = vshrl.u32 %v2023, 7
      %v2025 = vsub.s32 0, %v2024
      %v2026 = vrot.slane %v2021, %v2025
      %v2029 = vsel %vm985, %v2015, 0
      %v2032 = vsel %vm985, %v2016, 0
      %2034 = vmatprep.subr.mxu0 0.0
      %2035 = vmatpush1.msra.mxu0 %v2017
      %2036 = vmatprep.subr.mxu0 0.0
      %2037 = vmatpush1.msra.mxu0 %v2018
      %2038 = vmatprep.subr.mxu0 0.0
      %2039 = vmatpush1.msra.mxu0 %v2019
      %2040 = vmatprep.subr.mxu0 0.0
      %2041 = vmatpush1.msra.mxu0 %v2020
      %2042 = vmatprep.subr.mxu0 0.0
      %2043 = vmatpush1.msra.mxu0 0.0
      %2044 = vmatprep.subr.mxu0 0.0
      %2045 = vmatpush1.msra.mxu0 0.0
      %2046 = vmatprep.subr.mxu0 0.0
      %2047 = vmatpush1.msra.mxu0 0.0
      %2048 = vmatprep.subr.mxu0 0.0
      %2049 = vmatpush1.msra.mxu0 0.0
      %2050 = vmatprep.subr.mxu0 0.0
      %2051 = vmatpush1.msra.mxu0 0.0
      %2052 = vmatprep.subr.mxu0 0.0
      %2053 = vmatpush1.msra.mxu0 0.0
      %2054 = vmatprep.subr.mxu0 0.0
      %2055 = vmatpush1.msra.mxu0 0.0
      %2056 = vmatprep.subr.mxu0 0.0
      %2057 = vmatpush1.msra.mxu0 0.0
      %2058 = vmatprep.subr.mxu0 0.0
      %2059 = vmatpush1.msra.mxu0 0.0
      %2060 = vmatprep.subr.mxu0 0.0
      %2061 = vmatpush1.msra.mxu0 0.0
      %2062 = vmatprep.subr.mxu0 0.0
      %2063 = vmatpush1.msra.mxu0 0.0
      %2064 = vmatprep.subr.mxu0 0.0
      %2065 = vmatpush1.msra.mxu0 0.0
      %2066 = vmatprep.subr.mxu0 0.0
      %2067 = vmatpush1.msra.mxu0 0.0
      %2068 = vmatprep.subr.mxu0 0.0
      %2069 = vmatpush1.msra.mxu0 0.0
      %2070 = vmatprep.subr.mxu0 0.0
      %2071 = vmatpush1.msra.mxu0 0.0
      %2072 = vmatprep.subr.mxu0 0.0
      %2073 = vmatpush1.msra.mxu0 0.0
      %2074 = vmatprep.subr.mxu0 0.0
      %2075 = vmatpush1.msra.mxu0 0.0
      %2076 = vmatprep.subr.mxu0 0.0
      %2077 = vmatpush1.msra.mxu0 0.0
      %2078 = vmatprep.subr.mxu0 0.0
      %2079 = vmatpush1.msra.mxu0 0.0
      %2080 = vmatprep.subr.mxu0 0.0
      %2081 = vmatpush1.msra.mxu0 0.0
      %2082 = vmatprep.subr.mxu0 0.0
      %2083 = vmatpush1.msra.mxu0 0.0
      %2084 = vmatprep.subr.mxu0 0.0
      %2085 = vmatpush1.msra.mxu0 0.0
      %2086 = vmatprep.subr.mxu0 0.0
      %2087 = vmatpush1.msra.mxu0 0.0
      %2088 = vmatprep.subr.mxu0 0.0
      %2089 = vmatpush1.msra.mxu0 0.0
      %2090 = vmatprep.subr.mxu0 0.0
      %2091 = vmatpush1.msra.mxu0 0.0
      %2092 = vmatprep.subr.mxu0 0.0
      %2093 = vmatpush1.msra.mxu0 0.0
      %2094 = vmatprep.subr.mxu0 0.0
      %2095 = vmatpush1.msra.mxu0 0.0
      %2096 = vmatprep.subr.mxu0 0.0
      %2097 = vmatpush1.msra.mxu0 0.0
      %2098 = vmatprep.mubr.f32.mxu0 0.0
      %2099 = vmatmul.mubr.f32.gmra.mrb[0].mxu0 %v2029
      %v2100 = vpop.f32.mrb[0].mxu0
      %v2101 = vadd.f32 %v2026, %v2100
      %v2102 = vpop.f32.mrb[0].mxu0
      %2103 = vmatprep.mubr.f32.mxu0 0.0
      %2104 = vmatmul.mubr.f32.gmra.mrb[0].mxu0 %v2032
      %v2105 = vpop.f32.mrb[0].mxu0
      %v2106 = vadd.f32 %v2026, %v2105
      %v2107 = vpop.f32.mrb[0].mxu0
      %2108 = vdwg.mxu0
      %v2109 = vadd.f32 %v1059, %v2101
      %v2110 = vadd.f32 %v1064, %v2106
      %v2111 = vld [vmem:[%s14] sm:$0x1]
      %v2112 = vld [vmem:[%s15] sm:$0x1]
      %v2113 = vsel %vm985, %v2109, 0.0
      %2114 = vadd.xlane.f32.xlu0 %v2113
      %v2115 = vpop.xlane.xlu0 %2114
      %vm2116 = vcmask 257024
      %v2117 = vsel %vm2116, %v2110, 0.0
      %2118 = vadd.xlane.f32.xlu0 %v2117
      %v2119 = vpop.xlane.xlu0 %2118
      %v2120 = vrcp.pop 32.0
      %v2121 = vmul.f32 %v2115, %v2120
      %v2122 = vmul.f32 %v2119, %v2120
      %v2123 = vsub.f32 %v2109, %v2121
      %v2124 = vsub.f32 %v2110, %v2122
      %v2125 = vmul.f32 %v2123, %v2123
      %v2126 = vmul.f32 %v2124, %v2124
      %v2127 = vsel %vm985, %v2125, 0.0
      %2128 = vadd.xlane.f32.xlu0 %v2127
      %v2129 = vpop.xlane.xlu0 %2128
      %v2130 = vsel %vm2116, %v2126, 0.0
      %2131 = vadd.xlane.f32.xlu0 %v2130
      %v2132 = vpop.xlane.xlu0 %2131
      %v2133 = vmul.f32 %v2129, %v2120
      %v2134 = vmul.f32 %v2132, %v2120
      %v2135 = vadd.f32 %v2133, 1e-05
      %v2136 = vadd.f32 %v2134, 1e-05
      %v2137 = vrsqrt.pop %v2135
      %v2138 = vrsqrt.pop %v2136
      %v2139 = vmul.f32 %v2123, %v2137
      %v2140 = vmul.f32 %v2124, %v2138
      %v2142 = vlaneseq
      %v2143 = vshrl.u32 %v2142, 7
      %v2144 = vsub.s32 0, %v2143
      %v2145 = vrot.slane %v2111, %v2144
      %v2147 = vmul.f32 %v2139, %v2145
      %v2148 = vmul.f32 %v2140, %v2145
      %v2150 = vlaneseq
      %v2151 = vshrl.u32 %v2150, 7
      %v2152 = vsub.s32 0, %v2151
      %v2153 = vrot.slane %v2112, %v2152
      %v2155 = vadd.f32 %v2147, %v2153
      %v2156 = vadd.f32 %v2148, %v2153
      %v2157 = vld [vmem:[%s16] sm:$0xff]
      %v2158 = vld [vmem:[%s16 + $0x8] sm:$0xff]
      %v2159 = vld [vmem:[%s16 + $0x10] sm:$0xff]
      %v2160 = vld [vmem:[%s16 + $0x18] sm:$0xff]
      %v2161 = vld [vmem:[%s17] sm:$0x1]
      %v2163 = vlaneseq
      %v2164 = vshrl.u32 %v2163, 7
      %v2165 = vsub.s32 0, %v2164
      %v2166 = vrot.slane %v2161, %v2165
      %v2169 = vsel %vm985, %v2155, 0
      %v2172 = vsel %vm985, %v2156, 0
      %2174 = vmatprep.subr.mxu0 0.0
      %2175 = vmatpush1.msra.mxu0 %v2157
      %2176 = vmatprep.subr.mxu0 0.0
      %2177 = vmatpush1.msra.mxu0 %v2158
      %2178 = vmatprep.subr.mxu0 0.0
      %2179 = vmatpush1.msra.mxu0 %v2159
      %2180 = vmatprep.subr.mxu0 0.0
      %2181 = vmatpush1.msra.mxu0 %v2160
      %2182 = vmatprep.subr.mxu0 0.0
      %2183 = vmatpush1.msra.mxu0 0.0
      %2184 = vmatprep.subr.mxu0 0.0
      %2185 = vmatpush1.msra.mxu0 0.0
      %2186 = vmatprep.subr.mxu0 0.0
      %2187 = vmatpush1.msra.mxu0 0.0
      %2188 = vmatprep.subr.mxu0 0.0
      %2189 = vmatpush1.msra.mxu0 0.0
      %2190 = vmatprep.subr.mxu0 0.0
      %2191 = vmatpush1.msra.mxu0 0.0
      %2192 = vmatprep.subr.mxu0 0.0
      %2193 = vmatpush1.msra.mxu0 0.0
      %2194 = vmatprep.subr.mxu0 0.0
      %2195 = vmatpush1.msra.mxu0 0.0
      %2196 = vmatprep.subr.mxu0 0.0
      %2197 = vmatpush1.msra.mxu0 0.0
      %2198 = vmatprep.subr.mxu0 0.0
      %2199 = vmatpush1.msra.mxu0 0.0
      %2200 = vmatprep.subr.mxu0 0.0
      %2201 = vmatpush1.msra.mxu0 0.0
      %2202 = vmatprep.subr.mxu0 0.0
      %2203 = vmatpush1.msra.mxu0 0.0
      %2204 = vmatprep.subr.mxu0 0.0
      %2205 = vmatpush1.msra.mxu0 0.0
      %2206 = vmatprep.subr.mxu0 0.0
      %2207 = vmatpush1.msra.mxu0 0.0
      %2208 = vmatprep.subr.mxu0 0.0
      %2209 = vmatpush1.msra.mxu0 0.0
      %2210 = vmatprep.subr.mxu0 0.0
      %2211 = vmatpush1.msra.mxu0 0.0
      %2212 = vmatprep.subr.mxu0 0.0
      %2213 = vmatpush1.msra.mxu0 0.0
      %2214 = vmatprep.subr.mxu0 0.0
      %2215 = vmatpush1.msra.mxu0 0.0
      %2216 = vmatprep.subr.mxu0 0.0
      %2217 = vmatpush1.msra.mxu0 0.0
      %2218 = vmatprep.subr.mxu0 0.0
      %2219 = vmatpush1.msra.mxu0 0.0
      %2220 = vmatprep.subr.mxu0 0.0
      %2221 = vmatpush1.msra.mxu0 0.0
      %2222 = vmatprep.subr.mxu0 0.0
      %2223 = vmatpush1.msra.mxu0 0.0
      %2224 = vmatprep.subr.mxu0 0.0
      %2225 = vmatpush1.msra.mxu0 0.0
      %2226 = vmatprep.subr.mxu0 0.0
      %2227 = vmatpush1.msra.mxu0 0.0
      %2228 = vmatprep.subr.mxu0 0.0
      %2229 = vmatpush1.msra.mxu0 0.0
      %2230 = vmatprep.subr.mxu0 0.0
      %2231 = vmatpush1.msra.mxu0 0.0
      %2232 = vmatprep.subr.mxu0 0.0
      %2233 = vmatpush1.msra.mxu0 0.0
      %2234 = vmatprep.subr.mxu0 0.0
      %2235 = vmatpush1.msra.mxu0 0.0
      %2236 = vmatprep.subr.mxu0 0.0
      %2237 = vmatpush1.msra.mxu0 0.0
      %2238 = vmatprep.mubr.f32.mxu0 0.0
      %2239 = vmatmul.mubr.f32.gmra.mrb[0].mxu0 %v2169
      %v2240 = vpop.f32.mrb[0].mxu0
      %v2241 = vadd.f32 %v2166, %v2240
      %v2242 = vpop.f32.mrb[0].mxu0
      %2243 = vmatprep.mubr.f32.mxu0 0.0
      %2244 = vmatmul.mubr.f32.gmra.mrb[0].mxu0 %v2172
      %v2245 = vpop.f32.mrb[0].mxu0
      %v2246 = vadd.f32 %v2166, %v2245
      %v2247 = vpop.f32.mrb[0].mxu0
      %2248 = vdwg.mxu0
      %v2249 = vmax.f32 %v2241, 0.0
      %v2250 = vmax.f32 %v2246, 0.0
      %v2251 = vld [vmem:[%s18] sm:$0xff]
      %v2252 = vld [vmem:[%s18 + $0x8] sm:$0xff]
      %v2253 = vld [vmem:[%s18 + $0x10] sm:$0xff]
      %v2254 = vld [vmem:[%s18 + $0x18] sm:$0xff]
      %v2255 = vld [vmem:[%s18 + $0x20] sm:$0xff]
      %v2256 = vld [vmem:[%s18 + $0x28] sm:$0xff]
      %v2257 = vld [vmem:[%s18 + $0x30] sm:$0xff]
      %v2258 = vld [vmem:[%s18 + $0x38] sm:$0xff]
      %v2259 = vld [vmem:[%s19] sm:$0x1]
      %v2261 = vlaneseq
      %v2262 = vshrl.u32 %v2261, 7
      %v2263 = vsub.s32 0, %v2262
      %v2264 = vrot.slane %v2259, %v2263
      %vm2266 = vcmask 523264
      %v2268 = vsel %vm2266, %v2249, 0
      %v2271 = vsel %vm2266, %v2250, 0
      %2273 = vmatprep.subr.mxu0 0.0
      %2274 = vmatpush1.msra.mxu0 %v2251
      %2275 = vmatprep.subr.mxu0 0.0
      %2276 = vmatpush1.msra.mxu0 %v2252
      %2277 = vmatprep.subr.mxu0 0.0
      %2278 = vmatpush1.msra.mxu0 %v2253
      %2279 = vmatprep.subr.mxu0 0.0
      %2280 = vmatpush1.msra.mxu0 %v2254
      %2281 = vmatprep.subr.mxu0 0.0
      %2282 = vmatpush1.msra.mxu0 %v2255
      %2283 = vmatprep.subr.mxu0 0.0
      %2284 = vmatpush1.msra.mxu0 %v2256
      %2285 = vmatprep.subr.mxu0 0.0
      %2286 = vmatpush1.msra.mxu0 %v2257
      %2287 = vmatprep.subr.mxu0 0.0
      %2288 = vmatpush1.msra.mxu0 %v2258
      %2289 = vmatprep.subr.mxu0 0.0
      %2290 = vmatpush1.msra.mxu0 0.0
      %2291 = vmatprep.subr.mxu0 0.0
      %2292 = vmatpush1.msra.mxu0 0.0
      %2293 = vmatprep.subr.mxu0 0.0
      %2294 = vmatpush1.msra.mxu0 0.0
      %2295 = vmatprep.subr.mxu0 0.0
      %2296 = vmatpush1.msra.mxu0 0.0
      %2297 = vmatprep.subr.mxu0 0.0
      %2298 = vmatpush1.msra.mxu0 0.0
      %2299 = vmatprep.subr.mxu0 0.0
      %2300 = vmatpush1.msra.mxu0 0.0
      %2301 = vmatprep.subr.mxu0 0.0
      %2302 = vmatpush1.msra.mxu0 0.0
      %2303 = vmatprep.subr.mxu0 0.0
      %2304 = vmatpush1.msra.mxu0 0.0
      %2305 = vmatprep.subr.mxu0 0.0
      %2306 = vmatpush1.msra.mxu0 0.0
      %2307 = vmatprep.subr.mxu0 0.0
      %2308 = vmatpush1.msra.mxu0 0.0
      %2309 = vmatprep.subr.mxu0 0.0
      %2310 = vmatpush1.msra.mxu0 0.0
      %2311 = vmatprep.subr.mxu0 0.0
      %2312 = vmatpush1.msra.mxu0 0.0
      %2313 = vmatprep.subr.mxu0 0.0
      %2314 = vmatpush1.msra.mxu0 0.0
      %2315 = vmatprep.subr.mxu0 0.0
      %2316 = vmatpush1.msra.mxu0 0.0
      %2317 = vmatprep.subr.mxu0 0.0
      %2318 = vmatpush1.msra.mxu0 0.0
      %2319 = vmatprep.subr.mxu0 0.0
      %2320 = vmatpush1.msra.mxu0 0.0
      %2321 = vmatprep.subr.mxu0 0.0
      %2322 = vmatpush1.msra.mxu0 0.0
      %2323 = vmatprep.subr.mxu0 0.0
      %2324 = vmatpush1.msra.mxu0 0.0
      %2325 = vmatprep.subr.mxu0 0.0
      %2326 = vmatpush1.msra.mxu0 0.0
      %2327 = vmatprep.subr.mxu0 0.0
      %2328 = vmatpush1.msra.mxu0 0.0
      %2329 = vmatprep.subr.mxu0 0.0
      %2330 = vmatpush1.msra.mxu0 0.0
      %2331 = vmatprep.subr.mxu0 0.0
      %2332 = vmatpush1.msra.mxu0 0.0
      %2333 = vmatprep.subr.mxu0 0.0
      %2334 = vmatpush1.msra.mxu0 0.0
      %2335 = vmatprep.subr.mxu0 0.0
      %2336 = vmatpush1.msra.mxu0 0.0
      %2337 = vmatprep.mubr.f32.mxu0 0.0
      %2338 = vmatmul.mubr.f32.gmra.mrb[0].mxu0 %v2268
      %v2339 = vpop.f32.mrb[0].mxu0
      %v2340 = vadd.f32 %v2264, %v2339
      %v2341 = vpop.f32.mrb[0].mxu0
      %2342 = vmatprep.mubr.f32.mxu0 0.0
      %2343 = vmatmul.mubr.f32.gmra.mrb[0].mxu0 %v2271
      %v2344 = vpop.f32.mrb[0].mxu0
      %v2345 = vadd.f32 %v2264, %v2344
      %v2346 = vpop.f32.mrb[0].mxu0
      %2347 = vdwg.mxu0
      %v2348 = vadd.f32 %v2155, %v2340
      %v2349 = vadd.f32 %v2156, %v2345
      %v2350 = vld [vmem:[%s20] sm:$0x1]
      %v2351 = vld [vmem:[%s21] sm:$0x1]
      %v2352 = vsel %vm985, %v2348, 0.0
      %2353 = vadd.xlane.f32.xlu0 %v2352
      %v2354 = vpop.xlane.xlu0 %2353
      %v2355 = vsel %vm2116, %v2349, 0.0
      %2356 = vadd.xlane.f32.xlu0 %v2355
      %v2357 = vpop.xlane.xlu0 %2356
      %v2358 = vmul.f32 %v2354, %v2120
      %v2359 = vmul.f32 %v2357, %v2120
      %v2360 = vsub.f32 %v2348, %v2358
      %v2361 = vsub.f32 %v2349, %v2359
      %v2362 = vmul.f32 %v2360, %v2360
      %v2363 = vmul.f32 %v2361, %v2361
      %v2364 = vsel %vm985, %v2362, 0.0
      %2365 = vadd.xlane.f32.xlu0 %v2364
      %v2366 = vpop.xlane.xlu0 %2365
      %v2367 = vsel %vm2116, %v2363, 0.0
      %2368 = vadd.xlane.f32.xlu0 %v2367
      %v2369 = vpop.xlane.xlu0 %2368
      %v2370 = vmul.f32 %v2366, %v2120
      %v2371 = vmul.f32 %v2369, %v2120
      %v2372 = vadd.f32 %v2370, 1e-05
      %v2373 = vadd.f32 %v2371, 1e-05
      %v2374 = vrsqrt.pop %v2372
      %v2375 = vrsqrt.pop %v2373
      %v2376 = vmul.f32 %v2360, %v2374
      %v2377 = vmul.f32 %v2361, %v2375
      %v2379 = vlaneseq
      %v2380 = vshrl.u32 %v2379, 7
      %v2381 = vsub.s32 0, %v2380
      %v2382 = vrot.slane %v2350, %v2381
      %v2384 = vmul.f32 %v2376, %v2382
      %v2385 = vmul.f32 %v2377, %v2382
      %v2387 = vlaneseq
      %v2388 = vshrl.u32 %v2387, 7
      %v2389 = vsub.s32 0, %v2388
      %v2390 = vrot.slane %v2351, %v2389
      %v2392 = vadd.f32 %v2384, %v2390
      %v2393 = vadd.f32 %v2385, %v2390
      %s2394 = scalar_lea.vmem %s10, 32
      %v2395 = vld [vmem:[%s2394] sm:$0xff]
      %v2396 = vld [vmem:[%s2394 + $0x8] sm:$0xff]
      %v2397 = vld [vmem:[%s2394 + $0x10] sm:$0xff]
      %v2398 = vld [vmem:[%s2394 + $0x18] sm:$0xff]
      %s2399 = scalar_lea.vmem %s11, 1
      %v2400 = vld [vmem:[%s2399] sm:$0x1]
      %v2402 = vlaneseq
      %v2403 = vshrl.u32 %v2402, 7
      %v2404 = vsub.s32 0, %v2403
      %v2405 = vrot.slane %v2400, %v2404
      %v2408 = vsel %vm985, %v2392, 0
      %v2411 = vsel %vm985, %v2393, 0
      %2413 = vmatprep.subr.mxu0 0.0
      %2414 = vmatpush1.msra.mxu0 %v2395
      %2415 = vmatprep.subr.mxu0 0.0
      %2416 = vmatpush1.msra.mxu0 %v2396
      %2417 = vmatprep.subr.mxu0 0.0
      %2418 = vmatpush1.msra.mxu0 %v2397
      %2419 = vmatprep.subr.mxu0 0.0
      %2420 = vmatpush1.msra.mxu0 %v2398
      %2421 = vmatprep.subr.mxu0 0.0
      %2422 = vmatpush1.msra.mxu0 0.0
      %2423 = vmatprep.subr.mxu0 0.0
      %2424 = vmatpush1.msra.mxu0 0.0
      %2425 = vmatprep.subr.mxu0 0.0
      %2426 = vmatpush1.msra.mxu0 0.0
      %2427 = vmatprep.subr.mxu0 0.0
      %2428 = vmatpush1.msra.mxu0 0.0
      %2429 = vmatprep.subr.mxu0 0.0
      %2430 = vmatpush1.msra.mxu0 0.0
      %2431 = vmatprep.subr.mxu0 0.0
      %2432 = vmatpush1.msra.mxu0 0.0
      %2433 = vmatprep.subr.mxu0 0.0
      %2434 = vmatpush1.msra.mxu0 0.0
      %2435 = vmatprep.subr.mxu0 0.0
      %2436 = vmatpush1.msra.mxu0 0.0
      %2437 = vmatprep.subr.mxu0 0.0
      %2438 = vmatpush1.msra.mxu0 0.0
      %2439 = vmatprep.subr.mxu0 0.0
      %2440 = vmatpush1.msra.mxu0 0.0
      %2441 = vmatprep.subr.mxu0 0.0
      %2442 = vmatpush1.msra.mxu0 0.0
      %2443 = vmatprep.subr.mxu0 0.0
      %2444 = vmatpush1.msra.mxu0 0.0
      %2445 = vmatprep.subr.mxu0 0.0
      %2446 = vmatpush1.msra.mxu0 0.0
      %2447 = vmatprep.subr.mxu0 0.0
      %2448 = vmatpush1.msra.mxu0 0.0
      %2449 = vmatprep.subr.mxu0 0.0
      %2450 = vmatpush1.msra.mxu0 0.0
      %2451 = vmatprep.subr.mxu0 0.0
      %2452 = vmatpush1.msra.mxu0 0.0
      %2453 = vmatprep.subr.mxu0 0.0
      %2454 = vmatpush1.msra.mxu0 0.0
      %2455 = vmatprep.subr.mxu0 0.0
      %2456 = vmatpush1.msra.mxu0 0.0
      %2457 = vmatprep.subr.mxu0 0.0
      %2458 = vmatpush1.msra.mxu0 0.0
      %2459 = vmatprep.subr.mxu0 0.0
      %2460 = vmatpush1.msra.mxu0 0.0
      %2461 = vmatprep.subr.mxu0 0.0
      %2462 = vmatpush1.msra.mxu0 0.0
      %2463 = vmatprep.subr.mxu0 0.0
      %2464 = vmatpush1.msra.mxu0 0.0
      %2465 = vmatprep.subr.mxu0 0.0
      %2466 = vmatpush1.msra.mxu0 0.0
      %2467 = vmatprep.subr.mxu0 0.0
      %2468 = vmatpush1.msra.mxu0 0.0
      %2469 = vmatprep.subr.mxu0 0.0
      %2470 = vmatpush1.msra.mxu0 0.0
      %2471 = vmatprep.subr.mxu0 0.0
      %2472 = vmatpush1.msra.mxu0 0.0
      %2473 = vmatprep.subr.mxu0 0.0
      %2474 = vmatpush1.msra.mxu0 0.0
      %2475 = vmatprep.subr.mxu0 0.0
      %2476 = vmatpush1.msra.mxu0 0.0
      %2477 = vmatprep.mubr.f32.mxu0 0.0
      %2478 = vmatmul.mubr.f32.gmra.mrb[0].mxu0 %v2408
      %v2479 = vpop.f32.mrb[0].mxu0
      %v2480 = vadd.f32 %v2405, %v2479
      %v2481 = vpop.f32.mrb[0].mxu0
      %2482 = vmatprep.mubr.f32.mxu0 0.0
      %2483 = vmatmul.mubr.f32.gmra.mrb[0].mxu0 %v2411
      %v2484 = vpop.f32.mrb[0].mxu0
      %v2485 = vadd.f32 %v2405, %v2484
      %v2486 = vpop.f32.mrb[0].mxu0
      %2487 = vdwg.mxu0
      %2490 = vrot.lane.b32.xlu0 %v2480, 96
      %v2491 = vpop.permute.xlu0 %2490
      %2492 = vrot.lane.b32.xlu0 %v2485, 96
      %v2493 = vpop.permute.xlu0 %2492
      %v2494 = vsel %vm1165, %v2480, 0
      %v2496 = vsel %vm1165, %v2485, 0
      %v2498 = vsel %vm1165, %v2491, 0
      %v2500 = vsel %vm1165, %v2493, 0
      %2502 = vmatprep.subr.mxu0 0.0
      %2503 = vmatpush1.xpose.msra.mxu0 %v2498
      %2504 = vmatprep.subr.mxu0 0.0
      %2505 = vmatpush1.xpose.msra.mxu0 %v2500
      %2506 = vmatprep.subr.mxu0 0.0
      %2507 = vmatpush1.xpose.msra.mxu0 0.0
      %2508 = vmatprep.subr.mxu0 0.0
      %2509 = vmatpush1.xpose.msra.mxu0 0.0
      %2510 = vmatprep.subr.mxu0 0.0
      %2511 = vmatpush1.xpose.msra.mxu0 0.0
      %2512 = vmatprep.subr.mxu0 0.0
      %2513 = vmatpush1.xpose.msra.mxu0 0.0
      %2514 = vmatprep.subr.mxu0 0.0
      %2515 = vmatpush1.xpose.msra.mxu0 0.0
      %2516 = vmatprep.subr.mxu0 0.0
      %2517 = vmatpush1.xpose.msra.mxu0 0.0
      %2518 = vmatprep.subr.mxu0 0.0
      %2519 = vmatpush1.xpose.msra.mxu0 0.0
      %2520 = vmatprep.subr.mxu0 0.0
      %2521 = vmatpush1.xpose.msra.mxu0 0.0
      %2522 = vmatprep.subr.mxu0 0.0
      %2523 = vmatpush1.xpose.msra.mxu0 0.0
      %2524 = vmatprep.subr.mxu0 0.0
      %2525 = vmatpush1.xpose.msra.mxu0 0.0
      %2526 = vmatprep.subr.mxu0 0.0
      %2527 = vmatpush1.xpose.msra.mxu0 0.0
      %2528 = vmatprep.subr.mxu0 0.0
      %2529 = vmatpush1.xpose.msra.mxu0 0.0
      %2530 = vmatprep.subr.mxu0 0.0
      %2531 = vmatpush1.xpose.msra.mxu0 0.0
      %2532 = vmatprep.subr.mxu0 0.0
      %2533 = vmatpush1.xpose.msra.mxu0 0.0
      %2534 = vmatprep.subr.mxu0 0.0
      %2535 = vmatpush1.xpose.msra.mxu0 0.0
      %2536 = vmatprep.subr.mxu0 0.0
      %2537 = vmatpush1.xpose.msra.mxu0 0.0
      %2538 = vmatprep.subr.mxu0 0.0
      %2539 = vmatpush1.xpose.msra.mxu0 0.0
      %2540 = vmatprep.subr.mxu0 0.0
      %2541 = vmatpush1.xpose.msra.mxu0 0.0
      %2542 = vmatprep.subr.mxu0 0.0
      %2543 = vmatpush1.xpose.msra.mxu0 0.0
      %2544 = vmatprep.subr.mxu0 0.0
      %2545 = vmatpush1.xpose.msra.mxu0 0.0
      %2546 = vmatprep.subr.mxu0 0.0
      %2547 = vmatpush1.xpose.msra.mxu0 0.0
      %2548 = vmatprep.subr.mxu0 0.0
      %2549 = vmatpush1.xpose.msra.mxu0 0.0
      %2550 = vmatprep.subr.mxu0 0.0
      %2551 = vmatpush1.xpose.msra.mxu0 0.0
      %2552 = vmatprep.subr.mxu0 0.0
      %2553 = vmatpush1.xpose.msra.mxu0 0.0
      %2554 = vmatprep.subr.mxu0 0.0
      %2555 = vmatpush1.xpose.msra.mxu0 0.0
      %2556 = vmatprep.subr.mxu0 0.0
      %2557 = vmatpush1.xpose.msra.mxu0 0.0
      %2558 = vmatprep.subr.mxu0 0.0
      %2559 = vmatpush1.xpose.msra.mxu0 0.0
      %2560 = vmatprep.subr.mxu0 0.0
      %2561 = vmatpush1.xpose.msra.mxu0 0.0
      %2562 = vmatprep.subr.mxu0 0.0
      %2563 = vmatpush1.xpose.msra.mxu0 0.0
      %2564 = vmatprep.subr.mxu0 0.0
      %2565 = vmatpush1.xpose.msra.mxu0 0.0
      %2566 = vmatprep.mubr.f32.mxu0 0.0
      %2567 = vmatmul.mubr.f32.gmra.mrb[0].mxu0 %v2494
      %v2568 = vpop.f32.mrb[0].mxu0
      %v2569 = vadd.f32 0.0, %v2568
      %v2570 = vpop.f32.mrb[0].mxu0
      %2571 = vmatprep.mubr.f32.mxu0 0.0
      %2572 = vmatmul.mubr.f32.gmra.mrb[0].mxu0 %v2496
      %v2573 = vpop.f32.mrb[0].mxu0
      %v2574 = vadd.f32 0.0, %v2573
      %v2575 = vpop.f32.mrb[0].mxu0
      %2576 = vdwg.mxu0
      %v2577 = vmul.f32 %v2569, 0.35355338
      %v2578 = vmul.f32 %v2574, 0.35355338
      %v2579 = vadd.f32 %v2577, %v1254
      %v2580 = vadd.f32 %v2578, %v1254
      %v2581 = vsel %vm1257, %v2579, -inf
      %2582 = vmax.xlane.f32.xlu0 %v2581
      %v2583 = vpop.xlane.xlu0 %2582
      %v2584 = vsel %vm1261, %v2580, -inf
      %2585 = vmax.xlane.f32.xlu0 %v2584
      %v2586 = vpop.xlane.xlu0 %2585
      %v2587 = vsub.f32 %v2579, %v2583
      %v2588 = vsub.f32 %v2580, %v2586
      %v2589 = vmul.f32 %v2587, 1.442695
      %v2590 = vpow.pop %v2589
      %v2591 = vmul.f32 %v2588, 1.442695
      %v2592 = vpow.pop %v2591
      %v2593 = vsel %vm1257, %v2590, 0.0
      %2594 = vadd.xlane.f32.xlu0 %v2593
      %v2595 = vpop.xlane.xlu0 %2594
      %v2596 = vsel %vm1261, %v2592, 0.0
      %2597 = vadd.xlane.f32.xlu0 %v2596
      %v2598 = vpop.xlane.xlu0 %2597
      %v2599 = vrcp.pop %v2595
      %v2600 = vrcp.pop %v2598
      %v2601 = vmul.f32 %v2590, %v2599
      %v2602 = vmul.f32 %v2592, %v2600
      %2603 = vrot.lane.b32.xlu0 %v2480, 64
      %v2604 = vpop.permute.xlu0 %2603
      %2605 = vrot.lane.b32.xlu0 %v2485, 64
      %v2606 = vpop.permute.xlu0 %2605
      %v2609 = vsel %vm1257, %v2601, 0
      %v2612 = vsel %vm1257, %v2602, 0
      %v2614 = vsel %vm1292, %v2606, 0
      %2616 = vmatprep.subr.mxu0 0.0
      %2617 = vmatpush1.msra.mxu0 %v2604
      %2618 = vmatprep.subr.mxu0 0.0
      %2619 = vmatpush1.msra.mxu0 %v2614
      %2620 = vmatprep.subr.mxu0 0.0
      %2621 = vmatpush1.msra.mxu0 0.0
      %2622 = vmatprep.subr.mxu0 0.0
      %2623 = vmatpush1.msra.mxu0 0.0
      %2624 = vmatprep.subr.mxu0 0.0
      %2625 = vmatpush1.msra.mxu0 0.0
      %2626 = vmatprep.subr.mxu0 0.0
      %2627 = vmatpush1.msra.mxu0 0.0
      %2628 = vmatprep.subr.mxu0 0.0
      %2629 = vmatpush1.msra.mxu0 0.0
      %2630 = vmatprep.subr.mxu0 0.0
      %2631 = vmatpush1.msra.mxu0 0.0
      %2632 = vmatprep.subr.mxu0 0.0
      %2633 = vmatpush1.msra.mxu0 0.0
      %2634 = vmatprep.subr.mxu0 0.0
      %2635 = vmatpush1.msra.mxu0 0.0
      %2636 = vmatprep.subr.mxu0 0.0
      %2637 = vmatpush1.msra.mxu0 0.0
      %2638 = vmatprep.subr.mxu0 0.0
      %2639 = vmatpush1.msra.mxu0 0.0
      %2640 = vmatprep.subr.mxu0 0.0
      %2641 = vmatpush1.msra.mxu0 0.0
      %2642 = vmatprep.subr.mxu0 0.0
      %2643 = vmatpush1.msra.mxu0 0.0
      %2644 = vmatprep.subr.mxu0 0.0
      %2645 = vmatpush1.msra.mxu0 0.0
      %2646 = vmatprep.subr.mxu0 0.0
      %2647 = vmatpush1.msra.mxu0 0.0
      %2648 = vmatprep.subr.mxu0 0.0
      %2649 = vmatpush1.msra.mxu0 0.0
      %2650 = vmatprep.subr.mxu0 0.0
      %2651 = vmatpush1.msra.mxu0 0.0
      %2652 = vmatprep.subr.mxu0 0.0
      %2653 = vmatpush1.msra.mxu0 0.0
      %2654 = vmatprep.subr.mxu0 0.0
      %2655 = vmatpush1.msra.mxu0 0.0
      %2656 = vmatprep.subr.mxu0 0.0
      %2657 = vmatpush1.msra.mxu0 0.0
      %2658 = vmatprep.subr.mxu0 0.0
      %2659 = vmatpush1.msra.mxu0 0.0
      %2660 = vmatprep.subr.mxu0 0.0
      %2661 = vmatpush1.msra.mxu0 0.0
      %2662 = vmatprep.subr.mxu0 0.0
      %2663 = vmatpush1.msra.mxu0 0.0
      %2664 = vmatprep.subr.mxu0 0.0
      %2665 = vmatpush1.msra.mxu0 0.0
      %2666 = vmatprep.subr.mxu0 0.0
      %2667 = vmatpush1.msra.mxu0 0.0
      %2668 = vmatprep.subr.mxu0 0.0
      %2669 = vmatpush1.msra.mxu0 0.0
      %2670 = vmatprep.subr.mxu0 0.0
      %2671 = vmatpush1.msra.mxu0 0.0
      %2672 = vmatprep.subr.mxu0 0.0
      %2673 = vmatpush1.msra.mxu0 0.0
      %2674 = vmatprep.subr.mxu0 0.0
      %2675 = vmatpush1.msra.mxu0 0.0
      %2676 = vmatprep.subr.mxu0 0.0
      %2677 = vmatpush1.msra.mxu0 0.0
      %2678 = vmatprep.subr.mxu0 0.0
      %2679 = vmatpush1.msra.mxu0 0.0
      %2680 = vmatprep.mubr.f32.mxu0 0.0
      %2681 = vmatmul.mubr.f32.gmra.mrb[0].mxu0 %v2609
      %v2682 = vpop.f32.mrb[0].mxu0
      %v2683 = vadd.f32 0.0, %v2682
      %v2684 = vpop.f32.mrb[0].mxu0
      %2685 = vmatprep.mubr.f32.mxu0 0.0
      %2686 = vmatmul.mubr.f32.gmra.mrb[0].mxu0 %v2612
      %v2687 = vpop.f32.mrb[0].mxu0
      %v2688 = vadd.f32 0.0, %v2687
      %v2689 = vpop.f32.mrb[0].mxu0
      %2690 = vdwg.mxu0
      %2691 = vrot.lane.b32.xlu0 %v2480, 120
      %v2692 = vpop.permute.xlu0 %2691
      %2693 = vrot.lane.b32.xlu0 %v2485, 120
      %v2694 = vpop.permute.xlu0 %2693
      %2695 = vrot.lane.b32.xlu0 %v2480, 88
      %v2696 = vpop.permute.xlu0 %2695
      %2697 = vrot.lane.b32.xlu0 %v2485, 88
      %v2698 = vpop.permute.xlu0 %2697
      %v2699 = vsel %vm1165, %v2692, 0
      %v2701 = vsel %vm1165, %v2694, 0
      %v2703 = vsel %vm1165, %v2696, 0
      %v2705 = vsel %vm1165, %v2698, 0
      %2707 = vmatprep.subr.mxu0 0.0
      %2708 = vmatpush1.xpose.msra.mxu0 %v2703
      %2709 = vmatprep.subr.mxu0 0.0
      %2710 = vmatpush1.xpose.msra.mxu0 %v2705
      %2711 = vmatprep.subr.mxu0 0.0
      %2712 = vmatpush1.xpose.msra.mxu0 0.0
      %2713 = vmatprep.subr.mxu0 0.0
      %2714 = vmatpush1.xpose.msra.mxu0 0.0
      %2715 = vmatprep.subr.mxu0 0.0
      %2716 = vmatpush1.xpose.msra.mxu0 0.0
      %2717 = vmatprep.subr.mxu0 0.0
      %2718 = vmatpush1.xpose.msra.mxu0 0.0
      %2719 = vmatprep.subr.mxu0 0.0
      %2720 = vmatpush1.xpose.msra.mxu0 0.0
      %2721 = vmatprep.subr.mxu0 0.0
      %2722 = vmatpush1.xpose.msra.mxu0 0.0
      %2723 = vmatprep.subr.mxu0 0.0
      %2724 = vmatpush1.xpose.msra.mxu0 0.0
      %2725 = vmatprep.subr.mxu0 0.0
      %2726 = vmatpush1.xpose.msra.mxu0 0.0
      %2727 = vmatprep.subr.mxu0 0.0
      %2728 = vmatpush1.xpose.msra.mxu0 0.0
      %2729 = vmatprep.subr.mxu0 0.0
      %2730 = vmatpush1.xpose.msra.mxu0 0.0
      %2731 = vmatprep.subr.mxu0 0.0
      %2732 = vmatpush1.xpose.msra.mxu0 0.0
      %2733 = vmatprep.subr.mxu0 0.0
      %2734 = vmatpush1.xpose.msra.mxu0 0.0
      %2735 = vmatprep.subr.mxu0 0.0
      %2736 = vmatpush1.xpose.msra.mxu0 0.0
      %2737 = vmatprep.subr.mxu0 0.0
      %2738 = vmatpush1.xpose.msra.mxu0 0.0
      %2739 = vmatprep.subr.mxu0 0.0
      %2740 = vmatpush1.xpose.msra.mxu0 0.0
      %2741 = vmatprep.subr.mxu0 0.0
      %2742 = vmatpush1.xpose.msra.mxu0 0.0
      %2743 = vmatprep.subr.mxu0 0.0
      %2744 = vmatpush1.xpose.msra.mxu0 0.0
      %2745 = vmatprep.subr.mxu0 0.0
      %2746 = vmatpush1.xpose.msra.mxu0 0.0
      %2747 = vmatprep.subr.mxu0 0.0
      %2748 = vmatpush1.xpose.msra.mxu0 0.0
      %2749 = vmatprep.subr.mxu0 0.0
      %2750 = vmatpush1.xpose.msra.mxu0 0.0
      %2751 = vmatprep.subr.mxu0 0.0
      %2752 = vmatpush1.xpose.msra.mxu0 0.0
      %2753 = vmatprep.subr.mxu0 0.0
      %2754 = vmatpush1.xpose.msra.mxu0 0.0
      %2755 = vmatprep.subr.mxu0 0.0
      %2756 = vmatpush1.xpose.msra.mxu0 0.0
      %2757 = vmatprep.subr.mxu0 0.0
      %2758 = vmatpush1.xpose.msra.mxu0 0.0
      %2759 = vmatprep.subr.mxu0 0.0
      %2760 = vmatpush1.xpose.msra.mxu0 0.0
      %2761 = vmatprep.subr.mxu0 0.0
      %2762 = vmatpush1.xpose.msra.mxu0 0.0
      %2763 = vmatprep.subr.mxu0 0.0
      %2764 = vmatpush1.xpose.msra.mxu0 0.0
      %2765 = vmatprep.subr.mxu0 0.0
      %2766 = vmatpush1.xpose.msra.mxu0 0.0
      %2767 = vmatprep.subr.mxu0 0.0
      %2768 = vmatpush1.xpose.msra.mxu0 0.0
      %2769 = vmatprep.subr.mxu0 0.0
      %2770 = vmatpush1.xpose.msra.mxu0 0.0
      %2771 = vmatprep.mubr.f32.mxu0 0.0
      %2772 = vmatmul.mubr.f32.gmra.mrb[0].mxu0 %v2699
      %v2773 = vpop.f32.mrb[0].mxu0
      %v2774 = vadd.f32 0.0, %v2773
      %v2775 = vpop.f32.mrb[0].mxu0
      %2776 = vmatprep.mubr.f32.mxu0 0.0
      %2777 = vmatmul.mubr.f32.gmra.mrb[0].mxu0 %v2701
      %v2778 = vpop.f32.mrb[0].mxu0
      %v2779 = vadd.f32 0.0, %v2778
      %v2780 = vpop.f32.mrb[0].mxu0
      %2781 = vdwg.mxu0
      %v2782 = vmul.f32 %v2774, 0.35355338
      %v2783 = vmul.f32 %v2779, 0.35355338
      %v2784 = vadd.f32 %v2782, %v1254
      %v2785 = vadd.f32 %v2783, %v1254
      %v2786 = vsel %vm1257, %v2784, -inf
      %2787 = vmax.xlane.f32.xlu0 %v2786
      %v2788 = vpop.xlane.xlu0 %2787
      %v2789 = vsel %vm1261, %v2785, -inf
      %2790 = vmax.xlane.f32.xlu0 %v2789
      %v2791 = vpop.xlane.xlu0 %2790
      %v2792 = vsub.f32 %v2784, %v2788
      %v2793 = vsub.f32 %v2785, %v2791
      %v2794 = vmul.f32 %v2792, 1.442695
      %v2795 = vpow.pop %v2794
      %v2796 = vmul.f32 %v2793, 1.442695
      %v2797 = vpow.pop %v2796
      %v2798 = vsel %vm1257, %v2795, 0.0
      %2799 = vadd.xlane.f32.xlu0 %v2798
      %v2800 = vpop.xlane.xlu0 %2799
      %v2801 = vsel %vm1261, %v2797, 0.0
      %2802 = vadd.xlane.f32.xlu0 %v2801
      %v2803 = vpop.xlane.xlu0 %2802
      %v2804 = vrcp.pop %v2800
      %v2805 = vrcp.pop %v2803
      %v2806 = vmul.f32 %v2795, %v2804
      %v2807 = vmul.f32 %v2797, %v2805
      %2808 = vrot.lane.b32.xlu0 %v2480, 56
      %v2809 = vpop.permute.xlu0 %2808
      %2810 = vrot.lane.b32.xlu0 %v2485, 56
      %v2811 = vpop.permute.xlu0 %2810
      %v2814 = vsel %vm1257, %v2806, 0
      %v2817 = vsel %vm1257, %v2807, 0
      %v2819 = vsel %vm1292, %v2811, 0
      %2821 = vmatprep.subr.mxu0 0.0
      %2822 = vmatpush1.msra.mxu0 %v2809
      %2823 = vmatprep.subr.mxu0 0.0
      %2824 = vmatpush1.msra.mxu0 %v2819
      %2825 = vmatprep.subr.mxu0 0.0
      %2826 = vmatpush1.msra.mxu0 0.0
      %2827 = vmatprep.subr.mxu0 0.0
      %2828 = vmatpush1.msra.mxu0 0.0
      %2829 = vmatprep.subr.mxu0 0.0
      %2830 = vmatpush1.msra.mxu0 0.0
      %2831 = vmatprep.subr.mxu0 0.0
      %2832 = vmatpush1.msra.mxu0 0.0
      %2833 = vmatprep.subr.mxu0 0.0
      %2834 = vmatpush1.msra.mxu0 0.0
      %2835 = vmatprep.subr.mxu0 0.0
      %2836 = vmatpush1.msra.mxu0 0.0
      %2837 = vmatprep.subr.mxu0 0.0
      %2838 = vmatpush1.msra.mxu0 0.0
      %2839 = vmatprep.subr.mxu0 0.0
      %2840 = vmatpush1.msra.mxu0 0.0
      %2841 = vmatprep.subr.mxu0 0.0
      %2842 = vmatpush1.msra.mxu0 0.0
      %2843 = vmatprep.subr.mxu0 0.0
      %2844 = vmatpush1.msra.mxu0 0.0
      %2845 = vmatprep.subr.mxu0 0.0
      %2846 = vmatpush1.msra.mxu0 0.0
      %2847 = vmatprep.subr.mxu0 0.0
      %2848 = vmatpush1.msra.mxu0 0.0
      %2849 = vmatprep.subr.mxu0 0.0
      %2850 = vmatpush1.msra.mxu0 0.0
      %2851 = vmatprep.subr.mxu0 0.0
      %2852 = vmatpush1.msra.mxu0 0.0
      %2853 = vmatprep.subr.mxu0 0.0
      %2854 = vmatpush1.msra.mxu0 0.0
      %2855 = vmatprep.subr.mxu0 0.0
      %2856 = vmatpush1.msra.mxu0 0.0
      %2857 = vmatprep.subr.mxu0 0.0
      %2858 = vmatpush1.msra.mxu0 0.0
      %2859 = vmatprep.subr.mxu0 0.0
      %2860 = vmatpush1.msra.mxu0 0.0
      %2861 = vmatprep.subr.mxu0 0.0
      %2862 = vmatpush1.msra.mxu0 0.0
      %2863 = vmatprep.subr.mxu0 0.0
      %2864 = vmatpush1.msra.mxu0 0.0
      %2865 = vmatprep.subr.mxu0 0.0
      %2866 = vmatpush1.msra.mxu0 0.0
      %2867 = vmatprep.subr.mxu0 0.0
      %2868 = vmatpush1.msra.mxu0 0.0
      %2869 = vmatprep.subr.mxu0 0.0
      %2870 = vmatpush1.msra.mxu0 0.0
      %2871 = vmatprep.subr.mxu0 0.0
      %2872 = vmatpush1.msra.mxu0 0.0
      %2873 = vmatprep.subr.mxu0 0.0
      %2874 = vmatpush1.msra.mxu0 0.0
      %2875 = vmatprep.subr.mxu0 0.0
      %2876 = vmatpush1.msra.mxu0 0.0
      %2877 = vmatprep.subr.mxu0 0.0
      %2878 = vmatpush1.msra.mxu0 0.0
      %2879 = vmatprep.subr.mxu0 0.0
      %2880 = vmatpush1.msra.mxu0 0.0
      %2881 = vmatprep.subr.mxu0 0.0
      %2882 = vmatpush1.msra.mxu0 0.0
      %2883 = vmatprep.subr.mxu0 0.0
      %2884 = vmatpush1.msra.mxu0 0.0
      %2885 = vmatprep.mubr.f32.mxu0 0.0
      %2886 = vmatmul.mubr.f32.gmra.mrb[0].mxu0 %v2814
      %v2887 = vpop.f32.mrb[0].mxu0
      %v2888 = vadd.f32 0.0, %v2887
      %v2889 = vpop.f32.mrb[0].mxu0
      %2890 = vmatprep.mubr.f32.mxu0 0.0
      %2891 = vmatmul.mubr.f32.gmra.mrb[0].mxu0 %v2817
      %v2892 = vpop.f32.mrb[0].mxu0
      %v2893 = vadd.f32 0.0, %v2892
      %v2894 = vpop.f32.mrb[0].mxu0
      %2895 = vdwg.mxu0
      %2896 = vrot.lane.b32.xlu0 %v2480, 112
      %v2897 = vpop.permute.xlu0 %2896
      %2898 = vrot.lane.b32.xlu0 %v2485, 112
      %v2899 = vpop.permute.xlu0 %2898
      %2900 = vrot.lane.b32.xlu0 %v2480, 80
      %v2901 = vpop.permute.xlu0 %2900
      %2902 = vrot.lane.b32.xlu0 %v2485, 80
      %v2903 = vpop.permute.xlu0 %2902
      %v2904 = vsel %vm1165, %v2897, 0
      %v2906 = vsel %vm1165, %v2899, 0
      %v2908 = vsel %vm1165, %v2901, 0
      %v2910 = vsel %vm1165, %v2903, 0
      %2912 = vmatprep.subr.mxu0 0.0
      %2913 = vmatpush1.xpose.msra.mxu0 %v2908
      %2914 = vmatprep.subr.mxu0 0.0
      %2915 = vmatpush1.xpose.msra.mxu0 %v2910
      %2916 = vmatprep.subr.mxu0 0.0
      %2917 = vmatpush1.xpose.msra.mxu0 0.0
      %2918 = vmatprep.subr.mxu0 0.0
      %2919 = vmatpush1.xpose.msra.mxu0 0.0
      %2920 = vmatprep.subr.mxu0 0.0
      %2921 = vmatpush1.xpose.msra.mxu0 0.0
      %2922 = vmatprep.subr.mxu0 0.0
      %2923 = vmatpush1.xpose.msra.mxu0 0.0
      %2924 = vmatprep.subr.mxu0 0.0
      %2925 = vmatpush1.xpose.msra.mxu0 0.0
      %2926 = vmatprep.subr.mxu0 0.0
      %2927 = vmatpush1.xpose.msra.mxu0 0.0
      %2928 = vmatprep.subr.mxu0 0.0
      %2929 = vmatpush1.xpose.msra.mxu0 0.0
      %2930 = vmatprep.subr.mxu0 0.0
      %2931 = vmatpush1.xpose.msra.mxu0 0.0
      %2932 = vmatprep.subr.mxu0 0.0
      %2933 = vmatpush1.xpose.msra.mxu0 0.0
      %2934 = vmatprep.subr.mxu0 0.0
      %2935 = vmatpush1.xpose.msra.mxu0 0.0
      %2936 = vmatprep.subr.mxu0 0.0
      %2937 = vmatpush1.xpose.msra.mxu0 0.0
      %2938 = vmatprep.subr.mxu0 0.0
      %2939 = vmatpush1.xpose.msra.mxu0 0.0
      %2940 = vmatprep.subr.mxu0 0.0
      %2941 = vmatpush1.xpose.msra.mxu0 0.0
      %2942 = vmatprep.subr.mxu0 0.0
      %2943 = vmatpush1.xpose.msra.mxu0 0.0
      %2944 = vmatprep.subr.mxu0 0.0
      %2945 = vmatpush1.xpose.msra.mxu0 0.0
      %2946 = vmatprep.subr.mxu0 0.0
      %2947 = vmatpush1.xpose.msra.mxu0 0.0
      %2948 = vmatprep.subr.mxu0 0.0
      %2949 = vmatpush1.xpose.msra.mxu0 0.0
      %2950 = vmatprep.subr.mxu0 0.0
      %2951 = vmatpush1.xpose.msra.mxu0 0.0
      %2952 = vmatprep.subr.mxu0 0.0
      %2953 = vmatpush1.xpose.msra.mxu0 0.0
      %2954 = vmatprep.subr.mxu0 0.0
      %2955 = vmatpush1.xpose.msra.mxu0 0.0
      %2956 = vmatprep.subr.mxu0 0.0
      %2957 = vmatpush1.xpose.msra.mxu0 0.0
      %2958 = vmatprep.subr.mxu0 0.0
      %2959 = vmatpush1.xpose.msra.mxu0 0.0
      %2960 = vmatprep.subr.mxu0 0.0
      %2961 = vmatpush1.xpose.msra.mxu0 0.0
      %2962 = vmatprep.subr.mxu0 0.0
      %2963 = vmatpush1.xpose.msra.mxu0 0.0
      %2964 = vmatprep.subr.mxu0 0.0
      %2965 = vmatpush1.xpose.msra.mxu0 0.0
      %2966 = vmatprep.subr.mxu0 0.0
      %2967 = vmatpush1.xpose.msra.mxu0 0.0
      %2968 = vmatprep.subr.mxu0 0.0
      %2969 = vmatpush1.xpose.msra.mxu0 0.0
      %2970 = vmatprep.subr.mxu0 0.0
      %2971 = vmatpush1.xpose.msra.mxu0 0.0
      %2972 = vmatprep.subr.mxu0 0.0
      %2973 = vmatpush1.xpose.msra.mxu0 0.0
      %2974 = vmatprep.subr.mxu0 0.0
      %2975 = vmatpush1.xpose.msra.mxu0 0.0
      %2976 = vmatprep.mubr.f32.mxu0 0.0
      %2977 = vmatmul.mubr.f32.gmra.mrb[0].mxu0 %v2904
      %v2978 = vpop.f32.mrb[0].mxu0
      %v2979 = vadd.f32 0.0, %v2978
      %v2980 = vpop.f32.mrb[0].mxu0
      %2981 = vmatprep.mubr.f32.mxu0 0.0
      %2982 = vmatmul.mubr.f32.gmra.mrb[0].mxu0 %v2906
      %v2983 = vpop.f32.mrb[0].mxu0
      %v2984 = vadd.f32 0.0, %v2983
      %v2985 = vpop.f32.mrb[0].mxu0
      %2986 = vdwg.mxu0
      %v2987 = vmul.f32 %v2979, 0.35355338
      %v2988 = vmul.f32 %v2984, 0.35355338
      %v2989 = vadd.f32 %v2987, %v1254
      %v2990 = vadd.f32 %v2988, %v1254
      %v2991 = vsel %vm1257, %v2989, -inf
      %2992 = vmax.xlane.f32.xlu0 %v2991
      %v2993 = vpop.xlane.xlu0 %2992
      %v2994 = vsel %vm1261, %v2990, -inf
      %2995 = vmax.xlane.f32.xlu0 %v2994
      %v2996 = vpop.xlane.xlu0 %2995
      %v2997 = vsub.f32 %v2989, %v2993
      %v2998 = vsub.f32 %v2990, %v2996
      %v2999 = vmul.f32 %v2997, 1.442695
      %v3000 = vpow.pop %v2999
      %v3001 = vmul.f32 %v2998, 1.442695
      %v3002 = vpow.pop %v3001
      %v3003 = vsel %vm1257, %v3000, 0.0
      %3004 = vadd.xlane.f32.xlu0 %v3003
      %v3005 = vpop.xlane.xlu0 %3004
      %v3006 = vsel %vm1261, %v3002, 0.0
      %3007 = vadd.xlane.f32.xlu0 %v3006
      %v3008 = vpop.xlane.xlu0 %3007
      %v3009 = vrcp.pop %v3005
      %v3010 = vrcp.pop %v3008
      %v3011 = vmul.f32 %v3000, %v3009
      %v3012 = vmul.f32 %v3002, %v3010
      %3013 = vrot.lane.b32.xlu0 %v2480, 48
      %v3014 = vpop.permute.xlu0 %3013
      %3015 = vrot.lane.b32.xlu0 %v2485, 48
      %v3016 = vpop.permute.xlu0 %3015
      %v3019 = vsel %vm1257, %v3011, 0
      %v3022 = vsel %vm1257, %v3012, 0
      %v3024 = vsel %vm1292, %v3016, 0
      %3026 = vmatprep.subr.mxu0 0.0
      %3027 = vmatpush1.msra.mxu0 %v3014
      %3028 = vmatprep.subr.mxu0 0.0
      %3029 = vmatpush1.msra.mxu0 %v3024
      %3030 = vmatprep.subr.mxu0 0.0
      %3031 = vmatpush1.msra.mxu0 0.0
      %3032 = vmatprep.subr.mxu0 0.0
      %3033 = vmatpush1.msra.mxu0 0.0
      %3034 = vmatprep.subr.mxu0 0.0
      %3035 = vmatpush1.msra.mxu0 0.0
      %3036 = vmatprep.subr.mxu0 0.0
      %3037 = vmatpush1.msra.mxu0 0.0
      %3038 = vmatprep.subr.mxu0 0.0
      %3039 = vmatpush1.msra.mxu0 0.0
      %3040 = vmatprep.subr.mxu0 0.0
      %3041 = vmatpush1.msra.mxu0 0.0
      %3042 = vmatprep.subr.mxu0 0.0
      %3043 = vmatpush1.msra.mxu0 0.0
      %3044 = vmatprep.subr.mxu0 0.0
      %3045 = vmatpush1.msra.mxu0 0.0
      %3046 = vmatprep.subr.mxu0 0.0
      %3047 = vmatpush1.msra.mxu0 0.0
      %3048 = vmatprep.subr.mxu0 0.0
      %3049 = vmatpush1.msra.mxu0 0.0
      %3050 = vmatprep.subr.mxu0 0.0
      %3051 = vmatpush1.msra.mxu0 0.0
      %3052 = vmatprep.subr.mxu0 0.0
      %3053 = vmatpush1.msra.mxu0 0.0
      %3054 = vmatprep.subr.mxu0 0.0
      %3055 = vmatpush1.msra.mxu0 0.0
      %3056 = vmatprep.subr.mxu0 0.0
      %3057 = vmatpush1.msra.mxu0 0.0
      %3058 = vmatprep.subr.mxu0 0.0
      %3059 = vmatpush1.msra.mxu0 0.0
      %3060 = vmatprep.subr.mxu0 0.0
      %3061 = vmatpush1.msra.mxu0 0.0
      %3062 = vmatprep.subr.mxu0 0.0
      %3063 = vmatpush1.msra.mxu0 0.0
      %3064 = vmatprep.subr.mxu0 0.0
      %3065 = vmatpush1.msra.mxu0 0.0
      %3066 = vmatprep.subr.mxu0 0.0
      %3067 = vmatpush1.msra.mxu0 0.0
      %3068 = vmatprep.subr.mxu0 0.0
      %3069 = vmatpush1.msra.mxu0 0.0
      %3070 = vmatprep.subr.mxu0 0.0
      %3071 = vmatpush1.msra.mxu0 0.0
      %3072 = vmatprep.subr.mxu0 0.0
      %3073 = vmatpush1.msra.mxu0 0.0
      %3074 = vmatprep.subr.mxu0 0.0
      %3075 = vmatpush1.msra.mxu0 0.0
      %3076 = vmatprep.subr.mxu0 0.0
      %3077 = vmatpush1.msra.mxu0 0.0
      %3078 = vmatprep.subr.mxu0 0.0
      %3079 = vmatpush1.msra.mxu0 0.0
      %3080 = vmatprep.subr.mxu0 0.0
      %3081 = vmatpush1.msra.mxu0 0.0
      %3082 = vmatprep.subr.mxu0 0.0
      %3083 = vmatpush1.msra.mxu0 0.0
      %3084 = vmatprep.subr.mxu0 0.0
      %3085 = vmatpush1.msra.mxu0 0.0
      %3086 = vmatprep.subr.mxu0 0.0
      %3087 = vmatpush1.msra.mxu0 0.0
      %3088 = vmatprep.subr.mxu0 0.0
      %3089 = vmatpush1.msra.mxu0 0.0
      %3090 = vmatprep.mubr.f32.mxu0 0.0
      %3091 = vmatmul.mubr.f32.gmra.mrb[0].mxu0 %v3019
      %v3092 = vpop.f32.mrb[0].mxu0
      %v3093 = vadd.f32 0.0, %v3092
      %v3094 = vpop.f32.mrb[0].mxu0
      %3095 = vmatprep.mubr.f32.mxu0 0.0
      %3096 = vmatmul.mubr.f32.gmra.mrb[0].mxu0 %v3022
      %v3097 = vpop.f32.mrb[0].mxu0
      %v3098 = vadd.f32 0.0, %v3097
      %v3099 = vpop.f32.mrb[0].mxu0
      %3100 = vdwg.mxu0
      %3101 = vrot.lane.b32.xlu0 %v2480, 104
      %v3102 = vpop.permute.xlu0 %3101
      %3103 = vrot.lane.b32.xlu0 %v2485, 104
      %v3104 = vpop.permute.xlu0 %3103
      %3105 = vrot.lane.b32.xlu0 %v2480, 72
      %v3106 = vpop.permute.xlu0 %3105
      %3107 = vrot.lane.b32.xlu0 %v2485, 72
      %v3108 = vpop.permute.xlu0 %3107
      %v3109 = vsel %vm1165, %v3102, 0
      %v3111 = vsel %vm1165, %v3104, 0
      %v3113 = vsel %vm1165, %v3106, 0
      %v3115 = vsel %vm1165, %v3108, 0
      %3117 = vmatprep.subr.mxu0 0.0
      %3118 = vmatpush1.xpose.msra.mxu0 %v3113
      %3119 = vmatprep.subr.mxu0 0.0
      %3120 = vmatpush1.xpose.msra.mxu0 %v3115
      %3121 = vmatprep.subr.mxu0 0.0
      %3122 = vmatpush1.xpose.msra.mxu0 0.0
      %3123 = vmatprep.subr.mxu0 0.0
      %3124 = vmatpush1.xpose.msra.mxu0 0.0
      %3125 = vmatprep.subr.mxu0 0.0
      %3126 = vmatpush1.xpose.msra.mxu0 0.0
      %3127 = vmatprep.subr.mxu0 0.0
      %3128 = vmatpush1.xpose.msra.mxu0 0.0
      %3129 = vmatprep.subr.mxu0 0.0
      %3130 = vmatpush1.xpose.msra.mxu0 0.0
      %3131 = vmatprep.subr.mxu0 0.0
      %3132 = vmatpush1.xpose.msra.mxu0 0.0
      %3133 = vmatprep.subr.mxu0 0.0
      %3134 = vmatpush1.xpose.msra.mxu0 0.0
      %3135 = vmatprep.subr.mxu0 0.0
      %3136 = vmatpush1.xpose.msra.mxu0 0.0
      %3137 = vmatprep.subr.mxu0 0.0
      %3138 = vmatpush1.xpose.msra.mxu0 0.0
      %3139 = vmatprep.subr.mxu0 0.0
      %3140 = vmatpush1.xpose.msra.mxu0 0.0
      %3141 = vmatprep.subr.mxu0 0.0
      %3142 = vmatpush1.xpose.msra.mxu0 0.0
      %3143 = vmatprep.subr.mxu0 0.0
      %3144 = vmatpush1.xpose.msra.mxu0 0.0
      %3145 = vmatprep.subr.mxu0 0.0
      %3146 = vmatpush1.xpose.msra.mxu0 0.0
      %3147 = vmatprep.subr.mxu0 0.0
      %3148 = vmatpush1.xpose.msra.mxu0 0.0
      %3149 = vmatprep.subr.mxu0 0.0
      %3150 = vmatpush1.xpose.msra.mxu0 0.0
      %3151 = vmatprep.subr.mxu0 0.0
      %3152 = vmatpush1.xpose.msra.mxu0 0.0
      %3153 = vmatprep.subr.mxu0 0.0
      %3154 = vmatpush1.xpose.msra.mxu0 0.0
      %3155 = vmatprep.subr.mxu0 0.0
      %3156 = vmatpush1.xpose.msra.mxu0 0.0
      %3157 = vmatprep.subr.mxu0 0.0
      %3158 = vmatpush1.xpose.msra.mxu0 0.0
      %3159 = vmatprep.subr.mxu0 0.0
      %3160 = vmatpush1.xpose.msra.mxu0 0.0
      %3161 = vmatprep.subr.mxu0 0.0
      %3162 = vmatpush1.xpose.msra.mxu0 0.0
      %3163 = vmatprep.subr.mxu0 0.0
      %3164 = vmatpush1.xpose.msra.mxu0 0.0
      %3165 = vmatprep.subr.mxu0 0.0
      %3166 = vmatpush1.xpose.msra.mxu0 0.0
      %3167 = vmatprep.subr.mxu0 0.0
      %3168 = vmatpush1.xpose.msra.mxu0 0.0
      %3169 = vmatprep.subr.mxu0 0.0
      %3170 = vmatpush1.xpose.msra.mxu0 0.0
      %3171 = vmatprep.subr.mxu0 0.0
      %3172 = vmatpush1.xpose.msra.mxu0 0.0
      %3173 = vmatprep.subr.mxu0 0.0
      %3174 = vmatpush1.xpose.msra.mxu0 0.0
      %3175 = vmatprep.subr.mxu0 0.0
      %3176 = vmatpush1.xpose.msra.mxu0 0.0
      %3177 = vmatprep.subr.mxu0 0.0
      %3178 = vmatpush1.xpose.msra.mxu0 0.0
      %3179 = vmatprep.subr.mxu0 0.0
      %3180 = vmatpush1.xpose.msra.mxu0 0.0
      %3181 = vmatprep.mubr.f32.mxu0 0.0
      %3182 = vmatmul.mubr.f32.gmra.mrb[0].mxu0 %v3109
      %v3183 = vpop.f32.mrb[0].mxu0
      %v3184 = vadd.f32 0.0, %v3183
      %v3185 = vpop.f32.mrb[0].mxu0
      %3186 = vmatprep.mubr.f32.mxu0 0.0
      %3187 = vmatmul.mubr.f32.gmra.mrb[0].mxu0 %v3111
      %v3188 = vpop.f32.mrb[0].mxu0
      %v3189 = vadd.f32 0.0, %v3188
      %v3190 = vpop.f32.mrb[0].mxu0
      %3191 = vdwg.mxu0
      %v3192 = vmul.f32 %v3184, 0.35355338
      %v3193 = vmul.f32 %v3189, 0.35355338
      %v3194 = vadd.f32 %v3192, %v1254
      %v3195 = vadd.f32 %v3193, %v1254
      %v3196 = vsel %vm1257, %v3194, -inf
      %3197 = vmax.xlane.f32.xlu0 %v3196
      %v3198 = vpop.xlane.xlu0 %3197
      %v3199 = vsel %vm1261, %v3195, -inf
      %3200 = vmax.xlane.f32.xlu0 %v3199
      %v3201 = vpop.xlane.xlu0 %3200
      %v3202 = vsub.f32 %v3194, %v3198
      %v3203 = vsub.f32 %v3195, %v3201
      %v3204 = vmul.f32 %v3202, 1.442695
      %v3205 = vpow.pop %v3204
      %v3206 = vmul.f32 %v3203, 1.442695
      %v3207 = vpow.pop %v3206
      %v3208 = vsel %vm1257, %v3205, 0.0
      %3209 = vadd.xlane.f32.xlu0 %v3208
      %v3210 = vpop.xlane.xlu0 %3209
      %v3211 = vsel %vm1261, %v3207, 0.0
      %3212 = vadd.xlane.f32.xlu0 %v3211
      %v3213 = vpop.xlane.xlu0 %3212
      %v3214 = vrcp.pop %v3210
      %v3215 = vrcp.pop %v3213
      %v3216 = vmul.f32 %v3205, %v3214
      %v3217 = vmul.f32 %v3207, %v3215
      %3218 = vrot.lane.b32.xlu0 %v2480, 40
      %v3219 = vpop.permute.xlu0 %3218
      %3220 = vrot.lane.b32.xlu0 %v2485, 40
      %v3221 = vpop.permute.xlu0 %3220
      %v3224 = vsel %vm1257, %v3216, 0
      %v3227 = vsel %vm1257, %v3217, 0
      %v3229 = vsel %vm1292, %v3221, 0
      %3231 = vmatprep.subr.mxu0 0.0
      %3232 = vmatpush1.msra.mxu0 %v3219
      %3233 = vmatprep.subr.mxu0 0.0
      %3234 = vmatpush1.msra.mxu0 %v3229
      %3235 = vmatprep.subr.mxu0 0.0
      %3236 = vmatpush1.msra.mxu0 0.0
      %3237 = vmatprep.subr.mxu0 0.0
      %3238 = vmatpush1.msra.mxu0 0.0
      %3239 = vmatprep.subr.mxu0 0.0
      %3240 = vmatpush1.msra.mxu0 0.0
      %3241 = vmatprep.subr.mxu0 0.0
      %3242 = vmatpush1.msra.mxu0 0.0
      %3243 = vmatprep.subr.mxu0 0.0
      %3244 = vmatpush1.msra.mxu0 0.0
      %3245 = vmatprep.subr.mxu0 0.0
      %3246 = vmatpush1.msra.mxu0 0.0
      %3247 = vmatprep.subr.mxu0 0.0
      %3248 = vmatpush1.msra.mxu0 0.0
      %3249 = vmatprep.subr.mxu0 0.0
      %3250 = vmatpush1.msra.mxu0 0.0
      %3251 = vmatprep.subr.mxu0 0.0
      %3252 = vmatpush1.msra.mxu0 0.0
      %3253 = vmatprep.subr.mxu0 0.0
      %3254 = vmatpush1.msra.mxu0 0.0
      %3255 = vmatprep.subr.mxu0 0.0
      %3256 = vmatpush1.msra.mxu0 0.0
      %3257 = vmatprep.subr.mxu0 0.0
      %3258 = vmatpush1.msra.mxu0 0.0
      %3259 = vmatprep.subr.mxu0 0.0
      %3260 = vmatpush1.msra.mxu0 0.0
      %3261 = vmatprep.subr.mxu0 0.0
      %3262 = vmatpush1.msra.mxu0 0.0
      %3263 = vmatprep.subr.mxu0 0.0
      %3264 = vmatpush1.msra.mxu0 0.0
      %3265 = vmatprep.subr.mxu0 0.0
      %3266 = vmatpush1.msra.mxu0 0.0
      %3267 = vmatprep.subr.mxu0 0.0
      %3268 = vmatpush1.msra.mxu0 0.0
      %3269 = vmatprep.subr.mxu0 0.0
      %3270 = vmatpush1.msra.mxu0 0.0
      %3271 = vmatprep.subr.mxu0 0.0
      %3272 = vmatpush1.msra.mxu0 0.0
      %3273 = vmatprep.subr.mxu0 0.0
      %3274 = vmatpush1.msra.mxu0 0.0
      %3275 = vmatprep.subr.mxu0 0.0
      %3276 = vmatpush1.msra.mxu0 0.0
      %3277 = vmatprep.subr.mxu0 0.0
      %3278 = vmatpush1.msra.mxu0 0.0
      %3279 = vmatprep.subr.mxu0 0.0
      %3280 = vmatpush1.msra.mxu0 0.0
      %3281 = vmatprep.subr.mxu0 0.0
      %3282 = vmatpush1.msra.mxu0 0.0
      %3283 = vmatprep.subr.mxu0 0.0
      %3284 = vmatpush1.msra.mxu0 0.0
      %3285 = vmatprep.subr.mxu0 0.0
      %3286 = vmatpush1.msra.mxu0 0.0
      %3287 = vmatprep.subr.mxu0 0.0
      %3288 = vmatpush1.msra.mxu0 0.0
      %3289 = vmatprep.subr.mxu0 0.0
      %3290 = vmatpush1.msra.mxu0 0.0
      %3291 = vmatprep.subr.mxu0 0.0
      %3292 = vmatpush1.msra.mxu0 0.0
      %3293 = vmatprep.subr.mxu0 0.0
      %3294 = vmatpush1.msra.mxu0 0.0
      %3295 = vmatprep.mubr.f32.mxu0 0.0
      %3296 = vmatmul.mubr.f32.gmra.mrb[0].mxu0 %v3224
      %v3297 = vpop.f32.mrb[0].mxu0
      %v3298 = vadd.f32 0.0, %v3297
      %v3299 = vpop.f32.mrb[0].mxu0
      %3300 = vmatprep.mubr.f32.mxu0 0.0
      %3301 = vmatmul.mubr.f32.gmra.mrb[0].mxu0 %v3227
      %v3302 = vpop.f32.mrb[0].mxu0
      %v3303 = vadd.f32 0.0, %v3302
      %v3304 = vpop.f32.mrb[0].mxu0
      %3305 = vdwg.mxu0
      %3308 = vrot.lane.b32.xlu0 %v2888, 8
      %v3309 = vpop.permute.xlu0 %3308
      %3310 = vrot.lane.b32.xlu0 %v2893, 8
      %v3311 = vpop.permute.xlu0 %3310
      %3316 = vrot.lane.b32.xlu0 %v3093, 16
      %v3317 = vpop.permute.xlu0 %3316
      %3318 = vrot.lane.b32.xlu0 %v3098, 16
      %v3319 = vpop.permute.xlu0 %3318
      %3324 = vrot.lane.b32.xlu0 %v3298, 24
      %v3325 = vpop.permute.xlu0 %3324
      %3326 = vrot.lane.b32.xlu0 %v3303, 24
      %v3327 = vpop.permute.xlu0 %3326
      %v3330 = vsel %vm1165, %v2683, %v3309
      %v3331 = vsel %vm1165, %v2688, %v3311
      %v3332 = vsel %vm2011, %v3330, %v3317
      %v3333 = vsel %vm2011, %v3331, %v3319
      %v3334 = vsel %vm2014, %v3332, %v3325
      %v3335 = vsel %vm2014, %v3333, %v3327
      %s3336 = scalar_lea.vmem %s12, 32
      %v3337 = vld [vmem:[%s3336] sm:$0xff]
      %v3338 = vld [vmem:[%s3336 + $0x8] sm:$0xff]
      %v3339 = vld [vmem:[%s3336 + $0x10] sm:$0xff]
      %v3340 = vld [vmem:[%s3336 + $0x18] sm:$0xff]
      %s3341 = scalar_lea.vmem %s13, 1
      %v3342 = vld [vmem:[%s3341] sm:$0x1]
      %v3344 = vlaneseq
      %v3345 = vshrl.u32 %v3344, 7
      %v3346 = vsub.s32 0, %v3345
      %v3347 = vrot.slane %v3342, %v3346
      %v3350 = vsel %vm985, %v3334, 0
      %v3353 = vsel %vm985, %v3335, 0
      %3355 = vmatprep.subr.mxu0 0.0
      %3356 = vmatpush1.msra.mxu0 %v3337
      %3357 = vmatprep.subr.mxu0 0.0
      %3358 = vmatpush1.msra.mxu0 %v3338
      %3359 = vmatprep.subr.mxu0 0.0
      %3360 = vmatpush1.msra.mxu0 %v3339
      %3361 = vmatprep.subr.mxu0 0.0
      %3362 = vmatpush1.msra.mxu0 %v3340
      %3363 = vmatprep.subr.mxu0 0.0
      %3364 = vmatpush1.msra.mxu0 0.0
      %3365 = vmatprep.subr.mxu0 0.0
      %3366 = vmatpush1.msra.mxu0 0.0
      %3367 = vmatprep.subr.mxu0 0.0
      %3368 = vmatpush1.msra.mxu0 0.0
      %3369 = vmatprep.subr.mxu0 0.0
      %3370 = vmatpush1.msra.mxu0 0.0
      %3371 = vmatprep.subr.mxu0 0.0
      %3372 = vmatpush1.msra.mxu0 0.0
      %3373 = vmatprep.subr.mxu0 0.0
      %3374 = vmatpush1.msra.mxu0 0.0
      %3375 = vmatprep.subr.mxu0 0.0
      %3376 = vmatpush1.msra.mxu0 0.0
      %3377 = vmatprep.subr.mxu0 0.0
      %3378 = vmatpush1.msra.mxu0 0.0
      %3379 = vmatprep.subr.mxu0 0.0
      %3380 = vmatpush1.msra.mxu0 0.0
      %3381 = vmatprep.subr.mxu0 0.0
      %3382 = vmatpush1.msra.mxu0 0.0
      %3383 = vmatprep.subr.mxu0 0.0
      %3384 = vmatpush1.msra.mxu0 0.0
      %3385 = vmatprep.subr.mxu0 0.0
      %3386 = vmatpush1.msra.mxu0 0.0
      %3387 = vmatprep.subr.mxu0 0.0
      %3388 = vmatpush1.msra.mxu0 0.0
      %3389 = vmatprep.subr.mxu0 0.0
      %3390 = vmatpush1.msra.mxu0 0.0
      %3391 = vmatprep.subr.mxu0 0.0
      %3392 = vmatpush1.msra.mxu0 0.0
      %3393 = vmatprep.subr.mxu0 0.0
      %3394 = vmatpush1.msra.mxu0 0.0
      %3395 = vmatprep.subr.mxu0 0.0
      %3396 = vmatpush1.msra.mxu0 0.0
      %3397 = vmatprep.subr.mxu0 0.0
      %3398 = vmatpush1.msra.mxu0 0.0
      %3399 = vmatprep.subr.mxu0 0.0
      %3400 = vmatpush1.msra.mxu0 0.0
      %3401 = vmatprep.subr.mxu0 0.0
      %3402 = vmatpush1.msra.mxu0 0.0
      %3403 = vmatprep.subr.mxu0 0.0
      %3404 = vmatpush1.msra.mxu0 0.0
      %3405 = vmatprep.subr.mxu0 0.0
      %3406 = vmatpush1.msra.mxu0 0.0
      %3407 = vmatprep.subr.mxu0 0.0
      %3408 = vmatpush1.msra.mxu0 0.0
      %3409 = vmatprep.subr.mxu0 0.0
      %3410 = vmatpush1.msra.mxu0 0.0
      %3411 = vmatprep.subr.mxu0 0.0
      %3412 = vmatpush1.msra.mxu0 0.0
      %3413 = vmatprep.subr.mxu0 0.0
      %3414 = vmatpush1.msra.mxu0 0.0
      %3415 = vmatprep.subr.mxu0 0.0
      %3416 = vmatpush1.msra.mxu0 0.0
      %3417 = vmatprep.subr.mxu0 0.0
      %3418 = vmatpush1.msra.mxu0 0.0
      %3419 = vmatprep.mubr.f32.mxu0 0.0
      %3420 = vmatmul.mubr.f32.gmra.mrb[0].mxu0 %v3350
      %v3421 = vpop.f32.mrb[0].mxu0
      %v3422 = vadd.f32 %v3347, %v3421
      %v3423 = vpop.f32.mrb[0].mxu0
      %3424 = vmatprep.mubr.f32.mxu0 0.0
      %3425 = vmatmul.mubr.f32.gmra.mrb[0].mxu0 %v3353
      %v3426 = vpop.f32.mrb[0].mxu0
      %v3427 = vadd.f32 %v3347, %v3426
      %v3428 = vpop.f32.mrb[0].mxu0
      %3429 = vdwg.mxu0
      %v3430 = vadd.f32 %v2392, %v3422
      %v3431 = vadd.f32 %v2393, %v3427
      %s3432 = scalar_lea.vmem %s14, 1
      %v3433 = vld [vmem:[%s3432] sm:$0x1]
      %s3434 = scalar_lea.vmem %s15, 1
      %v3435 = vld [vmem:[%s3434] sm:$0x1]
      %v3436 = vsel %vm985, %v3430, 0.0
      %3437 = vadd.xlane.f32.xlu0 %v3436
      %v3438 = vpop.xlane.xlu0 %3437
      %v3439 = vsel %vm2116, %v3431, 0.0
      %3440 = vadd.xlane.f32.xlu0 %v3439
      %v3441 = vpop.xlane.xlu0 %3440
      %v3442 = vmul.f32 %v3438, %v2120
      %v3443 = vmul.f32 %v3441, %v2120
      %v3444 = vsub.f32 %v3430, %v3442
      %v3445 = vsub.f32 %v3431, %v3443
      %v3446 = vmul.f32 %v3444, %v3444
      %v3447 = vmul.f32 %v3445, %v3445
      %v3448 = vsel %vm985, %v3446, 0.0
      %3449 = vadd.xlane.f32.xlu0 %v3448
      %v3450 = vpop.xlane.xlu0 %3449
      %v3451 = vsel %vm2116, %v3447, 0.0
      %3452 = vadd.xlane.f32.xlu0 %v3451
      %v3453 = vpop.xlane.xlu0 %3452
      %v3454 = vmul.f32 %v3450, %v2120
      %v3455 = vmul.f32 %v3453, %v2120
      %v3456 = vadd.f32 %v3454, 1e-05
      %v3457 = vadd.f32 %v3455, 1e-05
      %v3458 = vrsqrt.pop %v3456
      %v3459 = vrsqrt.pop %v3457
      %v3460 = vmul.f32 %v3444, %v3458
      %v3461 = vmul.f32 %v3445, %v3459
      %v3463 = vlaneseq
      %v3464 = vshrl.u32 %v3463, 7
      %v3465 = vsub.s32 0, %v3464
      %v3466 = vrot.slane %v3433, %v3465
      %v3468 = vmul.f32 %v3460, %v3466
      %v3469 = vmul.f32 %v3461, %v3466
      %v3471 = vlaneseq
      %v3472 = vshrl.u32 %v3471, 7
      %v3473 = vsub.s32 0, %v3472
      %v3474 = vrot.slane %v3435, %v3473
      %v3476 = vadd.f32 %v3468, %v3474
      %v3477 = vadd.f32 %v3469, %v3474
      %s3478 = scalar_lea.vmem %s16, 32
      %v3479 = vld [vmem:[%s3478] sm:$0xff]
      %v3480 = vld [vmem:[%s3478 + $0x8] sm:$0xff]
      %v3481 = vld [vmem:[%s3478 + $0x10] sm:$0xff]
      %v3482 = vld [vmem:[%s3478 + $0x18] sm:$0xff]
      %s3483 = scalar_lea.vmem %s17, 1
      %v3484 = vld [vmem:[%s3483] sm:$0x1]
      %v3486 = vlaneseq
      %v3487 = vshrl.u32 %v3486, 7
      %v3488 = vsub.s32 0, %v3487
      %v3489 = vrot.slane %v3484, %v3488
      %v3492 = vsel %vm985, %v3476, 0
      %v3495 = vsel %vm985, %v3477, 0
      %3497 = vmatprep.subr.mxu0 0.0
      %3498 = vmatpush1.msra.mxu0 %v3479
      %3499 = vmatprep.subr.mxu0 0.0
      %3500 = vmatpush1.msra.mxu0 %v3480
      %3501 = vmatprep.subr.mxu0 0.0
      %3502 = vmatpush1.msra.mxu0 %v3481
      %3503 = vmatprep.subr.mxu0 0.0
      %3504 = vmatpush1.msra.mxu0 %v3482
      %3505 = vmatprep.subr.mxu0 0.0
      %3506 = vmatpush1.msra.mxu0 0.0
      %3507 = vmatprep.subr.mxu0 0.0
      %3508 = vmatpush1.msra.mxu0 0.0
      %3509 = vmatprep.subr.mxu0 0.0
      %3510 = vmatpush1.msra.mxu0 0.0
      %3511 = vmatprep.subr.mxu0 0.0
      %3512 = vmatpush1.msra.mxu0 0.0
      %3513 = vmatprep.subr.mxu0 0.0
      %3514 = vmatpush1.msra.mxu0 0.0
      %3515 = vmatprep.subr.mxu0 0.0
      %3516 = vmatpush1.msra.mxu0 0.0
      %3517 = vmatprep.subr.mxu0 0.0
      %3518 = vmatpush1.msra.mxu0 0.0
      %3519 = vmatprep.subr.mxu0 0.0
      %3520 = vmatpush1.msra.mxu0 0.0
      %3521 = vmatprep.subr.mxu0 0.0
      %3522 = vmatpush1.msra.mxu0 0.0
      %3523 = vmatprep.subr.mxu0 0.0
      %3524 = vmatpush1.msra.mxu0 0.0
      %3525 = vmatprep.subr.mxu0 0.0
      %3526 = vmatpush1.msra.mxu0 0.0
      %3527 = vmatprep.subr.mxu0 0.0
      %3528 = vmatpush1.msra.mxu0 0.0
      %3529 = vmatprep.subr.mxu0 0.0
      %3530 = vmatpush1.msra.mxu0 0.0
      %3531 = vmatprep.subr.mxu0 0.0
      %3532 = vmatpush1.msra.mxu0 0.0
      %3533 = vmatprep.subr.mxu0 0.0
      %3534 = vmatpush1.msra.mxu0 0.0
      %3535 = vmatprep.subr.mxu0 0.0
      %3536 = vmatpush1.msra.mxu0 0.0
      %3537 = vmatprep.subr.mxu0 0.0
      %3538 = vmatpush1.msra.mxu0 0.0
      %3539 = vmatprep.subr.mxu0 0.0
      %3540 = vmatpush1.msra.mxu0 0.0
      %3541 = vmatprep.subr.mxu0 0.0
      %3542 = vmatpush1.msra.mxu0 0.0
      %3543 = vmatprep.subr.mxu0 0.0
      %3544 = vmatpush1.msra.mxu0 0.0
      %3545 = vmatprep.subr.mxu0 0.0
      %3546 = vmatpush1.msra.mxu0 0.0
      %3547 = vmatprep.subr.mxu0 0.0
      %3548 = vmatpush1.msra.mxu0 0.0
      %3549 = vmatprep.subr.mxu0 0.0
      %3550 = vmatpush1.msra.mxu0 0.0
      %3551 = vmatprep.subr.mxu0 0.0
      %3552 = vmatpush1.msra.mxu0 0.0
      %3553 = vmatprep.subr.mxu0 0.0
      %3554 = vmatpush1.msra.mxu0 0.0
      %3555 = vmatprep.subr.mxu0 0.0
      %3556 = vmatpush1.msra.mxu0 0.0
      %3557 = vmatprep.subr.mxu0 0.0
      %3558 = vmatpush1.msra.mxu0 0.0
      %3559 = vmatprep.subr.mxu0 0.0
      %3560 = vmatpush1.msra.mxu0 0.0
      %3561 = vmatprep.mubr.f32.mxu0 0.0
      %3562 = vmatmul.mubr.f32.gmra.mrb[0].mxu0 %v3492
      %v3563 = vpop.f32.mrb[0].mxu0
      %v3564 = vadd.f32 %v3489, %v3563
      %v3565 = vpop.f32.mrb[0].mxu0
      %3566 = vmatprep.mubr.f32.mxu0 0.0
      %3567 = vmatmul.mubr.f32.gmra.mrb[0].mxu0 %v3495
      %v3568 = vpop.f32.mrb[0].mxu0
      %v3569 = vadd.f32 %v3489, %v3568
      %v3570 = vpop.f32.mrb[0].mxu0
      %3571 = vdwg.mxu0
      %v3572 = vmax.f32 %v3564, 0.0
      %v3573 = vmax.f32 %v3569, 0.0
      %s3574 = scalar_lea.vmem %s18, 64
      %v3575 = vld [vmem:[%s3574] sm:$0xff]
      %v3576 = vld [vmem:[%s3574 + $0x8] sm:$0xff]
      %v3577 = vld [vmem:[%s3574 + $0x10] sm:$0xff]
      %v3578 = vld [vmem:[%s3574 + $0x18] sm:$0xff]
      %v3579 = vld [vmem:[%s3574 + $0x20] sm:$0xff]
      %v3580 = vld [vmem:[%s3574 + $0x28] sm:$0xff]
      %v3581 = vld [vmem:[%s3574 + $0x30] sm:$0xff]
      %v3582 = vld [vmem:[%s3574 + $0x38] sm:$0xff]
      %s3583 = scalar_lea.vmem %s19, 1
      %v3584 = vld [vmem:[%s3583] sm:$0x1]
      %v3586 = vlaneseq
      %v3587 = vshrl.u32 %v3586, 7
      %v3588 = vsub.s32 0, %v3587
      %v3589 = vrot.slane %v3584, %v3588
      %v3592 = vsel %vm2266, %v3572, 0
      %v3595 = vsel %vm2266, %v3573, 0
      %3597 = vmatprep.subr.mxu0 0.0
      %3598 = vmatpush1.msra.mxu0 %v3575
      %3599 = vmatprep.subr.mxu0 0.0
      %3600 = vmatpush1.msra.mxu0 %v3576
      %3601 = vmatprep.subr.mxu0 0.0
      %3602 = vmatpush1.msra.mxu0 %v3577
      %3603 = vmatprep.subr.mxu0 0.0
      %3604 = vmatpush1.msra.mxu0 %v3578
      %3605 = vmatprep.subr.mxu0 0.0
      %3606 = vmatpush1.msra.mxu0 %v3579
      %3607 = vmatprep.subr.mxu0 0.0
      %3608 = vmatpush1.msra.mxu0 %v3580
      %3609 = vmatprep.subr.mxu0 0.0
      %3610 = vmatpush1.msra.mxu0 %v3581
      %3611 = vmatprep.subr.mxu0 0.0
      %3612 = vmatpush1.msra.mxu0 %v3582
      %3613 = vmatprep.subr.mxu0 0.0
      %3614 = vmatpush1.msra.mxu0 0.0
      %3615 = vmatprep.subr.mxu0 0.0
      %3616 = vmatpush1.msra.mxu0 0.0
      %3617 = vmatprep.subr.mxu0 0.0
      %3618 = vmatpush1.msra.mxu0 0.0
      %3619 = vmatprep.subr.mxu0 0.0
      %3620 = vmatpush1.msra.mxu0 0.0
      %3621 = vmatprep.subr.mxu0 0.0
      %3622 = vmatpush1.msra.mxu0 0.0
      %3623 = vmatprep.subr.mxu0 0.0
      %3624 = vmatpush1.msra.mxu0 0.0
      %3625 = vmatprep.subr.mxu0 0.0
      %3626 = vmatpush1.msra.mxu0 0.0
      %3627 = vmatprep.subr.mxu0 0.0
      %3628 = vmatpush1.msra.mxu0 0.0
      %3629 = vmatprep.subr.mxu0 0.0
      %3630 = vmatpush1.msra.mxu0 0.0
      %3631 = vmatprep.subr.mxu0 0.0
      %3632 = vmatpush1.msra.mxu0 0.0
      %3633 = vmatprep.subr.mxu0 0.0
      %3634 = vmatpush1.msra.mxu0 0.0
      %3635 = vmatprep.subr.mxu0 0.0
      %3636 = vmatpush1.msra.mxu0 0.0
      %3637 = vmatprep.subr.mxu0 0.0
      %3638 = vmatpush1.msra.mxu0 0.0
      %3639 = vmatprep.subr.mxu0 0.0
      %3640 = vmatpush1.msra.mxu0 0.0
      %3641 = vmatprep.subr.mxu0 0.0
      %3642 = vmatpush1.msra.mxu0 0.0
      %3643 = vmatprep.subr.mxu0 0.0
      %3644 = vmatpush1.msra.mxu0 0.0
      %3645 = vmatprep.subr.mxu0 0.0
      %3646 = vmatpush1.msra.mxu0 0.0
      %3647 = vmatprep.subr.mxu0 0.0
      %3648 = vmatpush1.msra.mxu0 0.0
      %3649 = vmatprep.subr.mxu0 0.0
      %3650 = vmatpush1.msra.mxu0 0.0
      %3651 = vmatprep.subr.mxu0 0.0
      %3652 = vmatpush1.msra.mxu0 0.0
      %3653 = vmatprep.subr.mxu0 0.0
      %3654 = vmatpush1.msra.mxu0 0.0
      %3655 = vmatprep.subr.mxu0 0.0
      %3656 = vmatpush1.msra.mxu0 0.0
      %3657 = vmatprep.subr.mxu0 0.0
      %3658 = vmatpush1.msra.mxu0 0.0
      %3659 = vmatprep.subr.mxu0 0.0
      %3660 = vmatpush1.msra.mxu0 0.0
      %3661 = vmatprep.mubr.f32.mxu0 0.0
      %3662 = vmatmul.mubr.f32.gmra.mrb[0].mxu0 %v3592
      %v3663 = vpop.f32.mrb[0].mxu0
      %v3664 = vpop.f32.mrb[0].mxu0
      %3665 = vmatprep.mubr.f32.mxu0 0.0
      %3666 = vmatmul.mubr.f32.gmra.mrb[0].mxu0 %v3595
      %v3667 = vpop.f32.mrb[0].mxu0
      %v3668 = vadd.f32 %v3589, %v3667
      %v3669 = vpop.f32.mrb[0].mxu0
      %3670 = vdwg.mxu0
      %v3671 = vadd.f32 %v3477, %v3668
      %s3672 = scalar_lea.vmem %s20, 1
      %v3673 = vld [vmem:[%s3672] sm:$0x1]
      %s3674 = scalar_lea.vmem %s21, 1
      %v3675 = vld [vmem:[%s3674] sm:$0x1]
      %v3676 = vsel %vm2116, %v3671, 0.0
      %3677 = vadd.xlane.f32.xlu0 %v3676
      %v3678 = vpop.xlane.xlu0 %3677
      %v3679 = vmul.f32 %v3678, %v2120
      %v3680 = vsub.f32 %v3671, %v3679
      %v3681 = vmul.f32 %v3680, %v3680
      %v3682 = vsel %vm2116, %v3681, 0.0
      %3683 = vadd.xlane.f32.xlu0 %v3682
      %v3684 = vpop.xlane.xlu0 %3683
      %v3685 = vmul.f32 %v3684, %v2120
      %v3686 = vadd.f32 %v3685, 1e-05
      %v3687 = vrsqrt.pop %v3686
      %v3688 = vmul.f32 %v3680, %v3687
      %v3690 = vlaneseq
      %v3691 = vshrl.u32 %v3690, 7
      %v3692 = vsub.s32 0, %v3691
      %v3693 = vrot.slane %v3673, %v3692
      %v3695 = vmul.f32 %v3688, %v3693
      %v3697 = vlaneseq
      %v3698 = vshrl.u32 %v3697, 7
      %v3699 = vsub.s32 0, %v3698
      %v3700 = vrot.slane %v3675, %v3699
      %v3702 = vadd.f32 %v3695, %v3700
      %v3703 = vld [vmem:[%s22] sm:$0xff]
      %v3704 = vld [vmem:[%s22 + $0x8] sm:$0xff]
      %v3705 = vld [vmem:[%s22 + $0x10] sm:$0xff]
      %v3706 = vld [vmem:[%s22 + $0x18] sm:$0xff]
      %v3707 = vld [vmem:[%s23] sm:$0x1]
      %v3709 = vlaneseq
      %v3710 = vshrl.u32 %v3709, 7
      %v3711 = vsub.s32 0, %v3710
      %v3712 = vrot.slane %v3707, %v3711
      %v3715 = vsel %vm985, %v3702, 0
      %3717 = vmatprep.subr.mxu0 0.0
      %3718 = vmatpush1.msra.mxu0 %v3703
      %3719 = vmatprep.subr.mxu0 0.0
      %3720 = vmatpush1.msra.mxu0 %v3704
      %3721 = vmatprep.subr.mxu0 0.0
      %3722 = vmatpush1.msra.mxu0 %v3705
      %3723 = vmatprep.subr.mxu0 0.0
      %3724 = vmatpush1.msra.mxu0 %v3706
      %3725 = vmatprep.subr.mxu0 0.0
      %3726 = vmatpush1.msra.mxu0 0.0
      %3727 = vmatprep.subr.mxu0 0.0
      %3728 = vmatpush1.msra.mxu0 0.0
      %3729 = vmatprep.subr.mxu0 0.0
      %3730 = vmatpush1.msra.mxu0 0.0
      %3731 = vmatprep.subr.mxu0 0.0
      %3732 = vmatpush1.msra.mxu0 0.0
      %3733 = vmatprep.subr.mxu0 0.0
      %3734 = vmatpush1.msra.mxu0 0.0
      %3735 = vmatprep.subr.mxu0 0.0
      %3736 = vmatpush1.msra.mxu0 0.0
      %3737 = vmatprep.subr.mxu0 0.0
      %3738 = vmatpush1.msra.mxu0 0.0
      %3739 = vmatprep.subr.mxu0 0.0
      %3740 = vmatpush1.msra.mxu0 0.0
      %3741 = vmatprep.subr.mxu0 0.0
      %3742 = vmatpush1.msra.mxu0 0.0
      %3743 = vmatprep.subr.mxu0 0.0
      %3744 = vmatpush1.msra.mxu0 0.0
      %3745 = vmatprep.subr.mxu0 0.0
      %3746 = vmatpush1.msra.mxu0 0.0
      %3747 = vmatprep.subr.mxu0 0.0
      %3748 = vmatpush1.msra.mxu0 0.0
      %3749 = vmatprep.subr.mxu0 0.0
      %3750 = vmatpush1.msra.mxu0 0.0
      %3751 = vmatprep.subr.mxu0 0.0
      %3752 = vmatpush1.msra.mxu0 0.0
      %3753 = vmatprep.subr.mxu0 0.0
      %3754 = vmatpush1.msra.mxu0 0.0
      %3755 = vmatprep.subr.mxu0 0.0
      %3756 = vmatpush1.msra.mxu0 0.0
      %3757 = vmatprep.subr.mxu0 0.0
      %3758 = vmatpush1.msra.mxu0 0.0
      %3759 = vmatprep.subr.mxu0 0.0
      %3760 = vmatpush1.msra.mxu0 0.0
      %3761 = vmatprep.subr.mxu0 0.0
      %3762 = vmatpush1.msra.mxu0 0.0
      %3763 = vmatprep.subr.mxu0 0.0
      %3764 = vmatpush1.msra.mxu0 0.0
      %3765 = vmatprep.subr.mxu0 0.0
      %3766 = vmatpush1.msra.mxu0 0.0
      %3767 = vmatprep.subr.mxu0 0.0
      %3768 = vmatpush1.msra.mxu0 0.0
      %3769 = vmatprep.subr.mxu0 0.0
      %3770 = vmatpush1.msra.mxu0 0.0
      %3771 = vmatprep.subr.mxu0 0.0
      %3772 = vmatpush1.msra.mxu0 0.0
      %3773 = vmatprep.subr.mxu0 0.0
      %3774 = vmatpush1.msra.mxu0 0.0
      %3775 = vmatprep.subr.mxu0 0.0
      %3776 = vmatpush1.msra.mxu0 0.0
      %3777 = vmatprep.subr.mxu0 0.0
      %3778 = vmatpush1.msra.mxu0 0.0
      %3779 = vmatprep.subr.mxu0 0.0
      %3780 = vmatpush1.msra.mxu0 0.0
      %3781 = vmatprep.mubr.f32.mxu0 0.0
      %3782 = vmatmul.mubr.f32.gmra.mrb[0].mxu0 %v3715
      %v3783 = vpop.f32.mrb[0].mxu0
      %v3784 = vadd.f32 %v3712, %v3783
      %v3785 = vpop.f32.mrb[0].mxu0
      %3786 = vdwg.mxu0
      %v3787 = vmax.f32 %v3784, 0.0
      %v3788 = vld [vmem:[%s24] sm:$0xff]
      %v3789 = vld [vmem:[%s24 + $0x8] sm:$0xff]
      %v3790 = vld [vmem:[%s24 + $0x10] sm:$0xff]
      %v3791 = vld [vmem:[%s24 + $0x18] sm:$0xff]
      %v3792 = vld [vmem:[%s24 + $0x20] sm:$0xff]
      %v3793 = vld [vmem:[%s24 + $0x28] sm:$0xff]
      %v3794 = vld [vmem:[%s24 + $0x30] sm:$0xff]
      %v3795 = vld [vmem:[%s24 + $0x38] sm:$0xff]
      %v3796 = vld [vmem:[%s25] sm:$0x1]
      %v3798 = vlaneseq
      %v3799 = vshrl.u32 %v3798, 7
      %v3800 = vsub.s32 0, %v3799
      %v3801 = vrot.slane %v3796, %v3800
      %v3804 = vsel %vm2266, %v3787, 0
      %3806 = vmatprep.subr.mxu0 0.0
      %3807 = vmatpush1.msra.mxu0 %v3788
      %3808 = vmatprep.subr.mxu0 0.0
      %3809 = vmatpush1.msra.mxu0 %v3789
      %3810 = vmatprep.subr.mxu0 0.0
      %3811 = vmatpush1.msra.mxu0 %v3790
      %3812 = vmatprep.subr.mxu0 0.0
      %3813 = vmatpush1.msra.mxu0 %v3791
      %3814 = vmatprep.subr.mxu0 0.0
      %3815 = vmatpush1.msra.mxu0 %v3792
      %3816 = vmatprep.subr.mxu0 0.0
      %3817 = vmatpush1.msra.mxu0 %v3793
      %3818 = vmatprep.subr.mxu0 0.0
      %3819 = vmatpush1.msra.mxu0 %v3794
      %3820 = vmatprep.subr.mxu0 0.0
      %3821 = vmatpush1.msra.mxu0 %v3795
      %3822 = vmatprep.subr.mxu0 0.0
      %3823 = vmatpush1.msra.mxu0 0.0
      %3824 = vmatprep.subr.mxu0 0.0
      %3825 = vmatpush1.msra.mxu0 0.0
      %3826 = vmatprep.subr.mxu0 0.0
      %3827 = vmatpush1.msra.mxu0 0.0
      %3828 = vmatprep.subr.mxu0 0.0
      %3829 = vmatpush1.msra.mxu0 0.0
      %3830 = vmatprep.subr.mxu0 0.0
      %3831 = vmatpush1.msra.mxu0 0.0
      %3832 = vmatprep.subr.mxu0 0.0
      %3833 = vmatpush1.msra.mxu0 0.0
      %3834 = vmatprep.subr.mxu0 0.0
      %3835 = vmatpush1.msra.mxu0 0.0
      %3836 = vmatprep.subr.mxu0 0.0
      %3837 = vmatpush1.msra.mxu0 0.0
      %3838 = vmatprep.subr.mxu0 0.0
      %3839 = vmatpush1.msra.mxu0 0.0
      %3840 = vmatprep.subr.mxu0 0.0
      %3841 = vmatpush1.msra.mxu0 0.0
      %3842 = vmatprep.subr.mxu0 0.0
      %3843 = vmatpush1.msra.mxu0 0.0
      %3844 = vmatprep.subr.mxu0 0.0
      %3845 = vmatpush1.msra.mxu0 0.0
      %3846 = vmatprep.subr.mxu0 0.0
      %3847 = vmatpush1.msra.mxu0 0.0
      %3848 = vmatprep.subr.mxu0 0.0
      %3849 = vmatpush1.msra.mxu0 0.0
      %3850 = vmatprep.subr.mxu0 0.0
      %3851 = vmatpush1.msra.mxu0 0.0
      %3852 = vmatprep.subr.mxu0 0.0
      %3853 = vmatpush1.msra.mxu0 0.0
      %3854 = vmatprep.subr.mxu0 0.0
      %3855 = vmatpush1.msra.mxu0 0.0
      %3856 = vmatprep.subr.mxu0 0.0
      %3857 = vmatpush1.msra.mxu0 0.0
      %3858 = vmatprep.subr.mxu0 0.0
      %3859 = vmatpush1.msra.mxu0 0.0
      %3860 = vmatprep.subr.mxu0 0.0
      %3861 = vmatpush1.msra.mxu0 0.0
      %3862 = vmatprep.subr.mxu0 0.0
      %3863 = vmatpush1.msra.mxu0 0.0
      %3864 = vmatprep.subr.mxu0 0.0
      %3865 = vmatpush1.msra.mxu0 0.0
      %3866 = vmatprep.subr.mxu0 0.0
      %3867 = vmatpush1.msra.mxu0 0.0
      %3868 = vmatprep.subr.mxu0 0.0
      %3869 = vmatpush1.msra.mxu0 0.0
      %3870 = vmatprep.mubr.f32.mxu0 0.0
      %3871 = vmatmul.mubr.f32.gmra.mrb[0].mxu0 %v3804
      %v3872 = vpop.f32.mrb[0].mxu0
      %v3873 = vadd.f32 %v3801, %v3872
      %v3874 = vpop.f32.mrb[0].mxu0
      %3875 = vdwg.mxu0
      %v3876 = vld [vmem:[%s857] sm:$0xf]
      %v3877 = vld [vmem:[%s860] sm:$0x1]
      %3879 = vset.pattern.permute.xlu0 0
      %3880 = vperm.xlu0 %3879, %v3876
      %v3881 = vpop.permute.xlu0 %3880
      %v3884 = vlaneseq
      %v3885 = vshrl.u32 %v3884, 7
      %v3886 = vsub.s32 0, %v3885
      %v3887 = vrot.slane %v3877, %v3886
      %vm3889 = vcmp.eq.f32.partialorder %v3881, %v3887
      %v3890 = vsel %vm3889, 1, 0
      %v3891 = vcvt.s32.f32 %v3890
      %vm3892 = vcmask 3072
      %v3893 = vsel %vm3892, %v3873, -inf
      %v3894 = vrot.slane %v3893, 4
      %v3895 = vmax.f32 %v3893, %v3894
      %v3896 = vrot.slane %v3895, 2
      %v3897 = vmax.f32 %v3895, %v3896
      %v3898 = vrot.slane %v3897, 1
      %v3899 = vmax.f32 %v3897, %v3898
      %v3900 = vsub.f32 %v3873, %v3899
      %v3901 = vmul.f32 %v3900, 1.442695
      %v3902 = vpow.pop %v3901
      %vm3903 = vcmask 31744
      %v3905 = vsel %vm3903, %v3891, 0
      %v3908 = vsel %vm1292, %v3902, 0
      %3910 = vmatprep.subr.mxu0 0.0
      %3911 = vmatpush1.msra.mxu0 %v3908
      %3912 = vmatprep.subr.mxu0 0.0
      %3913 = vmatpush1.msra.mxu0 0.0
      %3914 = vmatprep.subr.mxu0 0.0
      %3915 = vmatpush1.msra.mxu0 0.0
      %3916 = vmatprep.subr.mxu0 0.0
      %3917 = vmatpush1.msra.mxu0 0.0
      %3918 = vmatprep.subr.mxu0 0.0
      %3919 = vmatpush1.msra.mxu0 0.0
      %3920 = vmatprep.subr.mxu0 0.0
      %3921 = vmatpush1.msra.mxu0 0.0
      %3922 = vmatprep.subr.mxu0 0.0
      %3923 = vmatpush1.msra.mxu0 0.0
      %3924 = vmatprep.subr.mxu0 0.0
      %3925 = vmatpush1.msra.mxu0 0.0
      %3926 = vmatprep.subr.mxu0 0.0
      %3927 = vmatpush1.msra.mxu0 0.0
      %3928 = vmatprep.subr.mxu0 0.0
      %3929 = vmatpush1.msra.mxu0 0.0
      %3930 = vmatprep.subr.mxu0 0.0
      %3931 = vmatpush1.msra.mxu0 0.0
      %3932 = vmatprep.subr.mxu0 0.0
      %3933 = vmatpush1.msra.mxu0 0.0
      %3934 = vmatprep.subr.mxu0 0.0
      %3935 = vmatpush1.msra.mxu0 0.0
      %3936 = vmatprep.subr.mxu0 0.0
      %3937 = vmatpush1.msra.mxu0 0.0
      %3938 = vmatprep.subr.mxu0 0.0
      %3939 = vmatpush1.msra.mxu0 0.0
      %3940 = vmatprep.subr.mxu0 0.0
      %3941 = vmatpush1.msra.mxu0 0.0
      %3942 = vmatprep.subr.mxu0 0.0
      %3943 = vmatpush1.msra.mxu0 0.0
      %3944 = vmatprep.subr.mxu0 0.0
      %3945 = vmatpush1.msra.mxu0 0.0
      %3946 = vmatprep.subr.mxu0 0.0
      %3947 = vmatpush1.msra.mxu0 0.0
      %3948 = vmatprep.subr.mxu0 0.0
      %3949 = vmatpush1.msra.mxu0 0.0
      %3950 = vmatprep.subr.mxu0 0.0
      %3951 = vmatpush1.msra.mxu0 0.0
      %3952 = vmatprep.subr.mxu0 0.0
      %3953 = vmatpush1.msra.mxu0 0.0
      %3954 = vmatprep.subr.mxu0 0.0
      %3955 = vmatpush1.msra.mxu0 0.0
      %3956 = vmatprep.subr.mxu0 0.0
      %3957 = vmatpush1.msra.mxu0 0.0
      %3958 = vmatprep.subr.mxu0 0.0
      %3959 = vmatpush1.msra.mxu0 0.0
      %3960 = vmatprep.subr.mxu0 0.0
      %3961 = vmatpush1.msra.mxu0 0.0
      %3962 = vmatprep.subr.mxu0 0.0
      %3963 = vmatpush1.msra.mxu0 0.0
      %3964 = vmatprep.subr.mxu0 0.0
      %3965 = vmatpush1.msra.mxu0 0.0
      %3966 = vmatprep.subr.mxu0 0.0
      %3967 = vmatpush1.msra.mxu0 0.0
      %3968 = vmatprep.subr.mxu0 0.0
      %3969 = vmatpush1.msra.mxu0 0.0
      %3970 = vmatprep.subr.mxu0 0.0
      %3971 = vmatpush1.msra.mxu0 0.0
      %3972 = vmatprep.subr.mxu0 0.0
      %3973 = vmatpush1.msra.mxu0 0.0
      %3974 = vmatprep.mubr.f32.mxu0 0.0
      %3975 = vmatmul.mubr.f32.gmra.mrb[0].mxu0 %v3905
      %v3976 = vpop.f32.mrb[0].mxu0
      %v3977 = vadd.f32 0.0, %v3976
      %v3978 = vpop.f32.mrb[0].mxu0
      %3979 = vdwg.mxu0
      %v3980 = vrcp.pop %v3977
      %v3981 = vmul.f32 %v3902, %v3980
      %v3982 = vmul.f32 %v3873, 1.442695
      %v3983 = vpow.pop %v3982
      %v3984 = vld [vmem:[%s853] sm:$0xf]
      %v3985 = vsub.f32 %v3984, %v3981
      %v3986 = vmul.f32 %v3985, %v3985
      %v3987 = vsub.f32 0.0, %v3986
      %v3988 = vmul.f32 %v3983, 2.0
      %v3989 = vmul.f32 %v3988, %v3983
      %3991 = vrot.lane.b32.xlu0 %v3989, 127
      %v3992 = vpop.permute.xlu0 %3991
      %v3994 = vrcp.pop %v3992
      %v3995 = vmul.f32 %v3987, %v3994
      %3997 = vrot.lane.b32.xlu0 %v3873, 127
      %v3998 = vpop.permute.xlu0 %3997
      %v4000 = vsub.f32 %v3995, %v3998
      %v4001 = vsub.f32 %v4000, 0.9189385
      %v4002 = vadd.f32 %v4001, 0.0
      %v4003 = vld [vmem:[%s864] sm:$0xf]
      %vm4004 = vcmp.gt.f32.partialorder %v4003, 0.5
      %v4005 = vsel %vm4004, %v4002, 0.0
      %4006 = vst.msk [vmem:[%s868] sm:$0xf] %vm3892, %v4005
      %p4007 = scmp.lt.s32.totalorder %s37, 1
      %s4008 = scalar_select %p4007, %s37, 1
      %s4009 = smul.addr %s4008, 4
      %s4010 = scalar_lea.vmem %s26, %s4009
      // Predicated region
      $region125: #{tpu_custom_call.1} parent=123 // pred_check
        %p4011 = pneg %p631
      $region126: #{tpu_custom_call.1} parent=123 // pred_check_branch
        %4013 = sbr.rel (%p4011) target = $region128
      $region127: #{tpu_custom_call.1} parent=123 // pred_region
        _
      $region128: #{tpu_custom_call.1} parent=123 // pred_fallthru
        _
    $region124: #{tpu_custom_call.1} parent=5 // pred_fallthru
      _
    %p4014 = scmp.le.s32.totalorder 2, %s32
    // Predicated region
    $region129: #{tpu_custom_call.1} parent=5 // pred_check
      %p4015 = pneg %p4014
    $region130: #{tpu_custom_call.1} parent=5 // pred_check_branch
      %4017 = sbr.rel (%p4015) target = $region132
    $region131: #{tpu_custom_call.1} parent=5 // pred_region
      %s4018 = ssub.s32 %s32, 2
      // Predicated region
      $region133: #{tpu_custom_call.1} parent=131 // pred_check
        %p4019 = pneg %p637
      $region134: #{tpu_custom_call.1} parent=131 // pred_check_branch
        %4021 = sbr.rel (%p4019) target = $region136
      $region135: #{tpu_custom_call.1} parent=131 // pred_region
        %p4022 = scmp.lt.s32.totalorder %s38, 1
        %s4023 = scalar_select %p4022, %s38, 1
        %s4024 = smul.addr %s4023, 4
        %s4025 = scalar_lea.vmem %s26, %s4024
      $region136: #{tpu_custom_call.1} parent=131 // pred_fallthru
        _
    $region132: #{tpu_custom_call.1} parent=5 // pred_fallthru
      _
  $region6: #{tpu_custom_call.1} parent=0 // loop_footer
    %s36 = sadd.s32 1, %s32
  $region7: #{tpu_custom_call.1} parent=0 // loop_footer_branch
    %31 = sbr.rel target = $region3
  $region8: #{tpu_custom_call.1} parent=0 // loop_exit
    _

</llo_original>
